<compile_context>
chip_gen: v7x
topology: tpu7x:2x2x1
jax: 0.10.0
libtpu: 0.0.40
codegen_flags: <defaults>
</compile_context>

<pallas_src>
import functools

import numpy as np
import jax
import jax.numpy as jnp
from jax import lax
from jax.experimental import pallas as pl
from jax.experimental.pallas import tpu as pltpu


# ---------------------------------------------------------------------------
# Kernel: 3x3x3 conv (padding=1, stride=1) + folded BN (+ optional residual, ReLU)
#
# refs (in order): x_slab_d, x_slab_d+1, x_slab_d+2   each (H+2, W+2, Cin)  [padded slabs]
#                  w_ref  (9, 3*Cin, Cout)            [kw-merged weights, resident in VMEM]
#                  s_ref, b_ref (1, Cout)             [folded BN scale / bias, f32]
#                  [res_ref (H, W, Cout)]             [optional residual]
#                  o_ref (H, W, Cout)                 [output]
#                  lhs_buf (2, H+2, W, 3*Cin)         [scratch: kw-merged im2col slab]
# ---------------------------------------------------------------------------
def _conv3x3x3_bn_kernel(*refs, H, W, cin, cout, relu, add_residual):
    if add_residual:
        x0, x1, x2, w_ref, s_ref, b_ref, r_ref, o_ref, lhs_buf = refs
    else:
        x0, x1, x2, w_ref, s_ref, b_ref, o_ref, lhs_buf = refs
        r_ref = None

    acc = jnp.zeros((H * W, cout), jnp.float32)

    # Fully unrolled over kd (3 depth slabs) and kh (3 row offsets).
    for kd, x_k in enumerate((x0, x1, x2)):
        slot = kd % 2                                   # static Python int (double buffer)
        xv = x_k[...]                                   # (H+2, W+2, Cin)
        # Assemble kw-merged im2col rows: lhs_buf[slot, hp, w, kw*Cin + c] = xv[hp, w+kw, c]
        for kw in range(3):
            lhs_buf[slot, :, :, kw * cin:(kw + 1) * cin] = xv[:, kw:kw + W, :]
        for kh in range(3):
            # kh window = free leading-axis slice; reshape merges leading dims only.
            lhs = lhs_buf[slot, kh:kh + H, :, :].reshape(H * W, 3 * cin)
            w_tap = w_ref[kd * 3 + kh]                  # (3*Cin, Cout), VMEM-resident
            acc = acc + jnp.dot(lhs, w_tap, preferred_element_type=jnp.float32)

    y = acc * s_ref[...] + b_ref[...]                   # f32 epilogue (folded BN)
    if add_residual:
        y = y + r_ref[...].reshape(H * W, cout).astype(jnp.float32)
    if relu:
        y = jnp.maximum(y, 0.0)
    o_ref[...] = y.reshape(H, W, cout).astype(o_ref.dtype)


def conv3x3x3_bn(x_ndhwc, w_dhwio, scale, bias, *, relu, residual=None):
    """3x3x3 conv (pad=1, stride=1, no bias) + folded BN (+residual) (+ReLU), NDHWC."""
    N, D, H, W, cin = x_ndhwc.shape
    cout = w_dhwio.shape[-1]

    # Pad once in HBM (D, H, W halos); the kernel assembles im2col rows out of VMEM.
    x_pad = jnp.pad(x_ndhwc, ((0, 0), (1, 1), (1, 1), (1, 1), (0, 0)))
    # Merge (kw, cin) into the K axis (kw-major) and (kd, kh) into the tap axis (kd-major):
    #   w9[kd*3 + kh][kw*cin + i, o] = w_dhwio[kd, kh, kw, i, o]
    w9 = w_dhwio.reshape(3, 3, 3 * cin, cout).reshape(9, 3 * cin, cout)
    scale2 = scale.reshape(1, cout).astype(jnp.float32)
    bias2 = bias.reshape(1, cout).astype(jnp.float32)

    def slab_spec(k):
        # Block size 1 along padded-D => block index == element index, so overlapping
        # depth windows (d, d+1, d+2) are expressed directly in the index_map.
        return pl.BlockSpec((None, None, H + 2, W + 2, cin),
                            lambda n, d, _k=k: (n, d + _k, 0, 0, 0))

    in_specs = [
        slab_spec(0), slab_spec(1), slab_spec(2),
        pl.BlockSpec((9, 3 * cin, cout), lambda n, d: (0, 0, 0)),   # resident weights
        pl.BlockSpec((1, cout), lambda n, d: (0, 0)),
        pl.BlockSpec((1, cout), lambda n, d: (0, 0)),
    ]
    args = [x_pad, x_pad, x_pad, w9, scale2, bias2]
    if residual is not None:
        in_specs.append(pl.BlockSpec((None, None, H, W, cout),
                                     lambda n, d: (n, d, 0, 0, 0)))
        args.append(residual)

    kernel = functools.partial(_conv3x3x3_bn_kernel, H=H, W=W, cin=cin, cout=cout,
                               relu=relu, add_residual=residual is not None)

    return pl.pallas_call(
        kernel,
        out_shape=jax.ShapeDtypeStruct((N, D, H, W, cout), x_ndhwc.dtype),
        grid_spec=pltpu.PrefetchScalarGridSpec(
            num_scalar_prefetch=0,
            grid=(N, D),
            in_specs=in_specs,
            out_specs=pl.BlockSpec((None, None, H, W, cout),
                                   lambda n, d: (n, d, 0, 0, 0)),
            scratch_shapes=[pltpu.VMEM((2, H + 2, W, 3 * cin), x_ndhwc.dtype)],
        ),
        compiler_params=pltpu.CompilerParams(
            dimension_semantics=("parallel", "parallel")),
    )(*args)


# ---------------------------------------------------------------------------
# BasicBlock forward (wrapper): NCDHW in, NCDHW out.
# ---------------------------------------------------------------------------
def basic_block_forward(x_ncdhw, params):
    x = jnp.transpose(x_ncdhw, (0, 2, 3, 4, 1))                       # -> NDHWC
    out1 = conv3x3x3_bn(x, params["w1"], params["s1"], params["b1"], relu=True)
    # conv2 + BN2 + residual add + final ReLU fused in one kernel.
    out2 = conv3x3x3_bn(out1, params["w2"], params["s2"], params["b2"],
                        relu=True, residual=x)
    return jnp.transpose(out2, (0, 4, 1, 2, 3))                       # -> NCDHW


# ---------------------------------------------------------------------------
# Deterministic synthetic parameters (shapes follow BasicBlock.__init__ with Conv3DSimple)
# ---------------------------------------------------------------------------
def init_params(key, inplanes, planes):
    ks = jax.random.split(key, 10)
    eps = 1e-5

    def bn(kg, kb, km, kv, c):
        gamma = 1.0 + 0.1 * jax.random.normal(kg, (c,), jnp.float32)
        beta = 0.1 * jax.random.normal(kb, (c,), jnp.float32)
        mean = 0.1 * jax.random.normal(km, (c,), jnp.float32)
        var = jax.random.uniform(kv, (c,), jnp.float32, minval=0.5, maxval=1.5)
        scale = gamma / jnp.sqrt(var + eps)
        bias = beta - mean * scale
        return scale, bias

    w1 = 0.1 * jax.random.normal(ks[0], (3, 3, 3, inplanes, planes), jnp.float32)  # DHWIO
    s1, b1 = bn(ks[1], ks[2], ks[3], ks[4], planes)
    w2 = 0.1 * jax.random.normal(ks[5], (3, 3, 3, planes, planes), jnp.float32)    # DHWIO
    s2, b2 = bn(ks[6], ks[7], ks[8], ks[9], planes)
    return dict(w1=w1, s1=s1, b1=b1, w2=w2, s2=s2, b2=b2)


# Pure-JAX reference for validation
def ref_forward(x_ncdhw, p):
    x = jnp.transpose(x_ncdhw, (0, 2, 3, 4, 1))
    y = lax.conv_general_dilated(
        x, p["w1"], window_strides=(1, 1, 1),
        padding=((1, 1), (1, 1), (1, 1)),
        dimension_numbers=("NDHWC", "DHWIO", "NDHWC"))
    y = jnp.maximum(y * p["s1"] + p["b1"], 0.0)
    y = lax.conv_general_dilated(
        y, p["w2"], window_strides=(1, 1, 1),
        padding=((1, 1), (1, 1), (1, 1)),
        dimension_numbers=("NDHWC", "DHWIO", "NDHWC"))
    y = y * p["s2"] + p["b2"]
    y = jnp.maximum(y + x, 0.0)
    return jnp.transpose(y, (0, 4, 1, 2, 3))


if __name__ == "__main__":
    key = jax.random.PRNGKey(0)
    kx, kp = jax.random.split(key)

    # downsample=None, stride=1, expansion=1 => inplanes must equal planes for the residual.
    N, planes, D, H, W = 2, 32, 4, 8, 8
    inplanes = planes
    x = jax.random.normal(kx, (N, inplanes, D, H, W), jnp.float32)
    params = init_params(kp, inplanes, planes)

    out = jax.jit(basic_block_forward)(x, params)
    out = jax.block_until_ready(out)

    ref = ref_forward(x, params)
    assert out.shape == (N, planes, D, H, W)
    np.testing.assert_allclose(np.asarray(out), np.asarray(ref), rtol=1e-3, atol=1e-3)
    print("KERNEL_OK")
</pallas_src>

<mosaic_0001>
module attributes {stable_mosaic.version = 11 : i64} {
  func.func @_conv3x3x3_bn_kernel(%arg0: i32, %arg1: i32, %arg2: memref<1x1x10x10x32xf32, #tpu.memory_space<vmem>>, %arg3: memref<1x1x10x10x32xf32, #tpu.memory_space<vmem>>, %arg4: memref<1x1x10x10x32xf32, #tpu.memory_space<vmem>>, %arg5: memref<9x96x32xf32, #tpu.memory_space<vmem>>, %arg6: memref<1x32xf32, #tpu.memory_space<vmem>>, %arg7: memref<1x32xf32, #tpu.memory_space<vmem>>, %arg8: memref<1x1x8x8x32xf32, #tpu.memory_space<vmem>>, %arg9: memref<2x10x8x96xf32, #tpu.memory_space<vmem>>) attributes {dimension_semantics = [#tpu.dimension_semantics<parallel>, #tpu.dimension_semantics<parallel>], iteration_bounds = array<i64: 2, 4>, scalar_prefetch = 0 : i64, scratch_operands = 1 : i64, tpu.core_type = #tpu.core_type<tc>, window_params = [{transform_indices = @transform_0, window_bounds = array<i64: 1, 1, 10, 10, 32>}, {transform_indices = @transform_1, window_bounds = array<i64: 1, 1, 10, 10, 32>}, {transform_indices = @transform_2, window_bounds = array<i64: 1, 1, 10, 10, 32>}, {pipeline_mode = #tpu.pipeline_mode<synchronous>, transform_indices = @transform_3, window_bounds = array<i64: 9, 96, 32>}, {pipeline_mode = #tpu.pipeline_mode<synchronous>, transform_indices = @transform_4, window_bounds = array<i64: 1, 32>}, {pipeline_mode = #tpu.pipeline_mode<synchronous>, transform_indices = @transform_5, window_bounds = array<i64: 1, 32>}, {transform_indices = @transform_6, window_bounds = array<i64: 1, 1, 8, 8, 32>}]} {
    %cst = arith.constant 0.000000e+00 : f32
    %0 = vector.broadcast %cst : f32 to vector<64x32xf32>
    %c0 = arith.constant 0 : index
    %c0_0 = arith.constant 0 : index
    %c0_1 = arith.constant 0 : index
    %c0_2 = arith.constant 0 : index
    %c0_3 = arith.constant 0 : index
    %1 = vector.load %arg2[%c0, %c0_0, %c0_1, %c0_2, %c0_3] : memref<1x1x10x10x32xf32, #tpu.memory_space<vmem>>, vector<1x1x10x10x32xf32>
    %2 = vector.shape_cast %1 : vector<1x1x10x10x32xf32> to vector<10x10x32xf32>
    %3 = vector.extract_strided_slice %2 {offsets = [0, 0, 0], sizes = [10, 8, 32], strides = [1, 1, 1]} : vector<10x10x32xf32> to vector<10x8x32xf32>
    %c0_4 = arith.constant 0 : index
    %c0_5 = arith.constant 0 : index
    %c0_6 = arith.constant 0 : index
    %c0_7 = arith.constant 0 : index
    %4 = vector.load %arg9[%c0_4, %c0_5, %c0_6, %c0_7] : memref<2x10x8x96xf32, #tpu.memory_space<vmem>>, vector<1x10x8x32xf32>
    %5 = vector.shape_cast %4 : vector<1x10x8x32xf32> to vector<10x8x32xf32>
    %6 = vector.shape_cast %3 : vector<10x8x32xf32> to vector<1x10x8x32xf32>
    tpu.vector_store %arg9[%c0_4, %c0_5, %c0_6, %c0_7], %6 {strides = array<i32>} : memref<2x10x8x96xf32, #tpu.memory_space<vmem>>, vector<1x10x8x32xf32>,
    %7 = vector.extract_strided_slice %2 {offsets = [0, 1, 0], sizes = [10, 8, 32], strides = [1, 1, 1]} : vector<10x10x32xf32> to vector<10x8x32xf32>
    %c0_8 = arith.constant 0 : index
    %c0_9 = arith.constant 0 : index
    %c0_10 = arith.constant 0 : index
    %c32 = arith.constant 32 : index
    %8 = vector.load %arg9[%c0_8, %c0_9, %c0_10, %c32] : memref<2x10x8x96xf32, #tpu.memory_space<vmem>>, vector<1x10x8x32xf32>
    %9 = vector.shape_cast %8 : vector<1x10x8x32xf32> to vector<10x8x32xf32>
    %10 = vector.shape_cast %7 : vector<10x8x32xf32> to vector<1x10x8x32xf32>
    tpu.vector_store %arg9[%c0_8, %c0_9, %c0_10, %c32], %10 {strides = array<i32>} : memref<2x10x8x96xf32, #tpu.memory_space<vmem>>, vector<1x10x8x32xf32>,
    %11 = vector.extract_strided_slice %2 {offsets = [0, 2, 0], sizes = [10, 8, 32], strides = [1, 1, 1]} : vector<10x10x32xf32> to vector<10x8x32xf32>
    %c0_11 = arith.constant 0 : index
    %c0_12 = arith.constant 0 : index
    %c0_13 = arith.constant 0 : index
    %c64 = arith.constant 64 : index
    %12 = vector.load %arg9[%c0_11, %c0_12, %c0_13, %c64] : memref<2x10x8x96xf32, #tpu.memory_space<vmem>>, vector<1x10x8x32xf32>
    %13 = vector.shape_cast %12 : vector<1x10x8x32xf32> to vector<10x8x32xf32>
    %14 = vector.shape_cast %11 : vector<10x8x32xf32> to vector<1x10x8x32xf32>
    tpu.vector_store %arg9[%c0_11, %c0_12, %c0_13, %c64], %14 {strides = array<i32>} : memref<2x10x8x96xf32, #tpu.memory_space<vmem>>, vector<1x10x8x32xf32>,
    %c0_14 = arith.constant 0 : index
    %c0_15 = arith.constant 0 : index
    %c0_16 = arith.constant 0 : index
    %c0_17 = arith.constant 0 : index
    %15 = vector.load %arg9[%c0_14, %c0_15, %c0_16, %c0_17] : memref<2x10x8x96xf32, #tpu.memory_space<vmem>>, vector<1x8x8x96xf32>
    %16 = vector.shape_cast %15 : vector<1x8x8x96xf32> to vector<8x8x96xf32>
    %17 = vector.shape_cast %16 : vector<8x8x96xf32> to vector<64x96xf32>
    %c0_18 = arith.constant 0 : index
    %c0_19 = arith.constant 0 : index
    %c0_20 = arith.constant 0 : index
    %18 = vector.load %arg5[%c0_18, %c0_19, %c0_20] : memref<9x96x32xf32, #tpu.memory_space<vmem>>, vector<1x96x32xf32>
    %19 = vector.shape_cast %18 : vector<1x96x32xf32> to vector<96x32xf32>
    %cst_21 = arith.constant dense<0.000000e+00> : vector<64x32xf32>
    %20 = tpu.matmul %17, %19, %cst_21 {dimension_numbers = #tpu.dot_dimension_numbers<[1], [0], [0], [1], [0, 0, 1, 1], [], []>} : vector<64x96xf32>, vector<96x32xf32>, vector<64x32xf32> -> vector<64x32xf32>
    %21 = arith.addf %0, %20 : vector<64x32xf32>
    %c0_22 = arith.constant 0 : index
    %c1 = arith.constant 1 : index
    %c0_23 = arith.constant 0 : index
    %c0_24 = arith.constant 0 : index
    %22 = vector.load %arg9[%c0_22, %c1, %c0_23, %c0_24] : memref<2x10x8x96xf32, #tpu.memory_space<vmem>>, vector<1x8x8x96xf32>
    %23 = vector.shape_cast %22 : vector<1x8x8x96xf32> to vector<8x8x96xf32>
    %24 = vector.shape_cast %23 : vector<8x8x96xf32> to vector<64x96xf32>
    %c1_25 = arith.constant 1 : index
    %c0_26 = arith.constant 0 : index
    %c0_27 = arith.constant 0 : index
    %25 = vector.load %arg5[%c1_25, %c0_26, %c0_27] : memref<9x96x32xf32, #tpu.memory_space<vmem>>, vector<1x96x32xf32>
    %26 = vector.shape_cast %25 : vector<1x96x32xf32> to vector<96x32xf32>
    %cst_28 = arith.constant dense<0.000000e+00> : vector<64x32xf32>
    %27 = tpu.matmul %24, %26, %cst_28 {dimension_numbers = #tpu.dot_dimension_numbers<[1], [0], [0], [1], [0, 0, 1, 1], [], []>} : vector<64x96xf32>, vector<96x32xf32>, vector<64x32xf32> -> vector<64x32xf32>
    %28 = arith.addf %21, %27 : vector<64x32xf32>
    %c0_29 = arith.constant 0 : index
    %c2 = arith.constant 2 : index
    %c0_30 = arith.constant 0 : index
    %c0_31 = arith.constant 0 : index
    %29 = vector.load %arg9[%c0_29, %c2, %c0_30, %c0_31] : memref<2x10x8x96xf32, #tpu.memory_space<vmem>>, vector<1x8x8x96xf32>
    %30 = vector.shape_cast %29 : vector<1x8x8x96xf32> to vector<8x8x96xf32>
    %31 = vector.shape_cast %30 : vector<8x8x96xf32> to vector<64x96xf32>
    %c2_32 = arith.constant 2 : index
    %c0_33 = arith.constant 0 : index
    %c0_34 = arith.constant 0 : index
    %32 = vector.load %arg5[%c2_32, %c0_33, %c0_34] : memref<9x96x32xf32, #tpu.memory_space<vmem>>, vector<1x96x32xf32>
    %33 = vector.shape_cast %32 : vector<1x96x32xf32> to vector<96x32xf32>
    %cst_35 = arith.constant dense<0.000000e+00> : vector<64x32xf32>
    %34 = tpu.matmul %31, %33, %cst_35 {dimension_numbers = #tpu.dot_dimension_numbers<[1], [0], [0], [1], [0, 0, 1, 1], [], []>} : vector<64x96xf32>, vector<96x32xf32>, vector<64x32xf32> -> vector<64x32xf32>
    %35 = arith.addf %28, %34 : vector<64x32xf32>
    %c0_36 = arith.constant 0 : index
    %c0_37 = arith.constant 0 : index
    %c0_38 = arith.constant 0 : index
    %c0_39 = arith.constant 0 : index
    %c0_40 = arith.constant 0 : index
    %36 = vector.load %arg3[%c0_36, %c0_37, %c0_38, %c0_39, %c0_40] : memref<1x1x10x10x32xf32, #tpu.memory_space<vmem>>, vector<1x1x10x10x32xf32>
    %37 = vector.shape_cast %36 : vector<1x1x10x10x32xf32> to vector<10x10x32xf32>
    %38 = vector.extract_strided_slice %37 {offsets = [0, 0, 0], sizes = [10, 8, 32], strides = [1, 1, 1]} : vector<10x10x32xf32> to vector<10x8x32xf32>
    %c1_41 = arith.constant 1 : index
    %c0_42 = arith.constant 0 : index
    %c0_43 = arith.constant 0 : index
    %c0_44 = arith.constant 0 : index
    %39 = vector.load %arg9[%c1_41, %c0_42, %c0_43, %c0_44] : memref<2x10x8x96xf32, #tpu.memory_space<vmem>>, vector<1x10x8x32xf32>
    %40 = vector.shape_cast %39 : vector<1x10x8x32xf32> to vector<10x8x32xf32>
    %41 = vector.shape_cast %38 : vector<10x8x32xf32> to vector<1x10x8x32xf32>
    tpu.vector_store %arg9[%c1_41, %c0_42, %c0_43, %c0_44], %41 {strides = array<i32>} : memref<2x10x8x96xf32, #tpu.memory_space<vmem>>, vector<1x10x8x32xf32>,
    %42 = vector.extract_strided_slice %37 {offsets = [0, 1, 0], sizes = [10, 8, 32], strides = [1, 1, 1]} : vector<10x10x32xf32> to vector<10x8x32xf32>
    %c1_45 = arith.constant 1 : index
    %c0_46 = arith.constant 0 : index
    %c0_47 = arith.constant 0 : index
    %c32_48 = arith.constant 32 : index
    %43 = vector.load %arg9[%c1_45, %c0_46, %c0_47, %c32_48] : memref<2x10x8x96xf32, #tpu.memory_space<vmem>>, vector<1x10x8x32xf32>
    %44 = vector.shape_cast %43 : vector<1x10x8x32xf32> to vector<10x8x32xf32>
    %45 = vector.shape_cast %42 : vector<10x8x32xf32> to vector<1x10x8x32xf32>
    tpu.vector_store %arg9[%c1_45, %c0_46, %c0_47, %c32_48], %45 {strides = array<i32>} : memref<2x10x8x96xf32, #tpu.memory_space<vmem>>, vector<1x10x8x32xf32>,
    %46 = vector.extract_strided_slice %37 {offsets = [0, 2, 0], sizes = [10, 8, 32], strides = [1, 1, 1]} : vector<10x10x32xf32> to vector<10x8x32xf32>
    %c1_49 = arith.constant 1 : index
    %c0_50 = arith.constant 0 : index
    %c0_51 = arith.constant 0 : index
    %c64_52 = arith.constant 64 : index
    %47 = vector.load %arg9[%c1_49, %c0_50, %c0_51, %c64_52] : memref<2x10x8x96xf32, #tpu.memory_space<vmem>>, vector<1x10x8x32xf32>
    %48 = vector.shape_cast %47 : vector<1x10x8x32xf32> to vector<10x8x32xf32>
    %49 = vector.shape_cast %46 : vector<10x8x32xf32> to vector<1x10x8x32xf32>
    tpu.vector_store %arg9[%c1_49, %c0_50, %c0_51, %c64_52], %49 {strides = array<i32>} : memref<2x10x8x96xf32, #tpu.memory_space<vmem>>, vector<1x10x8x32xf32>,
    %c1_53 = arith.constant 1 : index
    %c0_54 = arith.constant 0 : index
    %c0_55 = arith.constant 0 : index
    %c0_56 = arith.constant 0 : index
    %50 = vector.load %arg9[%c1_53, %c0_54, %c0_55, %c0_56] : memref<2x10x8x96xf32, #tpu.memory_space<vmem>>, vector<1x8x8x96xf32>
    %51 = vector.shape_cast %50 : vector<1x8x8x96xf32> to vector<8x8x96xf32>
    %52 = vector.shape_cast %51 : vector<8x8x96xf32> to vector<64x96xf32>
    %c3 = arith.constant 3 : index
    %c0_57 = arith.constant 0 : index
    %c0_58 = arith.constant 0 : index
    %53 = vector.load %arg5[%c3, %c0_57, %c0_58] : memref<9x96x32xf32, #tpu.memory_space<vmem>>, vector<1x96x32xf32>
    %54 = vector.shape_cast %53 : vector<1x96x32xf32> to vector<96x32xf32>
    %cst_59 = arith.constant dense<0.000000e+00> : vector<64x32xf32>
    %55 = tpu.matmul %52, %54, %cst_59 {dimension_numbers = #tpu.dot_dimension_numbers<[1], [0], [0], [1], [0, 0, 1, 1], [], []>} : vector<64x96xf32>, vector<96x32xf32>, vector<64x32xf32> -> vector<64x32xf32>
    %56 = arith.addf %35, %55 : vector<64x32xf32>
    %c1_60 = arith.constant 1 : index
    %c1_61 = arith.constant 1 : index
    %c0_62 = arith.constant 0 : index
    %c0_63 = arith.constant 0 : index
    %57 = vector.load %arg9[%c1_60, %c1_61, %c0_62, %c0_63] : memref<2x10x8x96xf32, #tpu.memory_space<vmem>>, vector<1x8x8x96xf32>
    %58 = vector.shape_cast %57 : vector<1x8x8x96xf32> to vector<8x8x96xf32>
    %59 = vector.shape_cast %58 : vector<8x8x96xf32> to vector<64x96xf32>
    %c4 = arith.constant 4 : index
    %c0_64 = arith.constant 0 : index
    %c0_65 = arith.constant 0 : index
    %60 = vector.load %arg5[%c4, %c0_64, %c0_65] : memref<9x96x32xf32, #tpu.memory_space<vmem>>, vector<1x96x32xf32>
    %61 = vector.shape_cast %60 : vector<1x96x32xf32> to vector<96x32xf32>
    %cst_66 = arith.constant dense<0.000000e+00> : vector<64x32xf32>
    %62 = tpu.matmul %59, %61, %cst_66 {dimension_numbers = #tpu.dot_dimension_numbers<[1], [0], [0], [1], [0, 0, 1, 1], [], []>} : vector<64x96xf32>, vector<96x32xf32>, vector<64x32xf32> -> vector<64x32xf32>
    %63 = arith.addf %56, %62 : vector<64x32xf32>
    %c1_67 = arith.constant 1 : index
    %c2_68 = arith.constant 2 : index
    %c0_69 = arith.constant 0 : index
    %c0_70 = arith.constant 0 : index
    %64 = vector.load %arg9[%c1_67, %c2_68, %c0_69, %c0_70] : memref<2x10x8x96xf32, #tpu.memory_space<vmem>>, vector<1x8x8x96xf32>
    %65 = vector.shape_cast %64 : vector<1x8x8x96xf32> to vector<8x8x96xf32>
    %66 = vector.shape_cast %65 : vector<8x8x96xf32> to vector<64x96xf32>
    %c5 = arith.constant 5 : index
    %c0_71 = arith.constant 0 : index
    %c0_72 = arith.constant 0 : index
    %67 = vector.load %arg5[%c5, %c0_71, %c0_72] : memref<9x96x32xf32, #tpu.memory_space<vmem>>, vector<1x96x32xf32>
    %68 = vector.shape_cast %67 : vector<1x96x32xf32> to vector<96x32xf32>
    %cst_73 = arith.constant dense<0.000000e+00> : vector<64x32xf32>
    %69 = tpu.matmul %66, %68, %cst_73 {dimension_numbers = #tpu.dot_dimension_numbers<[1], [0], [0], [1], [0, 0, 1, 1], [], []>} : vector<64x96xf32>, vector<96x32xf32>, vector<64x32xf32> -> vector<64x32xf32>
    %70 = arith.addf %63, %69 : vector<64x32xf32>
    %c0_74 = arith.constant 0 : index
    %c0_75 = arith.constant 0 : index
    %c0_76 = arith.constant 0 : index
    %c0_77 = arith.constant 0 : index
    %c0_78 = arith.constant 0 : index
    %71 = vector.load %arg4[%c0_74, %c0_75, %c0_76, %c0_77, %c0_78] : memref<1x1x10x10x32xf32, #tpu.memory_space<vmem>>, vector<1x1x10x10x32xf32>
    %72 = vector.shape_cast %71 : vector<1x1x10x10x32xf32> to vector<10x10x32xf32>
    %73 = vector.extract_strided_slice %72 {offsets = [0, 0, 0], sizes = [10, 8, 32], strides = [1, 1, 1]} : vector<10x10x32xf32> to vector<10x8x32xf32>
    %c0_79 = arith.constant 0 : index
    %c0_80 = arith.constant 0 : index
    %c0_81 = arith.constant 0 : index
    %c0_82 = arith.constant 0 : index
    %74 = vector.load %arg9[%c0_79, %c0_80, %c0_81, %c0_82] : memref<2x10x8x96xf32, #tpu.memory_space<vmem>>, vector<1x10x8x32xf32>
    %75 = vector.shape_cast %74 : vector<1x10x8x32xf32> to vector<10x8x32xf32>
    %76 = vector.shape_cast %73 : vector<10x8x32xf32> to vector<1x10x8x32xf32>
    tpu.vector_store %arg9[%c0_79, %c0_80, %c0_81, %c0_82], %76 {strides = array<i32>} : memref<2x10x8x96xf32, #tpu.memory_space<vmem>>, vector<1x10x8x32xf32>,
    %77 = vector.extract_strided_slice %72 {offsets = [0, 1, 0], sizes = [10, 8, 32], strides = [1, 1, 1]} : vector<10x10x32xf32> to vector<10x8x32xf32>
    %c0_83 = arith.constant 0 : index
    %c0_84 = arith.constant 0 : index
    %c0_85 = arith.constant 0 : index
    %c32_86 = arith.constant 32 : index
    %78 = vector.load %arg9[%c0_83, %c0_84, %c0_85, %c32_86] : memref<2x10x8x96xf32, #tpu.memory_space<vmem>>, vector<1x10x8x32xf32>
    %79 = vector.shape_cast %78 : vector<1x10x8x32xf32> to vector<10x8x32xf32>
    %80 = vector.shape_cast %77 : vector<10x8x32xf32> to vector<1x10x8x32xf32>
    tpu.vector_store %arg9[%c0_83, %c0_84, %c0_85, %c32_86], %80 {strides = array<i32>} : memref<2x10x8x96xf32, #tpu.memory_space<vmem>>, vector<1x10x8x32xf32>,
    %81 = vector.extract_strided_slice %72 {offsets = [0, 2, 0], sizes = [10, 8, 32], strides = [1, 1, 1]} : vector<10x10x32xf32> to vector<10x8x32xf32>
    %c0_87 = arith.constant 0 : index
    %c0_88 = arith.constant 0 : index
    %c0_89 = arith.constant 0 : index
    %c64_90 = arith.constant 64 : index
    %82 = vector.load %arg9[%c0_87, %c0_88, %c0_89, %c64_90] : memref<2x10x8x96xf32, #tpu.memory_space<vmem>>, vector<1x10x8x32xf32>
    %83 = vector.shape_cast %82 : vector<1x10x8x32xf32> to vector<10x8x32xf32>
    %84 = vector.shape_cast %81 : vector<10x8x32xf32> to vector<1x10x8x32xf32>
    tpu.vector_store %arg9[%c0_87, %c0_88, %c0_89, %c64_90], %84 {strides = array<i32>} : memref<2x10x8x96xf32, #tpu.memory_space<vmem>>, vector<1x10x8x32xf32>,
    %c0_91 = arith.constant 0 : index
    %c0_92 = arith.constant 0 : index
    %c0_93 = arith.constant 0 : index
    %c0_94 = arith.constant 0 : index
    %85 = vector.load %arg9[%c0_91, %c0_92, %c0_93, %c0_94] : memref<2x10x8x96xf32, #tpu.memory_space<vmem>>, vector<1x8x8x96xf32>
    %86 = vector.shape_cast %85 : vector<1x8x8x96xf32> to vector<8x8x96xf32>
    %87 = vector.shape_cast %86 : vector<8x8x96xf32> to vector<64x96xf32>
    %c6 = arith.constant 6 : index
    %c0_95 = arith.constant 0 : index
    %c0_96 = arith.constant 0 : index
    %88 = vector.load %arg5[%c6, %c0_95, %c0_96] : memref<9x96x32xf32, #tpu.memory_space<vmem>>, vector<1x96x32xf32>
    %89 = vector.shape_cast %88 : vector<1x96x32xf32> to vector<96x32xf32>
    %cst_97 = arith.constant dense<0.000000e+00> : vector<64x32xf32>
    %90 = tpu.matmul %87, %89, %cst_97 {dimension_numbers = #tpu.dot_dimension_numbers<[1], [0], [0], [1], [0, 0, 1, 1], [], []>} : vector<64x96xf32>, vector<96x32xf32>, vector<64x32xf32> -> vector<64x32xf32>
    %91 = arith.addf %70, %90 : vector<64x32xf32>
    %c0_98 = arith.constant 0 : index
    %c1_99 = arith.constant 1 : index
    %c0_100 = arith.constant 0 : index
    %c0_101 = arith.constant 0 : index
    %92 = vector.load %arg9[%c0_98, %c1_99, %c0_100, %c0_101] : memref<2x10x8x96xf32, #tpu.memory_space<vmem>>, vector<1x8x8x96xf32>
    %93 = vector.shape_cast %92 : vector<1x8x8x96xf32> to vector<8x8x96xf32>
    %94 = vector.shape_cast %93 : vector<8x8x96xf32> to vector<64x96xf32>
    %c7 = arith.constant 7 : index
    %c0_102 = arith.constant 0 : index
    %c0_103 = arith.constant 0 : index
    %95 = vector.load %arg5[%c7, %c0_102, %c0_103] : memref<9x96x32xf32, #tpu.memory_space<vmem>>, vector<1x96x32xf32>
    %96 = vector.shape_cast %95 : vector<1x96x32xf32> to vector<96x32xf32>
    %cst_104 = arith.constant dense<0.000000e+00> : vector<64x32xf32>
    %97 = tpu.matmul %94, %96, %cst_104 {dimension_numbers = #tpu.dot_dimension_numbers<[1], [0], [0], [1], [0, 0, 1, 1], [], []>} : vector<64x96xf32>, vector<96x32xf32>, vector<64x32xf32> -> vector<64x32xf32>
    %98 = arith.addf %91, %97 : vector<64x32xf32>
    %c0_105 = arith.constant 0 : index
    %c2_106 = arith.constant 2 : index
    %c0_107 = arith.constant 0 : index
    %c0_108 = arith.constant 0 : index
    %99 = vector.load %arg9[%c0_105, %c2_106, %c0_107, %c0_108] : memref<2x10x8x96xf32, #tpu.memory_space<vmem>>, vector<1x8x8x96xf32>
    %100 = vector.shape_cast %99 : vector<1x8x8x96xf32> to vector<8x8x96xf32>
    %101 = vector.shape_cast %100 : vector<8x8x96xf32> to vector<64x96xf32>
    %c8 = arith.constant 8 : index
    %c0_109 = arith.constant 0 : index
    %c0_110 = arith.constant 0 : index
    %102 = vector.load %arg5[%c8, %c0_109, %c0_110] : memref<9x96x32xf32, #tpu.memory_space<vmem>>, vector<1x96x32xf32>
    %103 = vector.shape_cast %102 : vector<1x96x32xf32> to vector<96x32xf32>
    %cst_111 = arith.constant dense<0.000000e+00> : vector<64x32xf32>
    %104 = tpu.matmul %101, %103, %cst_111 {dimension_numbers = #tpu.dot_dimension_numbers<[1], [0], [0], [1], [0, 0, 1, 1], [], []>} : vector<64x96xf32>, vector<96x32xf32>, vector<64x32xf32> -> vector<64x32xf32>
    %105 = arith.addf %98, %104 : vector<64x32xf32>
    %c0_112 = arith.constant 0 : index
    %c0_113 = arith.constant 0 : index
    %106 = vector.load %arg6[%c0_112, %c0_113] : memref<1x32xf32, #tpu.memory_space<vmem>>, vector<1x32xf32>
    %107 = vector.broadcast %106 : vector<1x32xf32> to vector<64x32xf32>
    %108 = arith.mulf %105, %107 : vector<64x32xf32>
    %c0_114 = arith.constant 0 : index
    %c0_115 = arith.constant 0 : index
    %109 = vector.load %arg7[%c0_114, %c0_115] : memref<1x32xf32, #tpu.memory_space<vmem>>, vector<1x32xf32>
    %110 = vector.broadcast %109 : vector<1x32xf32> to vector<64x32xf32>
    %111 = arith.addf %108, %110 : vector<64x32xf32>
    %cst_116 = arith.constant 0.000000e+00 : f32
    %112 = vector.broadcast %cst_116 : f32 to vector<64x32xf32>
    %113 = arith.maximumf %111, %112 : vector<64x32xf32>
    %114 = vector.shape_cast %113 : vector<64x32xf32> to vector<8x8x32xf32>
    %c0_117 = arith.constant 0 : index
    %c0_118 = arith.constant 0 : index
    %c0_119 = arith.constant 0 : index
    %c0_120 = arith.constant 0 : index
    %c0_121 = arith.constant 0 : index
    %115 = vector.load %arg8[%c0_117, %c0_118, %c0_119, %c0_120, %c0_121] : memref<1x1x8x8x32xf32, #tpu.memory_space<vmem>>, vector<1x1x8x8x32xf32>
    %116 = vector.shape_cast %115 : vector<1x1x8x8x32xf32> to vector<8x8x32xf32>
    %117 = vector.shape_cast %114 : vector<8x8x32xf32> to vector<1x1x8x8x32xf32>
    tpu.vector_store %arg8[%c0_117, %c0_118, %c0_119, %c0_120, %c0_121], %117 {strides = array<i32>} : memref<1x1x8x8x32xf32, #tpu.memory_space<vmem>>, vector<1x1x8x8x32xf32>,
    return
  }
  func.func @transform_0(%arg0: i32, %arg1: i32) -> (i32, i32, i32, i32, i32) {
    %c0_i32 = arith.constant 0 : i32
    %0 = arith.addi %arg1, %c0_i32 : i32
    %c0_i32_0 = arith.constant 0 : i32
    %c0_i32_1 = arith.constant 0 : i32
    %c0_i32_2 = arith.constant 0 : i32
    %c0_i32_3 = arith.constant 0 : i32
    return %arg0, %0, %c0_i32_0, %c0_i32_1, %c0_i32_2 : i32, i32, i32, i32, i32
  }
  func.func @transform_1(%arg0: i32, %arg1: i32) -> (i32, i32, i32, i32, i32) {
    %c1_i32 = arith.constant 1 : i32
    %0 = arith.addi %arg1, %c1_i32 : i32
    %c0_i32 = arith.constant 0 : i32
    %c0_i32_0 = arith.constant 0 : i32
    %c0_i32_1 = arith.constant 0 : i32
    %c0_i32_2 = arith.constant 0 : i32
    return %arg0, %0, %c0_i32, %c0_i32_0, %c0_i32_1 : i32, i32, i32, i32, i32
  }
  func.func @transform_2(%arg0: i32, %arg1: i32) -> (i32, i32, i32, i32, i32) {
    %c2_i32 = arith.constant 2 : i32
    %0 = arith.addi %arg1, %c2_i32 : i32
    %c0_i32 = arith.constant 0 : i32
    %c0_i32_0 = arith.constant 0 : i32
    %c0_i32_1 = arith.constant 0 : i32
    %c0_i32_2 = arith.constant 0 : i32
    return %arg0, %0, %c0_i32, %c0_i32_0, %c0_i32_1 : i32, i32, i32, i32, i32
  }
  func.func @transform_3(%arg0: i32, %arg1: i32) -> (i32, i32, i32) {
    %c0_i32 = arith.constant 0 : i32
    %c0_i32_0 = arith.constant 0 : i32
    %c0_i32_1 = arith.constant 0 : i32
    %c0_i32_2 = arith.constant 0 : i32
    return %c0_i32, %c0_i32_0, %c0_i32_1 : i32, i32, i32
  }
  func.func @transform_4(%arg0: i32, %arg1: i32) -> (i32, i32) {
    %c0_i32 = arith.constant 0 : i32
    %c0_i32_0 = arith.constant 0 : i32
    %c0_i32_1 = arith.constant 0 : i32
    return %c0_i32, %c0_i32_0 : i32, i32
  }
  func.func @transform_5(%arg0: i32, %arg1: i32) -> (i32, i32) {
    %c0_i32 = arith.constant 0 : i32
    %c0_i32_0 = arith.constant 0 : i32
    %c0_i32_1 = arith.constant 0 : i32
    return %c0_i32, %c0_i32_0 : i32, i32
  }
  func.func @transform_6(%arg0: i32, %arg1: i32) -> (i32, i32, i32, i32, i32) {
    %c0_i32 = arith.constant 0 : i32
    %c0_i32_0 = arith.constant 0 : i32
    %c0_i32_1 = arith.constant 0 : i32
    %c0_i32_2 = arith.constant 0 : i32
    return %arg0, %arg1, %c0_i32, %c0_i32_0, %c0_i32_1 : i32, i32, i32, i32, i32
  }
}

module attributes {stable_mosaic.version = 11 : i64} {
  func.func @_conv3x3x3_bn_kernel(%arg0: i32, %arg1: i32, %arg2: memref<1x1x10x10x32xf32, #tpu.memory_space<vmem>>, %arg3: memref<1x1x10x10x32xf32, #tpu.memory_space<vmem>>, %arg4: memref<1x1x10x10x32xf32, #tpu.memory_space<vmem>>, %arg5: memref<9x96x32xf32, #tpu.memory_space<vmem>>, %arg6: memref<1x32xf32, #tpu.memory_space<vmem>>, %arg7: memref<1x32xf32, #tpu.memory_space<vmem>>, %arg8: memref<1x1x8x8x32xf32, #tpu.memory_space<vmem>>, %arg9: memref<1x1x8x8x32xf32, #tpu.memory_space<vmem>>, %arg10: memref<2x10x8x96xf32, #tpu.memory_space<vmem>>) attributes {dimension_semantics = [#tpu.dimension_semantics<parallel>, #tpu.dimension_semantics<parallel>], iteration_bounds = array<i64: 2, 4>, scalar_prefetch = 0 : i64, scratch_operands = 1 : i64, tpu.core_type = #tpu.core_type<tc>, window_params = [{transform_indices = @transform_0, window_bounds = array<i64: 1, 1, 10, 10, 32>}, {transform_indices = @transform_1, window_bounds = array<i64: 1, 1, 10, 10, 32>}, {transform_indices = @transform_2, window_bounds = array<i64: 1, 1, 10, 10, 32>}, {pipeline_mode = #tpu.pipeline_mode<synchronous>, transform_indices = @transform_3, window_bounds = array<i64: 9, 96, 32>}, {pipeline_mode = #tpu.pipeline_mode<synchronous>, transform_indices = @transform_4, window_bounds = array<i64: 1, 32>}, {pipeline_mode = #tpu.pipeline_mode<synchronous>, transform_indices = @transform_5, window_bounds = array<i64: 1, 32>}, {transform_indices = @transform_6, window_bounds = array<i64: 1, 1, 8, 8, 32>}, {transform_indices = @transform_7, window_bounds = array<i64: 1, 1, 8, 8, 32>}]} {
    %cst = arith.constant 0.000000e+00 : f32
    %0 = vector.broadcast %cst : f32 to vector<64x32xf32>
    %c0 = arith.constant 0 : index
    %c0_0 = arith.constant 0 : index
    %c0_1 = arith.constant 0 : index
    %c0_2 = arith.constant 0 : index
    %c0_3 = arith.constant 0 : index
    %1 = vector.load %arg2[%c0, %c0_0, %c0_1, %c0_2, %c0_3] : memref<1x1x10x10x32xf32, #tpu.memory_space<vmem>>, vector<1x1x10x10x32xf32>
    %2 = vector.shape_cast %1 : vector<1x1x10x10x32xf32> to vector<10x10x32xf32>
    %3 = vector.extract_strided_slice %2 {offsets = [0, 0, 0], sizes = [10, 8, 32], strides = [1, 1, 1]} : vector<10x10x32xf32> to vector<10x8x32xf32>
    %c0_4 = arith.constant 0 : index
    %c0_5 = arith.constant 0 : index
    %c0_6 = arith.constant 0 : index
    %c0_7 = arith.constant 0 : index
    %4 = vector.load %arg10[%c0_4, %c0_5, %c0_6, %c0_7] : memref<2x10x8x96xf32, #tpu.memory_space<vmem>>, vector<1x10x8x32xf32>
    %5 = vector.shape_cast %4 : vector<1x10x8x32xf32> to vector<10x8x32xf32>
    %6 = vector.shape_cast %3 : vector<10x8x32xf32> to vector<1x10x8x32xf32>
    tpu.vector_store %arg10[%c0_4, %c0_5, %c0_6, %c0_7], %6 {strides = array<i32>} : memref<2x10x8x96xf32, #tpu.memory_space<vmem>>, vector<1x10x8x32xf32>,
    %7 = vector.extract_strided_slice %2 {offsets = [0, 1, 0], sizes = [10, 8, 32], strides = [1, 1, 1]} : vector<10x10x32xf32> to vector<10x8x32xf32>
    %c0_8 = arith.constant 0 : index
    %c0_9 = arith.constant 0 : index
    %c0_10 = arith.constant 0 : index
    %c32 = arith.constant 32 : index
    %8 = vector.load %arg10[%c0_8, %c0_9, %c0_10, %c32] : memref<2x10x8x96xf32, #tpu.memory_space<vmem>>, vector<1x10x8x32xf32>
    %9 = vector.shape_cast %8 : vector<1x10x8x32xf32> to vector<10x8x32xf32>
    %10 = vector.shape_cast %7 : vector<10x8x32xf32> to vector<1x10x8x32xf32>
    tpu.vector_store %arg10[%c0_8, %c0_9, %c0_10, %c32], %10 {strides = array<i32>} : memref<2x10x8x96xf32, #tpu.memory_space<vmem>>, vector<1x10x8x32xf32>,
    %11 = vector.extract_strided_slice %2 {offsets = [0, 2, 0], sizes = [10, 8, 32], strides = [1, 1, 1]} : vector<10x10x32xf32> to vector<10x8x32xf32>
    %c0_11 = arith.constant 0 : index
    %c0_12 = arith.constant 0 : index
    %c0_13 = arith.constant 0 : index
    %c64 = arith.constant 64 : index
    %12 = vector.load %arg10[%c0_11, %c0_12, %c0_13, %c64] : memref<2x10x8x96xf32, #tpu.memory_space<vmem>>, vector<1x10x8x32xf32>
    %13 = vector.shape_cast %12 : vector<1x10x8x32xf32> to vector<10x8x32xf32>
    %14 = vector.shape_cast %11 : vector<10x8x32xf32> to vector<1x10x8x32xf32>
    tpu.vector_store %arg10[%c0_11, %c0_12, %c0_13, %c64], %14 {strides = array<i32>} : memref<2x10x8x96xf32, #tpu.memory_space<vmem>>, vector<1x10x8x32xf32>,
    %c0_14 = arith.constant 0 : index
    %c0_15 = arith.constant 0 : index
    %c0_16 = arith.constant 0 : index
    %c0_17 = arith.constant 0 : index
    %15 = vector.load %arg10[%c0_14, %c0_15, %c0_16, %c0_17] : memref<2x10x8x96xf32, #tpu.memory_space<vmem>>, vector<1x8x8x96xf32>
    %16 = vector.shape_cast %15 : vector<1x8x8x96xf32> to vector<8x8x96xf32>
    %17 = vector.shape_cast %16 : vector<8x8x96xf32> to vector<64x96xf32>
    %c0_18 = arith.constant 0 : index
    %c0_19 = arith.constant 0 : index
    %c0_20 = arith.constant 0 : index
    %18 = vector.load %arg5[%c0_18, %c0_19, %c0_20] : memref<9x96x32xf32, #tpu.memory_space<vmem>>, vector<1x96x32xf32>
    %19 = vector.shape_cast %18 : vector<1x96x32xf32> to vector<96x32xf32>
    %cst_21 = arith.constant dense<0.000000e+00> : vector<64x32xf32>
    %20 = tpu.matmul %17, %19, %cst_21 {dimension_numbers = #tpu.dot_dimension_numbers<[1], [0], [0], [1], [0, 0, 1, 1], [], []>} : vector<64x96xf32>, vector<96x32xf32>, vector<64x32xf32> -> vector<64x32xf32>
    %21 = arith.addf %0, %20 : vector<64x32xf32>
    %c0_22 = arith.constant 0 : index
    %c1 = arith.constant 1 : index
    %c0_23 = arith.constant 0 : index
    %c0_24 = arith.constant 0 : index
    %22 = vector.load %arg10[%c0_22, %c1, %c0_23, %c0_24] : memref<2x10x8x96xf32, #tpu.memory_space<vmem>>, vector<1x8x8x96xf32>
    %23 = vector.shape_cast %22 : vector<1x8x8x96xf32> to vector<8x8x96xf32>
    %24 = vector.shape_cast %23 : vector<8x8x96xf32> to vector<64x96xf32>
    %c1_25 = arith.constant 1 : index
    %c0_26 = arith.constant 0 : index
    %c0_27 = arith.constant 0 : index
    %25 = vector.load %arg5[%c1_25, %c0_26, %c0_27] : memref<9x96x32xf32, #tpu.memory_space<vmem>>, vector<1x96x32xf32>
    %26 = vector.shape_cast %25 : vector<1x96x32xf32> to vector<96x32xf32>
    %cst_28 = arith.constant dense<0.000000e+00> : vector<64x32xf32>
    %27 = tpu.matmul %24, %26, %cst_28 {dimension_numbers = #tpu.dot_dimension_numbers<[1], [0], [0], [1], [0, 0, 1, 1], [], []>} : vector<64x96xf32>, vector<96x32xf32>, vector<64x32xf32> -> vector<64x32xf32>
    %28 = arith.addf %21, %27 : vector<64x32xf32>
    %c0_29 = arith.constant 0 : index
    %c2 = arith.constant 2 : index
    %c0_30 = arith.constant 0 : index
    %c0_31 = arith.constant 0 : index
    %29 = vector.load %arg10[%c0_29, %c2, %c0_30, %c0_31] : memref<2x10x8x96xf32, #tpu.memory_space<vmem>>, vector<1x8x8x96xf32>
    %30 = vector.shape_cast %29 : vector<1x8x8x96xf32> to vector<8x8x96xf32>
    %31 = vector.shape_cast %30 : vector<8x8x96xf32> to vector<64x96xf32>
    %c2_32 = arith.constant 2 : index
    %c0_33 = arith.constant 0 : index
    %c0_34 = arith.constant 0 : index
    %32 = vector.load %arg5[%c2_32, %c0_33, %c0_34] : memref<9x96x32xf32, #tpu.memory_space<vmem>>, vector<1x96x32xf32>
    %33 = vector.shape_cast %32 : vector<1x96x32xf32> to vector<96x32xf32>
    %cst_35 = arith.constant dense<0.000000e+00> : vector<64x32xf32>
    %34 = tpu.matmul %31, %33, %cst_35 {dimension_numbers = #tpu.dot_dimension_numbers<[1], [0], [0], [1], [0, 0, 1, 1], [], []>} : vector<64x96xf32>, vector<96x32xf32>, vector<64x32xf32> -> vector<64x32xf32>
    %35 = arith.addf %28, %34 : vector<64x32xf32>
    %c0_36 = arith.constant 0 : index
    %c0_37 = arith.constant 0 : index
    %c0_38 = arith.constant 0 : index
    %c0_39 = arith.constant 0 : index
    %c0_40 = arith.constant 0 : index
    %36 = vector.load %arg3[%c0_36, %c0_37, %c0_38, %c0_39, %c0_40] : memref<1x1x10x10x32xf32, #tpu.memory_space<vmem>>, vector<1x1x10x10x32xf32>
    %37 = vector.shape_cast %36 : vector<1x1x10x10x32xf32> to vector<10x10x32xf32>
    %38 = vector.extract_strided_slice %37 {offsets = [0, 0, 0], sizes = [10, 8, 32], strides = [1, 1, 1]} : vector<10x10x32xf32> to vector<10x8x32xf32>
    %c1_41 = arith.constant 1 : index
    %c0_42 = arith.constant 0 : index
    %c0_43 = arith.constant 0 : index
    %c0_44 = arith.constant 0 : index
    %39 = vector.load %arg10[%c1_41, %c0_42, %c0_43, %c0_44] : memref<2x10x8x96xf32, #tpu.memory_space<vmem>>, vector<1x10x8x32xf32>
    %40 = vector.shape_cast %39 : vector<1x10x8x32xf32> to vector<10x8x32xf32>
    %41 = vector.shape_cast %38 : vector<10x8x32xf32> to vector<1x10x8x32xf32>
    tpu.vector_store %arg10[%c1_41, %c0_42, %c0_43, %c0_44], %41 {strides = array<i32>} : memref<2x10x8x96xf32, #tpu.memory_space<vmem>>, vector<1x10x8x32xf32>,
    %42 = vector.extract_strided_slice %37 {offsets = [0, 1, 0], sizes = [10, 8, 32], strides = [1, 1, 1]} : vector<10x10x32xf32> to vector<10x8x32xf32>
    %c1_45 = arith.constant 1 : index
    %c0_46 = arith.constant 0 : index
    %c0_47 = arith.constant 0 : index
    %c32_48 = arith.constant 32 : index
    %43 = vector.load %arg10[%c1_45, %c0_46, %c0_47, %c32_48] : memref<2x10x8x96xf32, #tpu.memory_space<vmem>>, vector<1x10x8x32xf32>
    %44 = vector.shape_cast %43 : vector<1x10x8x32xf32> to vector<10x8x32xf32>
    %45 = vector.shape_cast %42 : vector<10x8x32xf32> to vector<1x10x8x32xf32>
    tpu.vector_store %arg10[%c1_45, %c0_46, %c0_47, %c32_48], %45 {strides = array<i32>} : memref<2x10x8x96xf32, #tpu.memory_space<vmem>>, vector<1x10x8x32xf32>,
    %46 = vector.extract_strided_slice %37 {offsets = [0, 2, 0], sizes = [10, 8, 32], strides = [1, 1, 1]} : vector<10x10x32xf32> to vector<10x8x32xf32>
    %c1_49 = arith.constant 1 : index
    %c0_50 = arith.constant 0 : index
    %c0_51 = arith.constant 0 : index
    %c64_52 = arith.constant 64 : index
    %47 = vector.load %arg10[%c1_49, %c0_50, %c0_51, %c64_52] : memref<2x10x8x96xf32, #tpu.memory_space<vmem>>, vector<1x10x8x32xf32>
    %48 = vector.shape_cast %47 : vector<1x10x8x32xf32> to vector<10x8x32xf32>
    %49 = vector.shape_cast %46 : vector<10x8x32xf32> to vector<1x10x8x32xf32>
    tpu.vector_store %arg10[%c1_49, %c0_50, %c0_51, %c64_52], %49 {strides = array<i32>} : memref<2x10x8x96xf32, #tpu.memory_space<vmem>>, vector<1x10x8x32xf32>,
    %c1_53 = arith.constant 1 : index
    %c0_54 = arith.constant 0 : index
    %c0_55 = arith.constant 0 : index
    %c0_56 = arith.constant 0 : index
    %50 = vector.load %arg10[%c1_53, %c0_54, %c0_55, %c0_56] : memref<2x10x8x96xf32, #tpu.memory_space<vmem>>, vector<1x8x8x96xf32>
    %51 = vector.shape_cast %50 : vector<1x8x8x96xf32> to vector<8x8x96xf32>
    %52 = vector.shape_cast %51 : vector<8x8x96xf32> to vector<64x96xf32>
    %c3 = arith.constant 3 : index
    %c0_57 = arith.constant 0 : index
    %c0_58 = arith.constant 0 : index
    %53 = vector.load %arg5[%c3, %c0_57, %c0_58] : memref<9x96x32xf32, #tpu.memory_space<vmem>>, vector<1x96x32xf32>
    %54 = vector.shape_cast %53 : vector<1x96x32xf32> to vector<96x32xf32>
    %cst_59 = arith.constant dense<0.000000e+00> : vector<64x32xf32>
    %55 = tpu.matmul %52, %54, %cst_59 {dimension_numbers = #tpu.dot_dimension_numbers<[1], [0], [0], [1], [0, 0, 1, 1], [], []>} : vector<64x96xf32>, vector<96x32xf32>, vector<64x32xf32> -> vector<64x32xf32>
    %56 = arith.addf %35, %55 : vector<64x32xf32>
    %c1_60 = arith.constant 1 : index
    %c1_61 = arith.constant 1 : index
    %c0_62 = arith.constant 0 : index
    %c0_63 = arith.constant 0 : index
    %57 = vector.load %arg10[%c1_60, %c1_61, %c0_62, %c0_63] : memref<2x10x8x96xf32, #tpu.memory_space<vmem>>, vector<1x8x8x96xf32>
    %58 = vector.shape_cast %57 : vector<1x8x8x96xf32> to vector<8x8x96xf32>
    %59 = vector.shape_cast %58 : vector<8x8x96xf32> to vector<64x96xf32>
    %c4 = arith.constant 4 : index
    %c0_64 = arith.constant 0 : index
    %c0_65 = arith.constant 0 : index
    %60 = vector.load %arg5[%c4, %c0_64, %c0_65] : memref<9x96x32xf32, #tpu.memory_space<vmem>>, vector<1x96x32xf32>
    %61 = vector.shape_cast %60 : vector<1x96x32xf32> to vector<96x32xf32>
    %cst_66 = arith.constant dense<0.000000e+00> : vector<64x32xf32>
    %62 = tpu.matmul %59, %61, %cst_66 {dimension_numbers = #tpu.dot_dimension_numbers<[1], [0], [0], [1], [0, 0, 1, 1], [], []>} : vector<64x96xf32>, vector<96x32xf32>, vector<64x32xf32> -> vector<64x32xf32>
    %63 = arith.addf %56, %62 : vector<64x32xf32>
    %c1_67 = arith.constant 1 : index
    %c2_68 = arith.constant 2 : index
    %c0_69 = arith.constant 0 : index
    %c0_70 = arith.constant 0 : index
    %64 = vector.load %arg10[%c1_67, %c2_68, %c0_69, %c0_70] : memref<2x10x8x96xf32, #tpu.memory_space<vmem>>, vector<1x8x8x96xf32>
    %65 = vector.shape_cast %64 : vector<1x8x8x96xf32> to vector<8x8x96xf32>
    %66 = vector.shape_cast %65 : vector<8x8x96xf32> to vector<64x96xf32>
    %c5 = arith.constant 5 : index
    %c0_71 = arith.constant 0 : index
    %c0_72 = arith.constant 0 : index
    %67 = vector.load %arg5[%c5, %c0_71, %c0_72] : memref<9x96x32xf32, #tpu.memory_space<vmem>>, vector<1x96x32xf32>
    %68 = vector.shape_cast %67 : vector<1x96x32xf32> to vector<96x32xf32>
    %cst_73 = arith.constant dense<0.000000e+00> : vector<64x32xf32>
    %69 = tpu.matmul %66, %68, %cst_73 {dimension_numbers = #tpu.dot_dimension_numbers<[1], [0], [0], [1], [0, 0, 1, 1], [], []>} : vector<64x96xf32>, vector<96x32xf32>, vector<64x32xf32> -> vector<64x32xf32>
    %70 = arith.addf %63, %69 : vector<64x32xf32>
    %c0_74 = arith.constant 0 : index
    %c0_75 = arith.constant 0 : index
    %c0_76 = arith.constant 0 : index
    %c0_77 = arith.constant 0 : index
    %c0_78 = arith.constant 0 : index
    %71 = vector.load %arg4[%c0_74, %c0_75, %c0_76, %c0_77, %c0_78] : memref<1x1x10x10x32xf32, #tpu.memory_space<vmem>>, vector<1x1x10x10x32xf32>
    %72 = vector.shape_cast %71 : vector<1x1x10x10x32xf32> to vector<10x10x32xf32>
    %73 = vector.extract_strided_slice %72 {offsets = [0, 0, 0], sizes = [10, 8, 32], strides = [1, 1, 1]} : vector<10x10x32xf32> to vector<10x8x32xf32>
    %c0_79 = arith.constant 0 : index
    %c0_80 = arith.constant 0 : index
    %c0_81 = arith.constant 0 : index
    %c0_82 = arith.constant 0 : index
    %74 = vector.load %arg10[%c0_79, %c0_80, %c0_81, %c0_82] : memref<2x10x8x96xf32, #tpu.memory_space<vmem>>, vector<1x10x8x32xf32>
    %75 = vector.shape_cast %74 : vector<1x10x8x32xf32> to vector<10x8x32xf32>
    %76 = vector.shape_cast %73 : vector<10x8x32xf32> to vector<1x10x8x32xf32>
    tpu.vector_store %arg10[%c0_79, %c0_80, %c0_81, %c0_82], %76 {strides = array<i32>} : memref<2x10x8x96xf32, #tpu.memory_space<vmem>>, vector<1x10x8x32xf32>,
    %77 = vector.extract_strided_slice %72 {offsets = [0, 1, 0], sizes = [10, 8, 32], strides = [1, 1, 1]} : vector<10x10x32xf32> to vector<10x8x32xf32>
    %c0_83 = arith.constant 0 : index
    %c0_84 = arith.constant 0 : index
    %c0_85 = arith.constant 0 : index
    %c32_86 = arith.constant 32 : index
    %78 = vector.load %arg10[%c0_83, %c0_84, %c0_85, %c32_86] : memref<2x10x8x96xf32, #tpu.memory_space<vmem>>, vector<1x10x8x32xf32>
    %79 = vector.shape_cast %78 : vector<1x10x8x32xf32> to vector<10x8x32xf32>
    %80 = vector.shape_cast %77 : vector<10x8x32xf32> to vector<1x10x8x32xf32>
    tpu.vector_store %arg10[%c0_83, %c0_84, %c0_85, %c32_86], %80 {strides = array<i32>} : memref<2x10x8x96xf32, #tpu.memory_space<vmem>>, vector<1x10x8x32xf32>,
    %81 = vector.extract_strided_slice %72 {offsets = [0, 2, 0], sizes = [10, 8, 32], strides = [1, 1, 1]} : vector<10x10x32xf32> to vector<10x8x32xf32>
    %c0_87 = arith.constant 0 : index
    %c0_88 = arith.constant 0 : index
    %c0_89 = arith.constant 0 : index
    %c64_90 = arith.constant 64 : index
    %82 = vector.load %arg10[%c0_87, %c0_88, %c0_89, %c64_90] : memref<2x10x8x96xf32, #tpu.memory_space<vmem>>, vector<1x10x8x32xf32>
    %83 = vector.shape_cast %82 : vector<1x10x8x32xf32> to vector<10x8x32xf32>
    %84 = vector.shape_cast %81 : vector<10x8x32xf32> to vector<1x10x8x32xf32>
    tpu.vector_store %arg10[%c0_87, %c0_88, %c0_89, %c64_90], %84 {strides = array<i32>} : memref<2x10x8x96xf32, #tpu.memory_space<vmem>>, vector<1x10x8x32xf32>,
    %c0_91 = arith.constant 0 : index
    %c0_92 = arith.constant 0 : index
    %c0_93 = arith.constant 0 : index
    %c0_94 = arith.constant 0 : index
    %85 = vector.load %arg10[%c0_91, %c0_92, %c0_93, %c0_94] : memref<2x10x8x96xf32, #tpu.memory_space<vmem>>, vector<1x8x8x96xf32>
    %86 = vector.shape_cast %85 : vector<1x8x8x96xf32> to vector<8x8x96xf32>
    %87 = vector.shape_cast %86 : vector<8x8x96xf32> to vector<64x96xf32>
    %c6 = arith.constant 6 : index
    %c0_95 = arith.constant 0 : index
    %c0_96 = arith.constant 0 : index
    %88 = vector.load %arg5[%c6, %c0_95, %c0_96] : memref<9x96x32xf32, #tpu.memory_space<vmem>>, vector<1x96x32xf32>
    %89 = vector.shape_cast %88 : vector<1x96x32xf32> to vector<96x32xf32>
    %cst_97 = arith.constant dense<0.000000e+00> : vector<64x32xf32>
    %90 = tpu.matmul %87, %89, %cst_97 {dimension_numbers = #tpu.dot_dimension_numbers<[1], [0], [0], [1], [0, 0, 1, 1], [], []>} : vector<64x96xf32>, vector<96x32xf32>, vector<64x32xf32> -> vector<64x32xf32>
    %91 = arith.addf %70, %90 : vector<64x32xf32>
    %c0_98 = arith.constant 0 : index
    %c1_99 = arith.constant 1 : index
    %c0_100 = arith.constant 0 : index
    %c0_101 = arith.constant 0 : index
    %92 = vector.load %arg10[%c0_98, %c1_99, %c0_100, %c0_101] : memref<2x10x8x96xf32, #tpu.memory_space<vmem>>, vector<1x8x8x96xf32>
    %93 = vector.shape_cast %92 : vector<1x8x8x96xf32> to vector<8x8x96xf32>
    %94 = vector.shape_cast %93 : vector<8x8x96xf32> to vector<64x96xf32>
    %c7 = arith.constant 7 : index
    %c0_102 = arith.constant 0 : index
    %c0_103 = arith.constant 0 : index
    %95 = vector.load %arg5[%c7, %c0_102, %c0_103] : memref<9x96x32xf32, #tpu.memory_space<vmem>>, vector<1x96x32xf32>
    %96 = vector.shape_cast %95 : vector<1x96x32xf32> to vector<96x32xf32>
    %cst_104 = arith.constant dense<0.000000e+00> : vector<64x32xf32>
    %97 = tpu.matmul %94, %96, %cst_104 {dimension_numbers = #tpu.dot_dimension_numbers<[1], [0], [0], [1], [0, 0, 1, 1], [], []>} : vector<64x96xf32>, vector<96x32xf32>, vector<64x32xf32> -> vector<64x32xf32>
    %98 = arith.addf %91, %97 : vector<64x32xf32>
    %c0_105 = arith.constant 0 : index
    %c2_106 = arith.constant 2 : index
    %c0_107 = arith.constant 0 : index
    %c0_108 = arith.constant 0 : index
    %99 = vector.load %arg10[%c0_105, %c2_106, %c0_107, %c0_108] : memref<2x10x8x96xf32, #tpu.memory_space<vmem>>, vector<1x8x8x96xf32>
    %100 = vector.shape_cast %99 : vector<1x8x8x96xf32> to vector<8x8x96xf32>
    %101 = vector.shape_cast %100 : vector<8x8x96xf32> to vector<64x96xf32>
    %c8 = arith.constant 8 : index
    %c0_109 = arith.constant 0 : index
    %c0_110 = arith.constant 0 : index
    %102 = vector.load %arg5[%c8, %c0_109, %c0_110] : memref<9x96x32xf32, #tpu.memory_space<vmem>>, vector<1x96x32xf32>
    %103 = vector.shape_cast %102 : vector<1x96x32xf32> to vector<96x32xf32>
    %cst_111 = arith.constant dense<0.000000e+00> : vector<64x32xf32>
    %104 = tpu.matmul %101, %103, %cst_111 {dimension_numbers = #tpu.dot_dimension_numbers<[1], [0], [0], [1], [0, 0, 1, 1], [], []>} : vector<64x96xf32>, vector<96x32xf32>, vector<64x32xf32> -> vector<64x32xf32>
    %105 = arith.addf %98, %104 : vector<64x32xf32>
    %c0_112 = arith.constant 0 : index
    %c0_113 = arith.constant 0 : index
    %106 = vector.load %arg6[%c0_112, %c0_113] : memref<1x32xf32, #tpu.memory_space<vmem>>, vector<1x32xf32>
    %107 = vector.broadcast %106 : vector<1x32xf32> to vector<64x32xf32>
    %108 = arith.mulf %105, %107 : vector<64x32xf32>
    %c0_114 = arith.constant 0 : index
    %c0_115 = arith.constant 0 : index
    %109 = vector.load %arg7[%c0_114, %c0_115] : memref<1x32xf32, #tpu.memory_space<vmem>>, vector<1x32xf32>
    %110 = vector.broadcast %109 : vector<1x32xf32> to vector<64x32xf32>
    %111 = arith.addf %108, %110 : vector<64x32xf32>
    %c0_116 = arith.constant 0 : index
    %c0_117 = arith.constant 0 : index
    %c0_118 = arith.constant 0 : index
    %c0_119 = arith.constant 0 : index
    %c0_120 = arith.constant 0 : index
    %112 = vector.load %arg8[%c0_116, %c0_117, %c0_118, %c0_119, %c0_120] : memref<1x1x8x8x32xf32, #tpu.memory_space<vmem>>, vector<1x1x8x8x32xf32>
    %113 = vector.shape_cast %112 : vector<1x1x8x8x32xf32> to vector<8x8x32xf32>
    %114 = vector.shape_cast %113 : vector<8x8x32xf32> to vector<64x32xf32>
    %115 = arith.addf %111, %114 : vector<64x32xf32>
    %cst_121 = arith.constant 0.000000e+00 : f32
    %116 = vector.broadcast %cst_121 : f32 to vector<64x32xf32>
    %117 = arith.maximumf %115, %116 : vector<64x32xf32>
    %118 = vector.shape_cast %117 : vector<64x32xf32> to vector<8x8x32xf32>
    %c0_122 = arith.constant 0 : index
    %c0_123 = arith.constant 0 : index
    %c0_124 = arith.constant 0 : index
    %c0_125 = arith.constant 0 : index
    %c0_126 = arith.constant 0 : index
    %119 = vector.load %arg9[%c0_122, %c0_123, %c0_124, %c0_125, %c0_126] : memref<1x1x8x8x32xf32, #tpu.memory_space<vmem>>, vector<1x1x8x8x32xf32>
    %120 = vector.shape_cast %119 : vector<1x1x8x8x32xf32> to vector<8x8x32xf32>
    %121 = vector.shape_cast %118 : vector<8x8x32xf32> to vector<1x1x8x8x32xf32>
    tpu.vector_store %arg9[%c0_122, %c0_123, %c0_124, %c0_125, %c0_126], %121 {strides = array<i32>} : memref<1x1x8x8x32xf32, #tpu.memory_space<vmem>>, vector<1x1x8x8x32xf32>,
    return
  }
  func.func @transform_0(%arg0: i32, %arg1: i32) -> (i32, i32, i32, i32, i32) {
    %c0_i32 = arith.constant 0 : i32
    %0 = arith.addi %arg1, %c0_i32 : i32
    %c0_i32_0 = arith.constant 0 : i32
    %c0_i32_1 = arith.constant 0 : i32
    %c0_i32_2 = arith.constant 0 : i32
    %c0_i32_3 = arith.constant 0 : i32
    return %arg0, %0, %c0_i32_0, %c0_i32_1, %c0_i32_2 : i32, i32, i32, i32, i32
  }
  func.func @transform_1(%arg0: i32, %arg1: i32) -> (i32, i32, i32, i32, i32) {
    %c1_i32 = arith.constant 1 : i32
    %0 = arith.addi %arg1, %c1_i32 : i32
    %c0_i32 = arith.constant 0 : i32
    %c0_i32_0 = arith.constant 0 : i32
    %c0_i32_1 = arith.constant 0 : i32
    %c0_i32_2 = arith.constant 0 : i32
    return %arg0, %0, %c0_i32, %c0_i32_0, %c0_i32_1 : i32, i32, i32, i32, i32
  }
  func.func @transform_2(%arg0: i32, %arg1: i32) -> (i32, i32, i32, i32, i32) {
    %c2_i32 = arith.constant 2 : i32
    %0 = arith.addi %arg1, %c2_i32 : i32
    %c0_i32 = arith.constant 0 : i32
    %c0_i32_0 = arith.constant 0 : i32
    %c0_i32_1 = arith.constant 0 : i32
    %c0_i32_2 = arith.constant 0 : i32
    return %arg0, %0, %c0_i32, %c0_i32_0, %c0_i32_1 : i32, i32, i32, i32, i32
  }
  func.func @transform_3(%arg0: i32, %arg1: i32) -> (i32, i32, i32) {
    %c0_i32 = arith.constant 0 : i32
    %c0_i32_0 = arith.constant 0 : i32
    %c0_i32_1 = arith.constant 0 : i32
    %c0_i32_2 = arith.constant 0 : i32
    return %c0_i32, %c0_i32_0, %c0_i32_1 : i32, i32, i32
  }
  func.func @transform_4(%arg0: i32, %arg1: i32) -> (i32, i32) {
    %c0_i32 = arith.constant 0 : i32
    %c0_i32_0 = arith.constant 0 : i32
    %c0_i32_1 = arith.constant 0 : i32
    return %c0_i32, %c0_i32_0 : i32, i32
  }
  func.func @transform_5(%arg0: i32, %arg1: i32) -> (i32, i32) {
    %c0_i32 = arith.constant 0 : i32
    %c0_i32_0 = arith.constant 0 : i32
    %c0_i32_1 = arith.constant 0 : i32
    return %c0_i32, %c0_i32_0 : i32, i32
  }
  func.func @transform_6(%arg0: i32, %arg1: i32) -> (i32, i32, i32, i32, i32) {
    %c0_i32 = arith.constant 0 : i32
    %c0_i32_0 = arith.constant 0 : i32
    %c0_i32_1 = arith.constant 0 : i32
    %c0_i32_2 = arith.constant 0 : i32
    return %arg0, %arg1, %c0_i32, %c0_i32_0, %c0_i32_1 : i32, i32, i32, i32, i32
  }
  func.func @transform_7(%arg0: i32, %arg1: i32) -> (i32, i32, i32, i32, i32) {
    %c0_i32 = arith.constant 0 : i32
    %c0_i32_0 = arith.constant 0 : i32
    %c0_i32_1 = arith.constant 0 : i32
    %c0_i32_2 = arith.constant 0 : i32
    return %arg0, %arg1, %c0_i32, %c0_i32_0, %c0_i32_1 : i32, i32, i32, i32, i32
  }
}

</mosaic_0001>

<llo_original>
// kernel: basic_block_forward.2
$region0: #{basic_block_forward.2}
  #allocation0 [shape = 'u32[]', space=smem, size = 0x4, offset = 0x4, fixed_abs, tag = 'smem constant byte address 0x4 - core index']
  #allocation1 [shape = 'u32[144,128]{1,0:T(1,128)}', space=vmem, size = 0x12000, scoped, tag = 'internal scratch']
  #allocation2 [shape = 'f32[2,10,8,96]{3,2,1,0:T(8,128)}', space=vmem, size = 0x14000, scoped, tag = 'scratch operand']
  %s0 = inlined_call_operand.vmem [shape: f32[2,6,10,10,32], index: 0, kind: input, shape index: {}, may-alias: {0,1,2}]
  %s1 = inlined_call_operand.vmem [shape: f32[2,6,10,10,32], index: 1, kind: input, shape index: {}, may-alias: {0,1,2}]
  %s2 = inlined_call_operand.vmem [shape: f32[2,6,10,10,32], index: 2, kind: input, shape index: {}, may-alias: {0,1,2}]
  %s3 = inlined_call_operand.vmem [shape: f32[9,96,32], index: 3, kind: input, shape index: {}]
  %s4 = inlined_call_operand.vmem [shape: f32[1,32], index: 4, kind: input, shape index: {}]
  %s5 = inlined_call_operand.vmem [shape: f32[1,32], index: 5, kind: input, shape index: {}]
  %s6 = inlined_call_operand.vmem [shape: f32[2,4,8,8,32], index: 6, kind: output, shape index: {}]
  %s7 = sld [smem:[#allocation0]]
  $region57: #{basic_block_forward.2} parent=0
    _
  %s9 = ssub.s32 1, %s7
  %s10 = scalar_select 0, %s9, %s7
  loop: start=0, step=1, limit=10
  $region2: #{basic_block_forward.2} parent=0 // loop_pre_header
    _
  $region3: #{basic_block_forward.2} parent=0 // loop_header
    %s12 = sphi 0, %s16
    %p13 = scmp.ge.s32.totalorder %s12, 10
    %s19 = sphi 0, %s31
    %s20 = sphi 0, %s27
    %s21 = sphi 0, %s19
    %s22 = sphi 0, %s20
    %s23 = sphi 0, %s21
    %s24 = sphi 0, %s22
    %s36 = sphi 0, %s38
    %s39 = sphi 0, %s36
    %s40 = sphi 0, %s39
    %s56 = sphi 0, %s40
    %s66 = sphi 0, %s68
    %s69 = sphi 0, %s66
    %s70 = sphi 0, %s69
    %s86 = sphi 0, %s70
    %s96 = sphi 0, %s98
    %s99 = sphi 0, %s96
    %s100 = sphi 0, %s99
    %s116 = sphi 0, %s100
    %s120 = sphi 0, %s120
    %s122 = sphi 0, %s120
    %s123 = sphi 0, %s122
    %s137 = sphi 0, %s123
    %s141 = sphi 0, %s141
    %s143 = sphi 0, %s141
    %s144 = sphi 0, %s143
    %s158 = sphi 0, %s144
    %s162 = sphi 0, %s162
    %s164 = sphi 0, %s162
    %s165 = sphi 0, %s164
    %s179 = sphi 0, %s165
    %s187 = sphi 0, %s189
    %s190 = sphi 0, %s187
    %s191 = sphi 0, %s190
    %s207 = sphi 0, %s191
  $region4: #{basic_block_forward.2} parent=0 // loop_header_branch
    %15 = sbr.rel (%p13) target = $region8
  $region5: #{basic_block_forward.2} parent=0 // loop_body
    %s17 = ssub.s32 %s12, 1
    %s18 = ssub.s32 %s12, 2
    %s25 = sadd.s32 1, %s20
    %p26 = scmp.ge.s32.totalorder %s25, 4
    %s27 = scalar_select %p26, 0, %s25
    %s28 = sadd.s32 1, %s19
    %s29 = scalar_select %p26, %s28, %s19
    %p30 = scmp.ge.s32.totalorder %s29, 2
    %s31 = scalar_select %p30, 0, %s29
    %s32 = ssub.s32 %s19, %s31
    %s33 = ssub.s32 %s20, %s27
    %s34 = sor.u32 %s32, %s33
    %p35 = scmp.eq.s32.totalorder %s34, 0
    %s37 = sadd.s32 %s36, 1
    %s38 = scalar_select %p35, %s36, %s37
    %p41 = pneg %p35
    %p42 = scmp.eq.s32.totalorder %s12, 7
    %p43 = por %p41, %p42
    %p44 = scmp.ne.s32.totalorder %s36, %s39
    %p45 = scmp.eq.s32.totalorder %s12, 0
    %p46 = por %p44, %p45
    %p47 = scmp.ne.s32.totalorder %s36, %s39
    %p48 = scmp.eq.s32.totalorder %s17, 7
    %p49 = por %p47, %p48
    %p50 = scmp.ne.s32.totalorder %s39, %s40
    %p51 = scmp.eq.s32.totalorder %s17, 0
    %p52 = por %p50, %p51
    %p53 = scmp.ne.s32.totalorder %s39, %s40
    %p54 = scmp.eq.s32.totalorder %s18, 7
    %p55 = por %p53, %p54
    %p57 = scmp.ne.s32.totalorder %s40, %s56
    %p58 = scmp.eq.s32.totalorder %s18, 0
    %p59 = por %p57, %p58
    %s60 = sadd.s32 %s20, 1
    %s61 = sadd.s32 %s27, 1
    %s62 = ssub.s32 %s19, %s31
    %s63 = ssub.s32 %s60, %s61
    %s64 = sor.u32 %s62, %s63
    %p65 = scmp.eq.s32.totalorder %s64, 0
    %s67 = sadd.s32 %s66, 1
    %s68 = scalar_select %p65, %s66, %s67
    %p71 = pneg %p65
    %p72 = scmp.eq.s32.totalorder %s12, 7
    %p73 = por %p71, %p72
    %p74 = scmp.ne.s32.totalorder %s66, %s69
    %p75 = scmp.eq.s32.totalorder %s12, 0
    %p76 = por %p74, %p75
    %p77 = scmp.ne.s32.totalorder %s66, %s69
    %p78 = scmp.eq.s32.totalorder %s17, 7
    %p79 = por %p77, %p78
    %p80 = scmp.ne.s32.totalorder %s69, %s70
    %p81 = scmp.eq.s32.totalorder %s17, 0
    %p82 = por %p80, %p81
    %p83 = scmp.ne.s32.totalorder %s69, %s70
    %p84 = scmp.eq.s32.totalorder %s18, 7
    %p85 = por %p83, %p84
    %p87 = scmp.ne.s32.totalorder %s70, %s86
    %p88 = scmp.eq.s32.totalorder %s18, 0
    %p89 = por %p87, %p88
    %s90 = sadd.s32 %s20, 2
    %s91 = sadd.s32 %s27, 2
    %s92 = ssub.s32 %s19, %s31
    %s93 = ssub.s32 %s90, %s91
    %s94 = sor.u32 %s92, %s93
    %p95 = scmp.eq.s32.totalorder %s94, 0
    %s97 = sadd.s32 %s96, 1
    %s98 = scalar_select %p95, %s96, %s97
    %p101 = pneg %p95
    %p102 = scmp.eq.s32.totalorder %s12, 7
    %p103 = por %p101, %p102
    %p104 = scmp.ne.s32.totalorder %s96, %s99
    %p105 = scmp.eq.s32.totalorder %s12, 0
    %p106 = por %p104, %p105
    %p107 = scmp.ne.s32.totalorder %s96, %s99
    %p108 = scmp.eq.s32.totalorder %s17, 7
    %p109 = por %p107, %p108
    %p110 = scmp.ne.s32.totalorder %s99, %s100
    %p111 = scmp.eq.s32.totalorder %s17, 0
    %p112 = por %p110, %p111
    %p113 = scmp.ne.s32.totalorder %s99, %s100
    %p114 = scmp.eq.s32.totalorder %s18, 7
    %p115 = por %p113, %p114
    %p117 = scmp.ne.s32.totalorder %s100, %s116
    %p118 = scmp.eq.s32.totalorder %s18, 0
    %p119 = por %p117, %p118
    %s121 = sadd.s32 %s120, 1
    %p124 = scmp.eq.s32.totalorder %s12, 7
    %p125 = scmp.ne.s32.totalorder %s120, %s122
    %p126 = scmp.eq.s32.totalorder %s12, 0
    %p127 = por %p125, %p126
    %p128 = scmp.ne.s32.totalorder %s120, %s122
    %p129 = scmp.eq.s32.totalorder %s17, 7
    %p130 = por %p128, %p129
    %p131 = scmp.ne.s32.totalorder %s122, %s123
    %p132 = scmp.eq.s32.totalorder %s17, 0
    %p133 = por %p131, %p132
    %p134 = scmp.ne.s32.totalorder %s122, %s123
    %p135 = scmp.eq.s32.totalorder %s18, 7
    %p136 = por %p134, %p135
    %p138 = scmp.ne.s32.totalorder %s123, %s137
    %p139 = scmp.eq.s32.totalorder %s18, 0
    %p140 = por %p138, %p139
    %s142 = sadd.s32 %s141, 1
    %p145 = scmp.eq.s32.totalorder %s12, 7
    %p146 = scmp.ne.s32.totalorder %s141, %s143
    %p147 = scmp.eq.s32.totalorder %s12, 0
    %p148 = por %p146, %p147
    %p149 = scmp.ne.s32.totalorder %s141, %s143
    %p150 = scmp.eq.s32.totalorder %s17, 7
    %p151 = por %p149, %p150
    %p152 = scmp.ne.s32.totalorder %s143, %s144
    %p153 = scmp.eq.s32.totalorder %s17, 0
    %p154 = por %p152, %p153
    %p155 = scmp.ne.s32.totalorder %s143, %s144
    %p156 = scmp.eq.s32.totalorder %s18, 7
    %p157 = por %p155, %p156
    %p159 = scmp.ne.s32.totalorder %s144, %s158
    %p160 = scmp.eq.s32.totalorder %s18, 0
    %p161 = por %p159, %p160
    %s163 = sadd.s32 %s162, 1
    %p166 = scmp.eq.s32.totalorder %s12, 7
    %p167 = scmp.ne.s32.totalorder %s162, %s164
    %p168 = scmp.eq.s32.totalorder %s12, 0
    %p169 = por %p167, %p168
    %p170 = scmp.ne.s32.totalorder %s162, %s164
    %p171 = scmp.eq.s32.totalorder %s17, 7
    %p172 = por %p170, %p171
    %p173 = scmp.ne.s32.totalorder %s164, %s165
    %p174 = scmp.eq.s32.totalorder %s17, 0
    %p175 = por %p173, %p174
    %p176 = scmp.ne.s32.totalorder %s164, %s165
    %p177 = scmp.eq.s32.totalorder %s18, 7
    %p178 = por %p176, %p177
    %p180 = scmp.ne.s32.totalorder %s165, %s179
    %p181 = scmp.eq.s32.totalorder %s18, 0
    %p182 = por %p180, %p181
    %s183 = ssub.s32 %s19, %s31
    %s184 = ssub.s32 %s20, %s27
    %s185 = sor.u32 %s183, %s184
    %p186 = scmp.eq.s32.totalorder %s185, 0
    %s188 = sadd.s32 %s187, 1
    %s189 = scalar_select %p186, %s187, %s188
    %p192 = pneg %p186
    %p193 = scmp.eq.s32.totalorder %s12, 7
    %p194 = por %p192, %p193
    %p195 = scmp.ne.s32.totalorder %s187, %s190
    %p196 = scmp.eq.s32.totalorder %s12, 0
    %p197 = por %p195, %p196
    %p198 = scmp.ne.s32.totalorder %s187, %s190
    %p199 = scmp.eq.s32.totalorder %s17, 7
    %p200 = por %p198, %p199
    %p201 = scmp.ne.s32.totalorder %s190, %s191
    %p202 = scmp.eq.s32.totalorder %s17, 0
    %p203 = por %p201, %p202
    %p204 = scmp.ne.s32.totalorder %s190, %s191
    %p205 = scmp.eq.s32.totalorder %s18, 7
    %p206 = por %p204, %p205
    %p208 = scmp.ne.s32.totalorder %s191, %s207
    %p209 = scmp.eq.s32.totalorder %s18, 0
    %p210 = por %p208, %p209
    %p211 = scmp.le.s32.totalorder 1, %s12
    %p212 = scmp.lt.s32.totalorder %s12, 9
    %p213 = pnand %p211, %p212
    %p214 = pneg %p213
    // Predicated region
    $region9: #{basic_block_forward.2} parent=5 // pred_check
      _
    $region10: #{basic_block_forward.2} parent=5 // pred_check_branch
      %216 = sbr.rel (%p213) target = $region12
    $region11: #{basic_block_forward.2} parent=5 // pred_region
      %s217 = ssub.s32 %s12, 1
      // Predicated region
      $region13: #{basic_block_forward.2} parent=11 // pred_check
        %p218 = pneg %p133
      $region14: #{basic_block_forward.2} parent=11 // pred_check_branch
        %220 = sbr.rel (%p218) target = $region16
      $region15: #{basic_block_forward.2} parent=11 // pred_region
        _
      $region16: #{basic_block_forward.2} parent=11 // pred_fallthru
        _
      // Predicated region
      $region17: #{basic_block_forward.2} parent=11 // pred_check
        %p221 = pneg %p154
      $region18: #{basic_block_forward.2} parent=11 // pred_check_branch
        %223 = sbr.rel (%p221) target = $region20
      $region19: #{basic_block_forward.2} parent=11 // pred_region
        _
      $region20: #{basic_block_forward.2} parent=11 // pred_fallthru
        _
      // Predicated region
      $region21: #{basic_block_forward.2} parent=11 // pred_check
        %p224 = pneg %p175
      $region22: #{basic_block_forward.2} parent=11 // pred_check_branch
        %226 = sbr.rel (%p224) target = $region24
      $region23: #{basic_block_forward.2} parent=11 // pred_region
        _
      $region24: #{basic_block_forward.2} parent=11 // pred_fallthru
        _
    $region12: #{basic_block_forward.2} parent=5 // pred_fallthru
      _
    %p227 = scmp.lt.s32.totalorder %s12, 8
    // Predicated region
    $region25: #{basic_block_forward.2} parent=5 // pred_check
      %p228 = pneg %p227
    $region26: #{basic_block_forward.2} parent=5 // pred_check_branch
      %230 = sbr.rel (%p228) target = $region28
    $region27: #{basic_block_forward.2} parent=5 // pred_region
      // Predicated region
      $region29: #{basic_block_forward.2} parent=27 // pred_check
        %p231 = pneg %p46
      $region30: #{basic_block_forward.2} parent=27 // pred_check_branch
        %233 = sbr.rel (%p231) target = $region32
      $region31: #{basic_block_forward.2} parent=27 // pred_region
        %p234 = scmp.lt.s32.totalorder %s19, 1
        %s235 = scalar_select %p234, %s19, 1
        %p236 = scmp.lt.s32.totalorder %s20, 5
        %s237 = scalar_select %p236, %s20, 5
        %s238 = smul.addr %s237, 20
        %s239 = smul.addr %s235, 120
        %s240 = sadd.s32 %s238, %s239
        %s241 = smul.addr %s240, 8
        %s242 = scalar_lea.vmem %s0, %s241
      $region32: #{basic_block_forward.2} parent=27 // pred_fallthru
        _
      // Predicated region
      $region33: #{basic_block_forward.2} parent=27 // pred_check
        %p243 = pneg %p76
      $region34: #{basic_block_forward.2} parent=27 // pred_check_branch
        %245 = sbr.rel (%p243) target = $region36
      $region35: #{basic_block_forward.2} parent=27 // pred_region
        %s246 = sadd.s32 %s20, 1
        %p247 = scmp.lt.s32.totalorder %s19, 1
        %s248 = scalar_select %p247, %s19, 1
        %p249 = scmp.lt.s32.totalorder %s246, 5
        %s250 = scalar_select %p249, %s246, 5
        %s251 = smul.addr %s250, 20
        %s252 = smul.addr %s248, 120
        %s253 = sadd.s32 %s251, %s252
        %s254 = smul.addr %s253, 8
        %s255 = scalar_lea.vmem %s1, %s254
        %s256 = sadd.s32 %s20, 1
      $region36: #{basic_block_forward.2} parent=27 // pred_fallthru
        _
      // Predicated region
      $region37: #{basic_block_forward.2} parent=27 // pred_check
        %p257 = pneg %p106
      $region38: #{basic_block_forward.2} parent=27 // pred_check_branch
        %259 = sbr.rel (%p257) target = $region40
      $region39: #{basic_block_forward.2} parent=27 // pred_region
        %s260 = sadd.s32 %s20, 2
        %p261 = scmp.lt.s32.totalorder %s19, 1
        %s262 = scalar_select %p261, %s19, 1
        %p263 = scmp.lt.s32.totalorder %s260, 5
        %s264 = scalar_select %p263, %s260, 5
        %s265 = smul.addr %s264, 20
        %s266 = smul.addr %s262, 120
        %s267 = sadd.s32 %s265, %s266
        %s268 = smul.addr %s267, 8
        %s269 = scalar_lea.vmem %s2, %s268
        %s270 = sadd.s32 %s20, 2
      $region40: #{basic_block_forward.2} parent=27 // pred_fallthru
        _
    $region28: #{basic_block_forward.2} parent=5 // pred_fallthru
      _
    %p271 = scmp.le.s32.totalorder 1, %s12
    %p272 = scmp.lt.s32.totalorder %s12, 9
    %p273 = pnand %p271, %p272
    %p274 = pneg %p273
    // Predicated region
    $region41: #{basic_block_forward.2} parent=5 // pred_check
      _
    $region42: #{basic_block_forward.2} parent=5 // pred_check_branch
      %276 = sbr.rel (%p273) target = $region44
    $region43: #{basic_block_forward.2} parent=5 // pred_region
      %s277 = ssub.s32 %s12, 1
      %p278 = scmp.lt.s32.totalorder %s21, 1
      %s279 = scalar_select %p278, %s21, 1
      %p280 = scmp.lt.s32.totalorder %s22, 5
      %s281 = scalar_select %p280, %s22, 5
      %s282 = smul.addr %s281, 20
      %s283 = smul.addr %s279, 120
      %s284 = sadd.s32 %s282, %s283
      %s285 = smul.addr %s284, 8
      %s286 = scalar_lea.vmem %s0, %s285
      %p287 = pneg %p52
      %p288 = pneg %p49
      %s289 = sadd.s32 %s22, 1
      %p290 = scmp.lt.s32.totalorder %s21, 1
      %s291 = scalar_select %p290, %s21, 1
      %p292 = scmp.lt.s32.totalorder %s289, 5
      %s293 = scalar_select %p292, %s289, 5
      %s294 = smul.addr %s293, 20
      %s295 = smul.addr %s291, 120
      %s296 = sadd.s32 %s294, %s295
      %s297 = smul.addr %s296, 8
      %s298 = scalar_lea.vmem %s1, %s297
      %p299 = pneg %p82
      %p300 = pneg %p79
      %s301 = sadd.s32 %s22, 2
      %p302 = scmp.lt.s32.totalorder %s21, 1
      %s303 = scalar_select %p302, %s21, 1
      %p304 = scmp.lt.s32.totalorder %s301, 5
      %s305 = scalar_select %p304, %s301, 5
      %s306 = smul.addr %s305, 20
      %s307 = smul.addr %s303, 120
      %s308 = sadd.s32 %s306, %s307
      %s309 = smul.addr %s308, 8
      %s310 = scalar_lea.vmem %s2, %s309
      %p311 = pneg %p112
      %p312 = pneg %p109
      %p313 = pneg %p133
      %p314 = pneg %p130
      %p315 = pneg %p154
      %p316 = pneg %p151
      %p317 = pneg %p175
      %p318 = pneg %p172
      %p319 = pneg %p203
      %p320 = pneg %p200
      %p321 = scmp.lt.s32.totalorder %s21, 1
      %s322 = scalar_select %p321, %s21, 1
      %p323 = scmp.lt.s32.totalorder %s22, 3
      %s324 = scalar_select %p323, %s22, 3
      %s325 = smul.addr %s324, 8
      %s326 = smul.addr %s322, 32
      %s327 = sadd.s32 %s325, %s326
      %s328 = smul.addr %s327, 8
      %s329 = scalar_lea.vmem %s6, %s328
      %p330 = scmp.lt.s32.totalorder %s21, 1
      %s331 = scalar_select %p330, %s21, 1
      %p332 = scmp.lt.s32.totalorder %s22, 5
      %s333 = scalar_select %p332, %s22, 5
      %s334 = smul.addr %s333, 20
      %s335 = smul.addr %s331, 120
      %s336 = sadd.s32 %s334, %s335
      %s337 = smul.addr %s336, 8
      %s338 = scalar_lea.vmem %s0, %s337
      %s339 = sadd.s32 %s22, 1
      %p340 = scmp.lt.s32.totalorder %s21, 1
      %s341 = scalar_select %p340, %s21, 1
      %p342 = scmp.lt.s32.totalorder %s339, 5
      %s343 = scalar_select %p342, %s339, 5
      %s344 = smul.addr %s343, 20
      %s345 = smul.addr %s341, 120
      %s346 = sadd.s32 %s344, %s345
      %s347 = smul.addr %s346, 8
      %s348 = scalar_lea.vmem %s1, %s347
      %s349 = sadd.s32 %s22, 1
      %s350 = sadd.s32 %s22, 2
      %p351 = scmp.lt.s32.totalorder %s21, 1
      %s352 = scalar_select %p351, %s21, 1
      %p353 = scmp.lt.s32.totalorder %s350, 5
      %s354 = scalar_select %p353, %s350, 5
      %s355 = smul.addr %s354, 20
      %s356 = smul.addr %s352, 120
      %s357 = sadd.s32 %s355, %s356
      %s358 = smul.addr %s357, 8
      %s359 = scalar_lea.vmem %s2, %s358
      %s360 = sadd.s32 %s22, 2
      %p361 = scmp.lt.s32.totalorder %s21, 1
      %s362 = scalar_select %p361, %s21, 1
      %p363 = scmp.lt.s32.totalorder %s22, 3
      %s364 = scalar_select %p363, %s22, 3
      %s365 = smul.addr %s364, 8
      %s366 = smul.addr %s362, 32
      %s367 = sadd.s32 %s365, %s366
      %s368 = smul.addr %s367, 8
      %s369 = scalar_lea.vmem %s6, %s368
      %v370 = vld [vmem:[%s338] sm:$0xff]
      %v371 = vld [vmem:[%s338 + $0x8] sm:$0x3]
      %v372 = vld [vmem:[%s338 + $0x10] sm:$0xff]
      %v373 = vld [vmem:[%s338 + $0x18] sm:$0x3]
      %v374 = vld [vmem:[%s338 + $0x20] sm:$0xff]
      %v375 = vld [vmem:[%s338 + $0x28] sm:$0x3]
      %v376 = vld [vmem:[%s338 + $0x30] sm:$0xff]
      %v377 = vld [vmem:[%s338 + $0x38] sm:$0x3]
      %v378 = vld [vmem:[%s338 + $0x40] sm:$0xff]
      %v379 = vld [vmem:[%s338 + $0x48] sm:$0x3]
      %v380 = vld [vmem:[%s338 + $0x50] sm:$0xff]
      %v381 = vld [vmem:[%s338 + $0x58] sm:$0x3]
      %v382 = vld [vmem:[%s338 + $0x60] sm:$0xff]
      %v383 = vld [vmem:[%s338 + $0x68] sm:$0x3]
      %v384 = vld [vmem:[%s338 + $0x70] sm:$0xff]
      %v385 = vld [vmem:[%s338 + $0x78] sm:$0x3]
      %v386 = vld [vmem:[%s338 + $0x80] sm:$0xff]
      %v387 = vld [vmem:[%s338 + $0x88] sm:$0x3]
      %v388 = vld [vmem:[%s338 + $0x90] sm:$0xff]
      %v389 = vld [vmem:[%s338 + $0x98] sm:$0x3]
      %vm390 = vcmask 261120
      %391 = vst.msk [vmem:[#allocation2] sm:$0xff] %vm390, %v370
      %392 = vst.msk [vmem:[#allocation2 + $0x8] sm:$0xff] %vm390, %v372
      %393 = vst.msk [vmem:[#allocation2 + $0x10] sm:$0xff] %vm390, %v374
      %394 = vst.msk [vmem:[#allocation2 + $0x18] sm:$0xff] %vm390, %v376
      %395 = vst.msk [vmem:[#allocation2 + $0x20] sm:$0xff] %vm390, %v378
      %396 = vst.msk [vmem:[#allocation2 + $0x28] sm:$0xff] %vm390, %v380
      %397 = vst.msk [vmem:[#allocation2 + $0x30] sm:$0xff] %vm390, %v382
      %398 = vst.msk [vmem:[#allocation2 + $0x38] sm:$0xff] %vm390, %v384
      %399 = vst.msk [vmem:[#allocation2 + $0x40] sm:$0xff] %vm390, %v386
      %400 = vst.msk [vmem:[#allocation2 + $0x48] sm:$0xff] %vm390, %v388
      %421 = vrot.lane.b32.xlu0 %v370, 32
      %v422 = vpop.permute.xlu0 %421
      %423 = vrot.lane.b32.xlu0 %v371, 32
      %v424 = vpop.permute.xlu0 %423
      %425 = vrot.lane.b32.xlu0 %v372, 32
      %v426 = vpop.permute.xlu0 %425
      %427 = vrot.lane.b32.xlu0 %v373, 32
      %v428 = vpop.permute.xlu0 %427
      %429 = vrot.lane.b32.xlu0 %v374, 32
      %v430 = vpop.permute.xlu0 %429
      %431 = vrot.lane.b32.xlu0 %v375, 32
      %v432 = vpop.permute.xlu0 %431
      %433 = vrot.lane.b32.xlu0 %v376, 32
      %v434 = vpop.permute.xlu0 %433
      %435 = vrot.lane.b32.xlu0 %v377, 32
      %v436 = vpop.permute.xlu0 %435
      %437 = vrot.lane.b32.xlu0 %v378, 32
      %v438 = vpop.permute.xlu0 %437
      %439 = vrot.lane.b32.xlu0 %v379, 32
      %v440 = vpop.permute.xlu0 %439
      %441 = vrot.lane.b32.xlu0 %v380, 32
      %v442 = vpop.permute.xlu0 %441
      %443 = vrot.lane.b32.xlu0 %v381, 32
      %v444 = vpop.permute.xlu0 %443
      %445 = vrot.lane.b32.xlu0 %v382, 32
      %v446 = vpop.permute.xlu0 %445
      %447 = vrot.lane.b32.xlu0 %v383, 32
      %v448 = vpop.permute.xlu0 %447
      %449 = vrot.lane.b32.xlu0 %v384, 32
      %v450 = vpop.permute.xlu0 %449
      %451 = vrot.lane.b32.xlu0 %v385, 32
      %v452 = vpop.permute.xlu0 %451
      %453 = vrot.lane.b32.xlu0 %v386, 32
      %v454 = vpop.permute.xlu0 %453
      %455 = vrot.lane.b32.xlu0 %v387, 32
      %v456 = vpop.permute.xlu0 %455
      %457 = vrot.lane.b32.xlu0 %v388, 32
      %v458 = vpop.permute.xlu0 %457
      %459 = vrot.lane.b32.xlu0 %v389, 32
      %v460 = vpop.permute.xlu0 %459
      %vm481 = vcmask 523521
      %482 = vst.msk [vmem:[#allocation2 - $0x1] sm:$0xfe] %vm481, %v422
      %vm483 = vcmask 516352
      %484 = vst.msk [vmem:[#allocation2 + $0x7] sm:$0x1] %vm483, %v424
      %485 = vst.msk [vmem:[#allocation2 + $0x7] sm:$0xfe] %vm481, %v426
      %486 = vst.msk [vmem:[#allocation2 + $0xf] sm:$0x1] %vm483, %v428
      %487 = vst.msk [vmem:[#allocation2 + $0xf] sm:$0xfe] %vm481, %v430
      %488 = vst.msk [vmem:[#allocation2 + $0x17] sm:$0x1] %vm483, %v432
      %489 = vst.msk [vmem:[#allocation2 + $0x17] sm:$0xfe] %vm481, %v434
      %490 = vst.msk [vmem:[#allocation2 + $0x1f] sm:$0x1] %vm483, %v436
      %491 = vst.msk [vmem:[#allocation2 + $0x1f] sm:$0xfe] %vm481, %v438
      %492 = vst.msk [vmem:[#allocation2 + $0x27] sm:$0x1] %vm483, %v440
      %493 = vst.msk [vmem:[#allocation2 + $0x27] sm:$0xfe] %vm481, %v442
      %494 = vst.msk [vmem:[#allocation2 + $0x2f] sm:$0x1] %vm483, %v444
      %495 = vst.msk [vmem:[#allocation2 + $0x2f] sm:$0xfe] %vm481, %v446
      %496 = vst.msk [vmem:[#allocation2 + $0x37] sm:$0x1] %vm483, %v448
      %497 = vst.msk [vmem:[#allocation2 + $0x37] sm:$0xfe] %vm481, %v450
      %498 = vst.msk [vmem:[#allocation2 + $0x3f] sm:$0x1] %vm483, %v452
      %499 = vst.msk [vmem:[#allocation2 + $0x3f] sm:$0xfe] %vm481, %v454
      %500 = vst.msk [vmem:[#allocation2 + $0x47] sm:$0x1] %vm483, %v456
      %501 = vst.msk [vmem:[#allocation2 + $0x47] sm:$0xfe] %vm481, %v458
      %502 = vst.msk [vmem:[#allocation2 + $0x4f] sm:$0x1] %vm483, %v460
      %503 = vrot.lane.b32.xlu0 %v370, 64
      %v504 = vpop.permute.xlu0 %503
      %505 = vrot.lane.b32.xlu0 %v371, 64
      %v506 = vpop.permute.xlu0 %505
      %507 = vrot.lane.b32.xlu0 %v372, 64
      %v508 = vpop.permute.xlu0 %507
      %509 = vrot.lane.b32.xlu0 %v373, 64
      %v510 = vpop.permute.xlu0 %509
      %511 = vrot.lane.b32.xlu0 %v374, 64
      %v512 = vpop.permute.xlu0 %511
      %513 = vrot.lane.b32.xlu0 %v375, 64
      %v514 = vpop.permute.xlu0 %513
      %515 = vrot.lane.b32.xlu0 %v376, 64
      %v516 = vpop.permute.xlu0 %515
      %517 = vrot.lane.b32.xlu0 %v377, 64
      %v518 = vpop.permute.xlu0 %517
      %519 = vrot.lane.b32.xlu0 %v378, 64
      %v520 = vpop.permute.xlu0 %519
      %521 = vrot.lane.b32.xlu0 %v379, 64
      %v522 = vpop.permute.xlu0 %521
      %523 = vrot.lane.b32.xlu0 %v380, 64
      %v524 = vpop.permute.xlu0 %523
      %525 = vrot.lane.b32.xlu0 %v381, 64
      %v526 = vpop.permute.xlu0 %525
      %527 = vrot.lane.b32.xlu0 %v382, 64
      %v528 = vpop.permute.xlu0 %527
      %529 = vrot.lane.b32.xlu0 %v383, 64
      %v530 = vpop.permute.xlu0 %529
      %531 = vrot.lane.b32.xlu0 %v384, 64
      %v532 = vpop.permute.xlu0 %531
      %533 = vrot.lane.b32.xlu0 %v385, 64
      %v534 = vpop.permute.xlu0 %533
      %535 = vrot.lane.b32.xlu0 %v386, 64
      %v536 = vpop.permute.xlu0 %535
      %537 = vrot.lane.b32.xlu0 %v387, 64
      %v538 = vpop.permute.xlu0 %537
      %539 = vrot.lane.b32.xlu0 %v388, 64
      %v540 = vpop.permute.xlu0 %539
      %541 = vrot.lane.b32.xlu0 %v389, 64
      %v542 = vpop.permute.xlu0 %541
      %vm563 = vcmask 785922
      %564 = vst.msk [vmem:[#allocation2 - $0x2] sm:$0xfc] %vm563, %v504
      %vm565 = vcmask 779776
      %566 = vst.msk [vmem:[#allocation2 + $0x6] sm:$0x3] %vm565, %v506
      %567 = vst.msk [vmem:[#allocation2 + $0x6] sm:$0xfc] %vm563, %v508
      %568 = vst.msk [vmem:[#allocation2 + $0xe] sm:$0x3] %vm565, %v510
      %569 = vst.msk [vmem:[#allocation2 + $0xe] sm:$0xfc] %vm563, %v512
      %570 = vst.msk [vmem:[#allocation2 + $0x16] sm:$0x3] %vm565, %v514
      %571 = vst.msk [vmem:[#allocation2 + $0x16] sm:$0xfc] %vm563, %v516
      %572 = vst.msk [vmem:[#allocation2 + $0x1e] sm:$0x3] %vm565, %v518
      %573 = vst.msk [vmem:[#allocation2 + $0x1e] sm:$0xfc] %vm563, %v520
      %574 = vst.msk [vmem:[#allocation2 + $0x26] sm:$0x3] %vm565, %v522
      %575 = vst.msk [vmem:[#allocation2 + $0x26] sm:$0xfc] %vm563, %v524
      %576 = vst.msk [vmem:[#allocation2 + $0x2e] sm:$0x3] %vm565, %v526
      %577 = vst.msk [vmem:[#allocation2 + $0x2e] sm:$0xfc] %vm563, %v528
      %578 = vst.msk [vmem:[#allocation2 + $0x36] sm:$0x3] %vm565, %v530
      %579 = vst.msk [vmem:[#allocation2 + $0x36] sm:$0xfc] %vm563, %v532
      %580 = vst.msk [vmem:[#allocation2 + $0x3e] sm:$0x3] %vm565, %v534
      %581 = vst.msk [vmem:[#allocation2 + $0x3e] sm:$0xfc] %vm563, %v536
      %582 = vst.msk [vmem:[#allocation2 + $0x46] sm:$0x3] %vm565, %v538
      %583 = vst.msk [vmem:[#allocation2 + $0x46] sm:$0xfc] %vm563, %v540
      %584 = vst.msk [vmem:[#allocation2 + $0x4e] sm:$0x3] %vm565, %v542
      %v585 = vld [vmem:[#allocation2] sm:$0xff]
      %v586 = vld [vmem:[#allocation2 + $0x8] sm:$0xff]
      %v587 = vld [vmem:[#allocation2 + $0x10] sm:$0xff]
      %v588 = vld [vmem:[#allocation2 + $0x18] sm:$0xff]
      %v589 = vld [vmem:[#allocation2 + $0x20] sm:$0xff]
      %v590 = vld [vmem:[#allocation2 + $0x28] sm:$0xff]
      %v591 = vld [vmem:[#allocation2 + $0x30] sm:$0xff]
      %v592 = vld [vmem:[#allocation2 + $0x38] sm:$0xff]
      %v593 = vld [vmem:[%s3] sm:$0xff]
      %v594 = vld [vmem:[%s3 + $0x8] sm:$0xff]
      %v595 = vld [vmem:[%s3 + $0x10] sm:$0xff]
      %v596 = vld [vmem:[%s3 + $0x18] sm:$0xff]
      %v597 = vld [vmem:[%s3 + $0x20] sm:$0xff]
      %v598 = vld [vmem:[%s3 + $0x28] sm:$0xff]
      %v599 = vld [vmem:[%s3 + $0x30] sm:$0xff]
      %v600 = vld [vmem:[%s3 + $0x38] sm:$0xff]
      %v601 = vld [vmem:[%s3 + $0x40] sm:$0xff]
      %v602 = vld [vmem:[%s3 + $0x48] sm:$0xff]
      %v603 = vld [vmem:[%s3 + $0x50] sm:$0xff]
      %v604 = vld [vmem:[%s3 + $0x58] sm:$0xff]
      %s605 = scalar_lea.vmem [#allocation2], 8
      %v606 = vld [vmem:[%s605] sm:$0xff]
      %v607 = vld [vmem:[%s605 + $0x8] sm:$0xff]
      %v608 = vld [vmem:[%s605 + $0x10] sm:$0xff]
      %v609 = vld [vmem:[%s605 + $0x18] sm:$0xff]
      %v610 = vld [vmem:[%s605 + $0x20] sm:$0xff]
      %v611 = vld [vmem:[%s605 + $0x28] sm:$0xff]
      %v612 = vld [vmem:[%s605 + $0x30] sm:$0xff]
      %v613 = vld [vmem:[%s605 + $0x38] sm:$0xff]
      %s614 = scalar_lea.vmem %s3, 96
      %v615 = vld [vmem:[%s614] sm:$0xff]
      %v616 = vld [vmem:[%s614 + $0x8] sm:$0xff]
      %v617 = vld [vmem:[%s614 + $0x10] sm:$0xff]
      %v618 = vld [vmem:[%s614 + $0x18] sm:$0xff]
      %v619 = vld [vmem:[%s614 + $0x20] sm:$0xff]
      %v620 = vld [vmem:[%s614 + $0x28] sm:$0xff]
      %v621 = vld [vmem:[%s614 + $0x30] sm:$0xff]
      %v622 = vld [vmem:[%s614 + $0x38] sm:$0xff]
      %v623 = vld [vmem:[%s614 + $0x40] sm:$0xff]
      %v624 = vld [vmem:[%s614 + $0x48] sm:$0xff]
      %v625 = vld [vmem:[%s614 + $0x50] sm:$0xff]
      %v626 = vld [vmem:[%s614 + $0x58] sm:$0xff]
      %vm627 = vcmask 785408
      %v629 = vsel %vm627, %v606, 0
      %v632 = vsel %vm627, %v607, 0
      %v635 = vsel %vm627, %v608, 0
      %v638 = vsel %vm627, %v609, 0
      %v641 = vsel %vm627, %v610, 0
      %v644 = vsel %vm627, %v611, 0
      %v647 = vsel %vm627, %v612, 0
      %v650 = vsel %vm627, %v613, 0
      %652 = vmatprep.subr.mxu0 0.0
      %653 = vmatpush1.msra.mxu0 %v615
      %654 = vmatprep.subr.mxu0 0.0
      %655 = vmatpush1.msra.mxu0 %v616
      %656 = vmatprep.subr.mxu0 0.0
      %657 = vmatpush1.msra.mxu0 %v617
      %658 = vmatprep.subr.mxu0 0.0
      %659 = vmatpush1.msra.mxu0 %v618
      %660 = vmatprep.subr.mxu0 0.0
      %661 = vmatpush1.msra.mxu0 %v619
      %662 = vmatprep.subr.mxu0 0.0
      %663 = vmatpush1.msra.mxu0 %v620
      %664 = vmatprep.subr.mxu0 0.0
      %665 = vmatpush1.msra.mxu0 %v621
      %666 = vmatprep.subr.mxu0 0.0
      %667 = vmatpush1.msra.mxu0 %v622
      %668 = vmatprep.subr.mxu0 0.0
      %669 = vmatpush1.msra.mxu0 %v623
      %670 = vmatprep.subr.mxu0 0.0
      %671 = vmatpush1.msra.mxu0 %v624
      %672 = vmatprep.subr.mxu0 0.0
      %673 = vmatpush1.msra.mxu0 %v625
      %674 = vmatprep.subr.mxu0 0.0
      %675 = vmatpush1.msra.mxu0 %v626
      %676 = vmatprep.subr.mxu0 0.0
      %677 = vmatpush1.msra.mxu0 0.0
      %678 = vmatprep.subr.mxu0 0.0
      %679 = vmatpush1.msra.mxu0 0.0
      %680 = vmatprep.subr.mxu0 0.0
      %681 = vmatpush1.msra.mxu0 0.0
      %682 = vmatprep.subr.mxu0 0.0
      %683 = vmatpush1.msra.mxu0 0.0
      %684 = vmatprep.subr.mxu0 0.0
      %685 = vmatpush1.msra.mxu0 0.0
      %686 = vmatprep.subr.mxu0 0.0
      %687 = vmatpush1.msra.mxu0 0.0
      %688 = vmatprep.subr.mxu0 0.0
      %689 = vmatpush1.msra.mxu0 0.0
      %690 = vmatprep.subr.mxu0 0.0
      %691 = vmatpush1.msra.mxu0 0.0
      %692 = vmatprep.subr.mxu0 0.0
      %693 = vmatpush1.msra.mxu0 0.0
      %694 = vmatprep.subr.mxu0 0.0
      %695 = vmatpush1.msra.mxu0 0.0
      %696 = vmatprep.subr.mxu0 0.0
      %697 = vmatpush1.msra.mxu0 0.0
      %698 = vmatprep.subr.mxu0 0.0
      %699 = vmatpush1.msra.mxu0 0.0
      %700 = vmatprep.subr.mxu0 0.0
      %701 = vmatpush1.msra.mxu0 0.0
      %702 = vmatprep.subr.mxu0 0.0
      %703 = vmatpush1.msra.mxu0 0.0
      %704 = vmatprep.subr.mxu0 0.0
      %705 = vmatpush1.msra.mxu0 0.0
      %706 = vmatprep.subr.mxu0 0.0
      %707 = vmatpush1.msra.mxu0 0.0
      %708 = vmatprep.subr.mxu0 0.0
      %709 = vmatpush1.msra.mxu0 0.0
      %710 = vmatprep.subr.mxu0 0.0
      %711 = vmatpush1.msra.mxu0 0.0
      %712 = vmatprep.subr.mxu0 0.0
      %713 = vmatpush1.msra.mxu0 0.0
      %714 = vmatprep.subr.mxu0 0.0
      %715 = vmatpush1.msra.mxu0 0.0
      %716 = vmatprep.mubr.f32.mxu0 0.0
      %717 = vmatmul.mubr.f32.gmra.mrb[0].mxu0 %v629
      %v718 = vpop.f32.mrb[0].mxu0
      %v719 = vadd.f32 0.0, %v718
      %v720 = vpop.f32.mrb[0].mxu0
      %721 = vmatprep.mubr.f32.mxu0 0.0
      %722 = vmatmul.mubr.f32.gmra.mrb[0].mxu0 %v632
      %v723 = vpop.f32.mrb[0].mxu0
      %v724 = vadd.f32 0.0, %v723
      %v725 = vpop.f32.mrb[0].mxu0
      %726 = vmatprep.mubr.f32.mxu0 0.0
      %727 = vmatmul.mubr.f32.gmra.mrb[0].mxu0 %v635
      %v728 = vpop.f32.mrb[0].mxu0
      %v729 = vadd.f32 0.0, %v728
      %v730 = vpop.f32.mrb[0].mxu0
      %731 = vmatprep.mubr.f32.mxu0 0.0
      %732 = vmatmul.mubr.f32.gmra.mrb[0].mxu0 %v638
      %v733 = vpop.f32.mrb[0].mxu0
      %v734 = vadd.f32 0.0, %v733
      %v735 = vpop.f32.mrb[0].mxu0
      %736 = vmatprep.mubr.f32.mxu0 0.0
      %737 = vmatmul.mubr.f32.gmra.mrb[0].mxu0 %v641
      %v738 = vpop.f32.mrb[0].mxu0
      %v739 = vadd.f32 0.0, %v738
      %v740 = vpop.f32.mrb[0].mxu0
      %741 = vmatprep.mubr.f32.mxu0 0.0
      %742 = vmatmul.mubr.f32.gmra.mrb[0].mxu0 %v644
      %v743 = vpop.f32.mrb[0].mxu0
      %v744 = vadd.f32 0.0, %v743
      %v745 = vpop.f32.mrb[0].mxu0
      %746 = vmatprep.mubr.f32.mxu0 0.0
      %747 = vmatmul.mubr.f32.gmra.mrb[0].mxu0 %v647
      %v748 = vpop.f32.mrb[0].mxu0
      %v749 = vadd.f32 0.0, %v748
      %v750 = vpop.f32.mrb[0].mxu0
      %751 = vmatprep.mubr.f32.mxu0 0.0
      %752 = vmatmul.mubr.f32.gmra.mrb[0].mxu0 %v650
      %v753 = vpop.f32.mrb[0].mxu0
      %v754 = vadd.f32 0.0, %v753
      %v755 = vpop.f32.mrb[0].mxu0
      %756 = vdwg.mxu0
      %v758 = vsel %vm627, %v585, 0
      %v761 = vsel %vm627, %v586, 0
      %v764 = vsel %vm627, %v587, 0
      %v767 = vsel %vm627, %v588, 0
      %v770 = vsel %vm627, %v589, 0
      %v773 = vsel %vm627, %v590, 0
      %v776 = vsel %vm627, %v591, 0
      %v779 = vsel %vm627, %v592, 0
      %781 = vmatprep.subr.mxu0 0.0
      %782 = vmatpush1.msra.mxu0 %v593
      %783 = vmatprep.subr.mxu0 0.0
      %784 = vmatpush1.msra.mxu0 %v594
      %785 = vmatprep.subr.mxu0 0.0
      %786 = vmatpush1.msra.mxu0 %v595
      %787 = vmatprep.subr.mxu0 0.0
      %788 = vmatpush1.msra.mxu0 %v596
      %789 = vmatprep.subr.mxu0 0.0
      %790 = vmatpush1.msra.mxu0 %v597
      %791 = vmatprep.subr.mxu0 0.0
      %792 = vmatpush1.msra.mxu0 %v598
      %793 = vmatprep.subr.mxu0 0.0
      %794 = vmatpush1.msra.mxu0 %v599
      %795 = vmatprep.subr.mxu0 0.0
      %796 = vmatpush1.msra.mxu0 %v600
      %797 = vmatprep.subr.mxu0 0.0
      %798 = vmatpush1.msra.mxu0 %v601
      %799 = vmatprep.subr.mxu0 0.0
      %800 = vmatpush1.msra.mxu0 %v602
      %801 = vmatprep.subr.mxu0 0.0
      %802 = vmatpush1.msra.mxu0 %v603
      %803 = vmatprep.subr.mxu0 0.0
      %804 = vmatpush1.msra.mxu0 %v604
      %805 = vmatprep.subr.mxu0 0.0
      %806 = vmatpush1.msra.mxu0 0.0
      %807 = vmatprep.subr.mxu0 0.0
      %808 = vmatpush1.msra.mxu0 0.0
      %809 = vmatprep.subr.mxu0 0.0
      %810 = vmatpush1.msra.mxu0 0.0
      %811 = vmatprep.subr.mxu0 0.0
      %812 = vmatpush1.msra.mxu0 0.0
      %813 = vmatprep.subr.mxu0 0.0
      %814 = vmatpush1.msra.mxu0 0.0
      %815 = vmatprep.subr.mxu0 0.0
      %816 = vmatpush1.msra.mxu0 0.0
      %817 = vmatprep.subr.mxu0 0.0
      %818 = vmatpush1.msra.mxu0 0.0
      %819 = vmatprep.subr.mxu0 0.0
      %820 = vmatpush1.msra.mxu0 0.0
      %821 = vmatprep.subr.mxu0 0.0
      %822 = vmatpush1.msra.mxu0 0.0
      %823 = vmatprep.subr.mxu0 0.0
      %824 = vmatpush1.msra.mxu0 0.0
      %825 = vmatprep.subr.mxu0 0.0
      %826 = vmatpush1.msra.mxu0 0.0
      %827 = vmatprep.subr.mxu0 0.0
      %828 = vmatpush1.msra.mxu0 0.0
      %829 = vmatprep.subr.mxu0 0.0
      %830 = vmatpush1.msra.mxu0 0.0
      %831 = vmatprep.subr.mxu0 0.0
      %832 = vmatpush1.msra.mxu0 0.0
      %833 = vmatprep.subr.mxu0 0.0
      %834 = vmatpush1.msra.mxu0 0.0
      %835 = vmatprep.subr.mxu0 0.0
      %836 = vmatpush1.msra.mxu0 0.0
      %837 = vmatprep.subr.mxu0 0.0
      %838 = vmatpush1.msra.mxu0 0.0
      %839 = vmatprep.subr.mxu0 0.0
      %840 = vmatpush1.msra.mxu0 0.0
      %841 = vmatprep.subr.mxu0 0.0
      %842 = vmatpush1.msra.mxu0 0.0
      %843 = vmatprep.subr.mxu0 0.0
      %844 = vmatpush1.msra.mxu0 0.0
      %845 = vmatprep.mubr.f32.mxu0 0.0
      %846 = vmatmul.mubr.f32.gmra.mrb[0].mxu0 %v758
      %v847 = vpop.f32.mrb[0].mxu0
      %v848 = vadd.f32 %v719, %v847
      %v849 = vpop.f32.mrb[0].mxu0
      %850 = vmatprep.mubr.f32.mxu0 0.0
      %851 = vmatmul.mubr.f32.gmra.mrb[0].mxu0 %v761
      %v852 = vpop.f32.mrb[0].mxu0
      %v853 = vadd.f32 %v724, %v852
      %v854 = vpop.f32.mrb[0].mxu0
      %855 = vmatprep.mubr.f32.mxu0 0.0
      %856 = vmatmul.mubr.f32.gmra.mrb[0].mxu0 %v764
      %v857 = vpop.f32.mrb[0].mxu0
      %v858 = vadd.f32 %v729, %v857
      %v859 = vpop.f32.mrb[0].mxu0
      %860 = vmatprep.mubr.f32.mxu0 0.0
      %861 = vmatmul.mubr.f32.gmra.mrb[0].mxu0 %v767
      %v862 = vpop.f32.mrb[0].mxu0
      %v863 = vadd.f32 %v734, %v862
      %v864 = vpop.f32.mrb[0].mxu0
      %865 = vmatprep.mubr.f32.mxu0 0.0
      %866 = vmatmul.mubr.f32.gmra.mrb[0].mxu0 %v770
      %v867 = vpop.f32.mrb[0].mxu0
      %v868 = vadd.f32 %v739, %v867
      %v869 = vpop.f32.mrb[0].mxu0
      %870 = vmatprep.mubr.f32.mxu0 0.0
      %871 = vmatmul.mubr.f32.gmra.mrb[0].mxu0 %v773
      %v872 = vpop.f32.mrb[0].mxu0
      %v873 = vadd.f32 %v744, %v872
      %v874 = vpop.f32.mrb[0].mxu0
      %875 = vmatprep.mubr.f32.mxu0 0.0
      %876 = vmatmul.mubr.f32.gmra.mrb[0].mxu0 %v776
      %v877 = vpop.f32.mrb[0].mxu0
      %v878 = vadd.f32 %v749, %v877
      %v879 = vpop.f32.mrb[0].mxu0
      %880 = vmatprep.mubr.f32.mxu0 0.0
      %881 = vmatmul.mubr.f32.gmra.mrb[0].mxu0 %v779
      %v882 = vpop.f32.mrb[0].mxu0
      %v883 = vadd.f32 %v754, %v882
      %v884 = vpop.f32.mrb[0].mxu0
      %885 = vdwg.mxu0
      %s886 = scalar_lea.vmem [#allocation2], 16
      %v887 = vld [vmem:[%s886] sm:$0xff]
      %v888 = vld [vmem:[%s886 + $0x8] sm:$0xff]
      %v889 = vld [vmem:[%s886 + $0x10] sm:$0xff]
      %v890 = vld [vmem:[%s886 + $0x18] sm:$0xff]
      %v891 = vld [vmem:[%s886 + $0x20] sm:$0xff]
      %v892 = vld [vmem:[%s886 + $0x28] sm:$0xff]
      %v893 = vld [vmem:[%s886 + $0x30] sm:$0xff]
      %v894 = vld [vmem:[%s886 + $0x38] sm:$0xff]
      %s895 = scalar_lea.vmem %s3, 192
      %v896 = vld [vmem:[%s895] sm:$0xff]
      %v897 = vld [vmem:[%s895 + $0x8] sm:$0xff]
      %v898 = vld [vmem:[%s895 + $0x10] sm:$0xff]
      %v899 = vld [vmem:[%s895 + $0x18] sm:$0xff]
      %v900 = vld [vmem:[%s895 + $0x20] sm:$0xff]
      %v901 = vld [vmem:[%s895 + $0x28] sm:$0xff]
      %v902 = vld [vmem:[%s895 + $0x30] sm:$0xff]
      %v903 = vld [vmem:[%s895 + $0x38] sm:$0xff]
      %v904 = vld [vmem:[%s895 + $0x40] sm:$0xff]
      %v905 = vld [vmem:[%s895 + $0x48] sm:$0xff]
      %v906 = vld [vmem:[%s895 + $0x50] sm:$0xff]
      %v907 = vld [vmem:[%s895 + $0x58] sm:$0xff]
      %v909 = vsel %vm627, %v887, 0
      %v912 = vsel %vm627, %v888, 0
      %v915 = vsel %vm627, %v889, 0
      %v918 = vsel %vm627, %v890, 0
      %v921 = vsel %vm627, %v891, 0
      %v924 = vsel %vm627, %v892, 0
      %v927 = vsel %vm627, %v893, 0
      %v930 = vsel %vm627, %v894, 0
      %932 = vmatprep.subr.mxu0 0.0
      %933 = vmatpush1.msra.mxu0 %v896
      %934 = vmatprep.subr.mxu0 0.0
      %935 = vmatpush1.msra.mxu0 %v897
      %936 = vmatprep.subr.mxu0 0.0
      %937 = vmatpush1.msra.mxu0 %v898
      %938 = vmatprep.subr.mxu0 0.0
      %939 = vmatpush1.msra.mxu0 %v899
      %940 = vmatprep.subr.mxu0 0.0
      %941 = vmatpush1.msra.mxu0 %v900
      %942 = vmatprep.subr.mxu0 0.0
      %943 = vmatpush1.msra.mxu0 %v901
      %944 = vmatprep.subr.mxu0 0.0
      %945 = vmatpush1.msra.mxu0 %v902
      %946 = vmatprep.subr.mxu0 0.0
      %947 = vmatpush1.msra.mxu0 %v903
      %948 = vmatprep.subr.mxu0 0.0
      %949 = vmatpush1.msra.mxu0 %v904
      %950 = vmatprep.subr.mxu0 0.0
      %951 = vmatpush1.msra.mxu0 %v905
      %952 = vmatprep.subr.mxu0 0.0
      %953 = vmatpush1.msra.mxu0 %v906
      %954 = vmatprep.subr.mxu0 0.0
      %955 = vmatpush1.msra.mxu0 %v907
      %956 = vmatprep.subr.mxu0 0.0
      %957 = vmatpush1.msra.mxu0 0.0
      %958 = vmatprep.subr.mxu0 0.0
      %959 = vmatpush1.msra.mxu0 0.0
      %960 = vmatprep.subr.mxu0 0.0
      %961 = vmatpush1.msra.mxu0 0.0
      %962 = vmatprep.subr.mxu0 0.0
      %963 = vmatpush1.msra.mxu0 0.0
      %964 = vmatprep.subr.mxu0 0.0
      %965 = vmatpush1.msra.mxu0 0.0
      %966 = vmatprep.subr.mxu0 0.0
      %967 = vmatpush1.msra.mxu0 0.0
      %968 = vmatprep.subr.mxu0 0.0
      %969 = vmatpush1.msra.mxu0 0.0
      %970 = vmatprep.subr.mxu0 0.0
      %971 = vmatpush1.msra.mxu0 0.0
      %972 = vmatprep.subr.mxu0 0.0
      %973 = vmatpush1.msra.mxu0 0.0
      %974 = vmatprep.subr.mxu0 0.0
      %975 = vmatpush1.msra.mxu0 0.0
      %976 = vmatprep.subr.mxu0 0.0
      %977 = vmatpush1.msra.mxu0 0.0
      %978 = vmatprep.subr.mxu0 0.0
      %979 = vmatpush1.msra.mxu0 0.0
      %980 = vmatprep.subr.mxu0 0.0
      %981 = vmatpush1.msra.mxu0 0.0
      %982 = vmatprep.subr.mxu0 0.0
      %983 = vmatpush1.msra.mxu0 0.0
      %984 = vmatprep.subr.mxu0 0.0
      %985 = vmatpush1.msra.mxu0 0.0
      %986 = vmatprep.subr.mxu0 0.0
      %987 = vmatpush1.msra.mxu0 0.0
      %988 = vmatprep.subr.mxu0 0.0
      %989 = vmatpush1.msra.mxu0 0.0
      %990 = vmatprep.subr.mxu0 0.0
      %991 = vmatpush1.msra.mxu0 0.0
      %992 = vmatprep.subr.mxu0 0.0
      %993 = vmatpush1.msra.mxu0 0.0
      %994 = vmatprep.subr.mxu0 0.0
      %995 = vmatpush1.msra.mxu0 0.0
      %996 = vmatprep.mubr.f32.mxu0 0.0
      %997 = vmatmul.mubr.f32.gmra.mrb[0].mxu0 %v909
      %v998 = vpop.f32.mrb[0].mxu0
      %v999 = vadd.f32 0.0, %v998
      %v1000 = vpop.f32.mrb[0].mxu0
      %1001 = vmatprep.mubr.f32.mxu0 0.0
      %1002 = vmatmul.mubr.f32.gmra.mrb[0].mxu0 %v912
      %v1003 = vpop.f32.mrb[0].mxu0
      %v1004 = vadd.f32 0.0, %v1003
      %v1005 = vpop.f32.mrb[0].mxu0
      %1006 = vmatprep.mubr.f32.mxu0 0.0
      %1007 = vmatmul.mubr.f32.gmra.mrb[0].mxu0 %v915
      %v1008 = vpop.f32.mrb[0].mxu0
      %v1009 = vadd.f32 0.0, %v1008
      %v1010 = vpop.f32.mrb[0].mxu0
      %1011 = vmatprep.mubr.f32.mxu0 0.0
      %1012 = vmatmul.mubr.f32.gmra.mrb[0].mxu0 %v918
      %v1013 = vpop.f32.mrb[0].mxu0
      %v1014 = vadd.f32 0.0, %v1013
      %v1015 = vpop.f32.mrb[0].mxu0
      %1016 = vmatprep.mubr.f32.mxu0 0.0
      %1017 = vmatmul.mubr.f32.gmra.mrb[0].mxu0 %v921
      %v1018 = vpop.f32.mrb[0].mxu0
      %v1019 = vadd.f32 0.0, %v1018
      %v1020 = vpop.f32.mrb[0].mxu0
      %1021 = vmatprep.mubr.f32.mxu0 0.0
      %1022 = vmatmul.mubr.f32.gmra.mrb[0].mxu0 %v924
      %v1023 = vpop.f32.mrb[0].mxu0
      %v1024 = vadd.f32 0.0, %v1023
      %v1025 = vpop.f32.mrb[0].mxu0
      %1026 = vmatprep.mubr.f32.mxu0 0.0
      %1027 = vmatmul.mubr.f32.gmra.mrb[0].mxu0 %v927
      %v1028 = vpop.f32.mrb[0].mxu0
      %v1029 = vadd.f32 0.0, %v1028
      %v1030 = vpop.f32.mrb[0].mxu0
      %1031 = vmatprep.mubr.f32.mxu0 0.0
      %1032 = vmatmul.mubr.f32.gmra.mrb[0].mxu0 %v930
      %v1033 = vpop.f32.mrb[0].mxu0
      %v1034 = vadd.f32 0.0, %v1033
      %v1035 = vpop.f32.mrb[0].mxu0
      %1036 = vdwg.mxu0
      %v1037 = vadd.f32 %v848, %v999
      %v1038 = vadd.f32 %v853, %v1004
      %v1039 = vadd.f32 %v858, %v1009
      %v1040 = vadd.f32 %v863, %v1014
      %v1041 = vadd.f32 %v868, %v1019
      %v1042 = vadd.f32 %v873, %v1024
      %v1043 = vadd.f32 %v878, %v1029
      %v1044 = vadd.f32 %v883, %v1034
      %v1045 = vld [vmem:[%s348] sm:$0xff]
      %v1046 = vld [vmem:[%s348 + $0x8] sm:$0x3]
      %v1047 = vld [vmem:[%s348 + $0x10] sm:$0xff]
      %v1048 = vld [vmem:[%s348 + $0x18] sm:$0x3]
      %v1049 = vld [vmem:[%s348 + $0x20] sm:$0xff]
      %v1050 = vld [vmem:[%s348 + $0x28] sm:$0x3]
      %v1051 = vld [vmem:[%s348 + $0x30] sm:$0xff]
      %v1052 = vld [vmem:[%s348 + $0x38] sm:$0x3]
      %v1053 = vld [vmem:[%s348 + $0x40] sm:$0xff]
      %v1054 = vld [vmem:[%s348 + $0x48] sm:$0x3]
      %v1055 = vld [vmem:[%s348 + $0x50] sm:$0xff]
      %v1056 = vld [vmem:[%s348 + $0x58] sm:$0x3]
      %v1057 = vld [vmem:[%s348 + $0x60] sm:$0xff]
      %v1058 = vld [vmem:[%s348 + $0x68] sm:$0x3]
      %v1059 = vld [vmem:[%s348 + $0x70] sm:$0xff]
      %v1060 = vld [vmem:[%s348 + $0x78] sm:$0x3]
      %v1061 = vld [vmem:[%s348 + $0x80] sm:$0xff]
      %v1062 = vld [vmem:[%s348 + $0x88] sm:$0x3]
      %v1063 = vld [vmem:[%s348 + $0x90] sm:$0xff]
      %v1064 = vld [vmem:[%s348 + $0x98] sm:$0x3]
      %s1065 = scalar_lea.vmem [#allocation2], 80
      %1066 = vst.msk [vmem:[%s1065] sm:$0xff] %vm390, %v1045
      %1067 = vst.msk [vmem:[%s1065 + $0x8] sm:$0xff] %vm390, %v1047
      %1068 = vst.msk [vmem:[%s1065 + $0x10] sm:$0xff] %vm390, %v1049
      %1069 = vst.msk [vmem:[%s1065 + $0x18] sm:$0xff] %vm390, %v1051
      %1070 = vst.msk [vmem:[%s1065 + $0x20] sm:$0xff] %vm390, %v1053
      %1071 = vst.msk [vmem:[%s1065 + $0x28] sm:$0xff] %vm390, %v1055
      %1072 = vst.msk [vmem:[%s1065 + $0x30] sm:$0xff] %vm390, %v1057
      %1073 = vst.msk [vmem:[%s1065 + $0x38] sm:$0xff] %vm390, %v1059
      %1074 = vst.msk [vmem:[%s1065 + $0x40] sm:$0xff] %vm390, %v1061
      %1075 = vst.msk [vmem:[%s1065 + $0x48] sm:$0xff] %vm390, %v1063
      %1096 = vrot.lane.b32.xlu0 %v1045, 32
      %v1097 = vpop.permute.xlu0 %1096
      %1098 = vrot.lane.b32.xlu0 %v1046, 32
      %v1099 = vpop.permute.xlu0 %1098
      %1100 = vrot.lane.b32.xlu0 %v1047, 32
      %v1101 = vpop.permute.xlu0 %1100
      %1102 = vrot.lane.b32.xlu0 %v1048, 32
      %v1103 = vpop.permute.xlu0 %1102
      %1104 = vrot.lane.b32.xlu0 %v1049, 32
      %v1105 = vpop.permute.xlu0 %1104
      %1106 = vrot.lane.b32.xlu0 %v1050, 32
      %v1107 = vpop.permute.xlu0 %1106
      %1108 = vrot.lane.b32.xlu0 %v1051, 32
      %v1109 = vpop.permute.xlu0 %1108
      %1110 = vrot.lane.b32.xlu0 %v1052, 32
      %v1111 = vpop.permute.xlu0 %1110
      %1112 = vrot.lane.b32.xlu0 %v1053, 32
      %v1113 = vpop.permute.xlu0 %1112
      %1114 = vrot.lane.b32.xlu0 %v1054, 32
      %v1115 = vpop.permute.xlu0 %1114
      %1116 = vrot.lane.b32.xlu0 %v1055, 32
      %v1117 = vpop.permute.xlu0 %1116
      %1118 = vrot.lane.b32.xlu0 %v1056, 32
      %v1119 = vpop.permute.xlu0 %1118
      %1120 = vrot.lane.b32.xlu0 %v1057, 32
      %v1121 = vpop.permute.xlu0 %1120
      %1122 = vrot.lane.b32.xlu0 %v1058, 32
      %v1123 = vpop.permute.xlu0 %1122
      %1124 = vrot.lane.b32.xlu0 %v1059, 32
      %v1125 = vpop.permute.xlu0 %1124
      %1126 = vrot.lane.b32.xlu0 %v1060, 32
      %v1127 = vpop.permute.xlu0 %1126
      %1128 = vrot.lane.b32.xlu0 %v1061, 32
      %v1129 = vpop.permute.xlu0 %1128
      %1130 = vrot.lane.b32.xlu0 %v1062, 32
      %v1131 = vpop.permute.xlu0 %1130
      %1132 = vrot.lane.b32.xlu0 %v1063, 32
      %v1133 = vpop.permute.xlu0 %1132
      %1134 = vrot.lane.b32.xlu0 %v1064, 32
      %v1135 = vpop.permute.xlu0 %1134
      %1156 = vst.msk [vmem:[%s1065 - $0x1] sm:$0xfe] %vm481, %v1097
      %1157 = vst.msk [vmem:[%s1065 + $0x7] sm:$0x1] %vm483, %v1099
      %1158 = vst.msk [vmem:[%s1065 + $0x7] sm:$0xfe] %vm481, %v1101
      %1159 = vst.msk [vmem:[%s1065 + $0xf] sm:$0x1] %vm483, %v1103
      %1160 = vst.msk [vmem:[%s1065 + $0xf] sm:$0xfe] %vm481, %v1105
      %1161 = vst.msk [vmem:[%s1065 + $0x17] sm:$0x1] %vm483, %v1107
      %1162 = vst.msk [vmem:[%s1065 + $0x17] sm:$0xfe] %vm481, %v1109
      %1163 = vst.msk [vmem:[%s1065 + $0x1f] sm:$0x1] %vm483, %v1111
      %1164 = vst.msk [vmem:[%s1065 + $0x1f] sm:$0xfe] %vm481, %v1113
      %1165 = vst.msk [vmem:[%s1065 + $0x27] sm:$0x1] %vm483, %v1115
      %1166 = vst.msk [vmem:[%s1065 + $0x27] sm:$0xfe] %vm481, %v1117
      %1167 = vst.msk [vmem:[%s1065 + $0x2f] sm:$0x1] %vm483, %v1119
      %1168 = vst.msk [vmem:[%s1065 + $0x2f] sm:$0xfe] %vm481, %v1121
      %1169 = vst.msk [vmem:[%s1065 + $0x37] sm:$0x1] %vm483, %v1123
      %1170 = vst.msk [vmem:[%s1065 + $0x37] sm:$0xfe] %vm481, %v1125
      %1171 = vst.msk [vmem:[%s1065 + $0x3f] sm:$0x1] %vm483, %v1127
      %1172 = vst.msk [vmem:[%s1065 + $0x3f] sm:$0xfe] %vm481, %v1129
      %1173 = vst.msk [vmem:[%s1065 + $0x47] sm:$0x1] %vm483, %v1131
      %1174 = vst.msk [vmem:[%s1065 + $0x47] sm:$0xfe] %vm481, %v1133
      %1175 = vst.msk [vmem:[%s1065 + $0x4f] sm:$0x1] %vm483, %v1135
      %1176 = vrot.lane.b32.xlu0 %v1045, 64
      %v1177 = vpop.permute.xlu0 %1176
      %1178 = vrot.lane.b32.xlu0 %v1046, 64
      %v1179 = vpop.permute.xlu0 %1178
      %1180 = vrot.lane.b32.xlu0 %v1047, 64
      %v1181 = vpop.permute.xlu0 %1180
      %1182 = vrot.lane.b32.xlu0 %v1048, 64
      %v1183 = vpop.permute.xlu0 %1182
      %1184 = vrot.lane.b32.xlu0 %v1049, 64
      %v1185 = vpop.permute.xlu0 %1184
      %1186 = vrot.lane.b32.xlu0 %v1050, 64
      %v1187 = vpop.permute.xlu0 %1186
      %1188 = vrot.lane.b32.xlu0 %v1051, 64
      %v1189 = vpop.permute.xlu0 %1188
      %1190 = vrot.lane.b32.xlu0 %v1052, 64
      %v1191 = vpop.permute.xlu0 %1190
      %1192 = vrot.lane.b32.xlu0 %v1053, 64
      %v1193 = vpop.permute.xlu0 %1192
      %1194 = vrot.lane.b32.xlu0 %v1054, 64
      %v1195 = vpop.permute.xlu0 %1194
      %1196 = vrot.lane.b32.xlu0 %v1055, 64
      %v1197 = vpop.permute.xlu0 %1196
      %1198 = vrot.lane.b32.xlu0 %v1056, 64
      %v1199 = vpop.permute.xlu0 %1198
      %1200 = vrot.lane.b32.xlu0 %v1057, 64
      %v1201 = vpop.permute.xlu0 %1200
      %1202 = vrot.lane.b32.xlu0 %v1058, 64
      %v1203 = vpop.permute.xlu0 %1202
      %1204 = vrot.lane.b32.xlu0 %v1059, 64
      %v1205 = vpop.permute.xlu0 %1204
      %1206 = vrot.lane.b32.xlu0 %v1060, 64
      %v1207 = vpop.permute.xlu0 %1206
      %1208 = vrot.lane.b32.xlu0 %v1061, 64
      %v1209 = vpop.permute.xlu0 %1208
      %1210 = vrot.lane.b32.xlu0 %v1062, 64
      %v1211 = vpop.permute.xlu0 %1210
      %1212 = vrot.lane.b32.xlu0 %v1063, 64
      %v1213 = vpop.permute.xlu0 %1212
      %1214 = vrot.lane.b32.xlu0 %v1064, 64
      %v1215 = vpop.permute.xlu0 %1214
      %1236 = vst.msk [vmem:[%s1065 - $0x2] sm:$0xfc] %vm563, %v1177
      %1237 = vst.msk [vmem:[%s1065 + $0x6] sm:$0x3] %vm565, %v1179
      %1238 = vst.msk [vmem:[%s1065 + $0x6] sm:$0xfc] %vm563, %v1181
      %1239 = vst.msk [vmem:[%s1065 + $0xe] sm:$0x3] %vm565, %v1183
      %1240 = vst.msk [vmem:[%s1065 + $0xe] sm:$0xfc] %vm563, %v1185
      %1241 = vst.msk [vmem:[%s1065 + $0x16] sm:$0x3] %vm565, %v1187
      %1242 = vst.msk [vmem:[%s1065 + $0x16] sm:$0xfc] %vm563, %v1189
      %1243 = vst.msk [vmem:[%s1065 + $0x1e] sm:$0x3] %vm565, %v1191
      %1244 = vst.msk [vmem:[%s1065 + $0x1e] sm:$0xfc] %vm563, %v1193
      %1245 = vst.msk [vmem:[%s1065 + $0x26] sm:$0x3] %vm565, %v1195
      %1246 = vst.msk [vmem:[%s1065 + $0x26] sm:$0xfc] %vm563, %v1197
      %1247 = vst.msk [vmem:[%s1065 + $0x2e] sm:$0x3] %vm565, %v1199
      %1248 = vst.msk [vmem:[%s1065 + $0x2e] sm:$0xfc] %vm563, %v1201
      %1249 = vst.msk [vmem:[%s1065 + $0x36] sm:$0x3] %vm565, %v1203
      %1250 = vst.msk [vmem:[%s1065 + $0x36] sm:$0xfc] %vm563, %v1205
      %1251 = vst.msk [vmem:[%s1065 + $0x3e] sm:$0x3] %vm565, %v1207
      %1252 = vst.msk [vmem:[%s1065 + $0x3e] sm:$0xfc] %vm563, %v1209
      %1253 = vst.msk [vmem:[%s1065 + $0x46] sm:$0x3] %vm565, %v1211
      %1254 = vst.msk [vmem:[%s1065 + $0x46] sm:$0xfc] %vm563, %v1213
      %1255 = vst.msk [vmem:[%s1065 + $0x4e] sm:$0x3] %vm565, %v1215
      %v1256 = vld [vmem:[%s1065] sm:$0xff]
      %v1257 = vld [vmem:[%s1065 + $0x8] sm:$0xff]
      %v1258 = vld [vmem:[%s1065 + $0x10] sm:$0xff]
      %v1259 = vld [vmem:[%s1065 + $0x18] sm:$0xff]
      %v1260 = vld [vmem:[%s1065 + $0x20] sm:$0xff]
      %v1261 = vld [vmem:[%s1065 + $0x28] sm:$0xff]
      %v1262 = vld [vmem:[%s1065 + $0x30] sm:$0xff]
      %v1263 = vld [vmem:[%s1065 + $0x38] sm:$0xff]
      %s1264 = scalar_lea.vmem %s3, 288
      %v1265 = vld [vmem:[%s1264] sm:$0xff]
      %v1266 = vld [vmem:[%s1264 + $0x8] sm:$0xff]
      %v1267 = vld [vmem:[%s1264 + $0x10] sm:$0xff]
      %v1268 = vld [vmem:[%s1264 + $0x18] sm:$0xff]
      %v1269 = vld [vmem:[%s1264 + $0x20] sm:$0xff]
      %v1270 = vld [vmem:[%s1264 + $0x28] sm:$0xff]
      %v1271 = vld [vmem:[%s1264 + $0x30] sm:$0xff]
      %v1272 = vld [vmem:[%s1264 + $0x38] sm:$0xff]
      %v1273 = vld [vmem:[%s1264 + $0x40] sm:$0xff]
      %v1274 = vld [vmem:[%s1264 + $0x48] sm:$0xff]
      %v1275 = vld [vmem:[%s1264 + $0x50] sm:$0xff]
      %v1276 = vld [vmem:[%s1264 + $0x58] sm:$0xff]
      %v1278 = vsel %vm627, %v1256, 0
      %v1281 = vsel %vm627, %v1257, 0
      %v1284 = vsel %vm627, %v1258, 0
      %v1287 = vsel %vm627, %v1259, 0
      %v1290 = vsel %vm627, %v1260, 0
      %v1293 = vsel %vm627, %v1261, 0
      %v1296 = vsel %vm627, %v1262, 0
      %v1299 = vsel %vm627, %v1263, 0
      %1301 = vmatprep.subr.mxu0 0.0
      %1302 = vmatpush1.msra.mxu0 %v1265
      %1303 = vmatprep.subr.mxu0 0.0
      %1304 = vmatpush1.msra.mxu0 %v1266
      %1305 = vmatprep.subr.mxu0 0.0
      %1306 = vmatpush1.msra.mxu0 %v1267
      %1307 = vmatprep.subr.mxu0 0.0
      %1308 = vmatpush1.msra.mxu0 %v1268
      %1309 = vmatprep.subr.mxu0 0.0
      %1310 = vmatpush1.msra.mxu0 %v1269
      %1311 = vmatprep.subr.mxu0 0.0
      %1312 = vmatpush1.msra.mxu0 %v1270
      %1313 = vmatprep.subr.mxu0 0.0
      %1314 = vmatpush1.msra.mxu0 %v1271
      %1315 = vmatprep.subr.mxu0 0.0
      %1316 = vmatpush1.msra.mxu0 %v1272
      %1317 = vmatprep.subr.mxu0 0.0
      %1318 = vmatpush1.msra.mxu0 %v1273
      %1319 = vmatprep.subr.mxu0 0.0
      %1320 = vmatpush1.msra.mxu0 %v1274
      %1321 = vmatprep.subr.mxu0 0.0
      %1322 = vmatpush1.msra.mxu0 %v1275
      %1323 = vmatprep.subr.mxu0 0.0
      %1324 = vmatpush1.msra.mxu0 %v1276
      %1325 = vmatprep.subr.mxu0 0.0
      %1326 = vmatpush1.msra.mxu0 0.0
      %1327 = vmatprep.subr.mxu0 0.0
      %1328 = vmatpush1.msra.mxu0 0.0
      %1329 = vmatprep.subr.mxu0 0.0
      %1330 = vmatpush1.msra.mxu0 0.0
      %1331 = vmatprep.subr.mxu0 0.0
      %1332 = vmatpush1.msra.mxu0 0.0
      %1333 = vmatprep.subr.mxu0 0.0
      %1334 = vmatpush1.msra.mxu0 0.0
      %1335 = vmatprep.subr.mxu0 0.0
      %1336 = vmatpush1.msra.mxu0 0.0
      %1337 = vmatprep.subr.mxu0 0.0
      %1338 = vmatpush1.msra.mxu0 0.0
      %1339 = vmatprep.subr.mxu0 0.0
      %1340 = vmatpush1.msra.mxu0 0.0
      %1341 = vmatprep.subr.mxu0 0.0
      %1342 = vmatpush1.msra.mxu0 0.0
      %1343 = vmatprep.subr.mxu0 0.0
      %1344 = vmatpush1.msra.mxu0 0.0
      %1345 = vmatprep.subr.mxu0 0.0
      %1346 = vmatpush1.msra.mxu0 0.0
      %1347 = vmatprep.subr.mxu0 0.0
      %1348 = vmatpush1.msra.mxu0 0.0
      %1349 = vmatprep.subr.mxu0 0.0
      %1350 = vmatpush1.msra.mxu0 0.0
      %1351 = vmatprep.subr.mxu0 0.0
      %1352 = vmatpush1.msra.mxu0 0.0
      %1353 = vmatprep.subr.mxu0 0.0
      %1354 = vmatpush1.msra.mxu0 0.0
      %1355 = vmatprep.subr.mxu0 0.0
      %1356 = vmatpush1.msra.mxu0 0.0
      %1357 = vmatprep.subr.mxu0 0.0
      %1358 = vmatpush1.msra.mxu0 0.0
      %1359 = vmatprep.subr.mxu0 0.0
      %1360 = vmatpush1.msra.mxu0 0.0
      %1361 = vmatprep.subr.mxu0 0.0
      %1362 = vmatpush1.msra.mxu0 0.0
      %1363 = vmatprep.subr.mxu0 0.0
      %1364 = vmatpush1.msra.mxu0 0.0
      %1365 = vmatprep.mubr.f32.mxu0 0.0
      %1366 = vmatmul.mubr.f32.gmra.mrb[0].mxu0 %v1278
      %v1367 = vpop.f32.mrb[0].mxu0
      %v1368 = vadd.f32 0.0, %v1367
      %v1369 = vpop.f32.mrb[0].mxu0
      %1370 = vmatprep.mubr.f32.mxu0 0.0
      %1371 = vmatmul.mubr.f32.gmra.mrb[0].mxu0 %v1281
      %v1372 = vpop.f32.mrb[0].mxu0
      %v1373 = vadd.f32 0.0, %v1372
      %v1374 = vpop.f32.mrb[0].mxu0
      %1375 = vmatprep.mubr.f32.mxu0 0.0
      %1376 = vmatmul.mubr.f32.gmra.mrb[0].mxu0 %v1284
      %v1377 = vpop.f32.mrb[0].mxu0
      %v1378 = vadd.f32 0.0, %v1377
      %v1379 = vpop.f32.mrb[0].mxu0
      %1380 = vmatprep.mubr.f32.mxu0 0.0
      %1381 = vmatmul.mubr.f32.gmra.mrb[0].mxu0 %v1287
      %v1382 = vpop.f32.mrb[0].mxu0
      %v1383 = vadd.f32 0.0, %v1382
      %v1384 = vpop.f32.mrb[0].mxu0
      %1385 = vmatprep.mubr.f32.mxu0 0.0
      %1386 = vmatmul.mubr.f32.gmra.mrb[0].mxu0 %v1290
      %v1387 = vpop.f32.mrb[0].mxu0
      %v1388 = vadd.f32 0.0, %v1387
      %v1389 = vpop.f32.mrb[0].mxu0
      %1390 = vmatprep.mubr.f32.mxu0 0.0
      %1391 = vmatmul.mubr.f32.gmra.mrb[0].mxu0 %v1293
      %v1392 = vpop.f32.mrb[0].mxu0
      %v1393 = vadd.f32 0.0, %v1392
      %v1394 = vpop.f32.mrb[0].mxu0
      %1395 = vmatprep.mubr.f32.mxu0 0.0
      %1396 = vmatmul.mubr.f32.gmra.mrb[0].mxu0 %v1296
      %v1397 = vpop.f32.mrb[0].mxu0
      %v1398 = vadd.f32 0.0, %v1397
      %v1399 = vpop.f32.mrb[0].mxu0
      %1400 = vmatprep.mubr.f32.mxu0 0.0
      %1401 = vmatmul.mubr.f32.gmra.mrb[0].mxu0 %v1299
      %v1402 = vpop.f32.mrb[0].mxu0
      %v1403 = vadd.f32 0.0, %v1402
      %v1404 = vpop.f32.mrb[0].mxu0
      %1405 = vdwg.mxu0
      %v1406 = vadd.f32 %v1037, %v1368
      %v1407 = vadd.f32 %v1038, %v1373
      %v1408 = vadd.f32 %v1039, %v1378
      %v1409 = vadd.f32 %v1040, %v1383
      %v1410 = vadd.f32 %v1041, %v1388
      %v1411 = vadd.f32 %v1042, %v1393
      %v1412 = vadd.f32 %v1043, %v1398
      %v1413 = vadd.f32 %v1044, %v1403
      %s1414 = scalar_lea.vmem [#allocation2], 88
      %v1415 = vld [vmem:[%s1414] sm:$0xff]
      %v1416 = vld [vmem:[%s1414 + $0x8] sm:$0xff]
      %v1417 = vld [vmem:[%s1414 + $0x10] sm:$0xff]
      %v1418 = vld [vmem:[%s1414 + $0x18] sm:$0xff]
      %v1419 = vld [vmem:[%s1414 + $0x20] sm:$0xff]
      %v1420 = vld [vmem:[%s1414 + $0x28] sm:$0xff]
      %v1421 = vld [vmem:[%s1414 + $0x30] sm:$0xff]
      %v1422 = vld [vmem:[%s1414 + $0x38] sm:$0xff]
      %s1423 = scalar_lea.vmem %s3, 384
      %v1424 = vld [vmem:[%s1423] sm:$0xff]
      %v1425 = vld [vmem:[%s1423 + $0x8] sm:$0xff]
      %v1426 = vld [vmem:[%s1423 + $0x10] sm:$0xff]
      %v1427 = vld [vmem:[%s1423 + $0x18] sm:$0xff]
      %v1428 = vld [vmem:[%s1423 + $0x20] sm:$0xff]
      %v1429 = vld [vmem:[%s1423 + $0x28] sm:$0xff]
      %v1430 = vld [vmem:[%s1423 + $0x30] sm:$0xff]
      %v1431 = vld [vmem:[%s1423 + $0x38] sm:$0xff]
      %v1432 = vld [vmem:[%s1423 + $0x40] sm:$0xff]
      %v1433 = vld [vmem:[%s1423 + $0x48] sm:$0xff]
      %v1434 = vld [vmem:[%s1423 + $0x50] sm:$0xff]
      %v1435 = vld [vmem:[%s1423 + $0x58] sm:$0xff]
      %v1437 = vsel %vm627, %v1415, 0
      %v1440 = vsel %vm627, %v1416, 0
      %v1443 = vsel %vm627, %v1417, 0
      %v1446 = vsel %vm627, %v1418, 0
      %v1449 = vsel %vm627, %v1419, 0
      %v1452 = vsel %vm627, %v1420, 0
      %v1455 = vsel %vm627, %v1421, 0
      %v1458 = vsel %vm627, %v1422, 0
      %1460 = vmatprep.subr.mxu0 0.0
      %1461 = vmatpush1.msra.mxu0 %v1424
      %1462 = vmatprep.subr.mxu0 0.0
      %1463 = vmatpush1.msra.mxu0 %v1425
      %1464 = vmatprep.subr.mxu0 0.0
      %1465 = vmatpush1.msra.mxu0 %v1426
      %1466 = vmatprep.subr.mxu0 0.0
      %1467 = vmatpush1.msra.mxu0 %v1427
      %1468 = vmatprep.subr.mxu0 0.0
      %1469 = vmatpush1.msra.mxu0 %v1428
      %1470 = vmatprep.subr.mxu0 0.0
      %1471 = vmatpush1.msra.mxu0 %v1429
      %1472 = vmatprep.subr.mxu0 0.0
      %1473 = vmatpush1.msra.mxu0 %v1430
      %1474 = vmatprep.subr.mxu0 0.0
      %1475 = vmatpush1.msra.mxu0 %v1431
      %1476 = vmatprep.subr.mxu0 0.0
      %1477 = vmatpush1.msra.mxu0 %v1432
      %1478 = vmatprep.subr.mxu0 0.0
      %1479 = vmatpush1.msra.mxu0 %v1433
      %1480 = vmatprep.subr.mxu0 0.0
      %1481 = vmatpush1.msra.mxu0 %v1434
      %1482 = vmatprep.subr.mxu0 0.0
      %1483 = vmatpush1.msra.mxu0 %v1435
      %1484 = vmatprep.subr.mxu0 0.0
      %1485 = vmatpush1.msra.mxu0 0.0
      %1486 = vmatprep.subr.mxu0 0.0
      %1487 = vmatpush1.msra.mxu0 0.0
      %1488 = vmatprep.subr.mxu0 0.0
      %1489 = vmatpush1.msra.mxu0 0.0
      %1490 = vmatprep.subr.mxu0 0.0
      %1491 = vmatpush1.msra.mxu0 0.0
      %1492 = vmatprep.subr.mxu0 0.0
      %1493 = vmatpush1.msra.mxu0 0.0
      %1494 = vmatprep.subr.mxu0 0.0
      %1495 = vmatpush1.msra.mxu0 0.0
      %1496 = vmatprep.subr.mxu0 0.0
      %1497 = vmatpush1.msra.mxu0 0.0
      %1498 = vmatprep.subr.mxu0 0.0
      %1499 = vmatpush1.msra.mxu0 0.0
      %1500 = vmatprep.subr.mxu0 0.0
      %1501 = vmatpush1.msra.mxu0 0.0
      %1502 = vmatprep.subr.mxu0 0.0
      %1503 = vmatpush1.msra.mxu0 0.0
      %1504 = vmatprep.subr.mxu0 0.0
      %1505 = vmatpush1.msra.mxu0 0.0
      %1506 = vmatprep.subr.mxu0 0.0
      %1507 = vmatpush1.msra.mxu0 0.0
      %1508 = vmatprep.subr.mxu0 0.0
      %1509 = vmatpush1.msra.mxu0 0.0
      %1510 = vmatprep.subr.mxu0 0.0
      %1511 = vmatpush1.msra.mxu0 0.0
      %1512 = vmatprep.subr.mxu0 0.0
      %1513 = vmatpush1.msra.mxu0 0.0
      %1514 = vmatprep.subr.mxu0 0.0
      %1515 = vmatpush1.msra.mxu0 0.0
      %1516 = vmatprep.subr.mxu0 0.0
      %1517 = vmatpush1.msra.mxu0 0.0
      %1518 = vmatprep.subr.mxu0 0.0
      %1519 = vmatpush1.msra.mxu0 0.0
      %1520 = vmatprep.subr.mxu0 0.0
      %1521 = vmatpush1.msra.mxu0 0.0
      %1522 = vmatprep.subr.mxu0 0.0
      %1523 = vmatpush1.msra.mxu0 0.0
      %1524 = vmatprep.mubr.f32.mxu0 0.0
      %1525 = vmatmul.mubr.f32.gmra.mrb[0].mxu0 %v1437
      %v1526 = vpop.f32.mrb[0].mxu0
      %v1527 = vadd.f32 0.0, %v1526
      %v1528 = vpop.f32.mrb[0].mxu0
      %1529 = vmatprep.mubr.f32.mxu0 0.0
      %1530 = vmatmul.mubr.f32.gmra.mrb[0].mxu0 %v1440
      %v1531 = vpop.f32.mrb[0].mxu0
      %v1532 = vadd.f32 0.0, %v1531
      %v1533 = vpop.f32.mrb[0].mxu0
      %1534 = vmatprep.mubr.f32.mxu0 0.0
      %1535 = vmatmul.mubr.f32.gmra.mrb[0].mxu0 %v1443
      %v1536 = vpop.f32.mrb[0].mxu0
      %v1537 = vadd.f32 0.0, %v1536
      %v1538 = vpop.f32.mrb[0].mxu0
      %1539 = vmatprep.mubr.f32.mxu0 0.0
      %1540 = vmatmul.mubr.f32.gmra.mrb[0].mxu0 %v1446
      %v1541 = vpop.f32.mrb[0].mxu0
      %v1542 = vadd.f32 0.0, %v1541
      %v1543 = vpop.f32.mrb[0].mxu0
      %1544 = vmatprep.mubr.f32.mxu0 0.0
      %1545 = vmatmul.mubr.f32.gmra.mrb[0].mxu0 %v1449
      %v1546 = vpop.f32.mrb[0].mxu0
      %v1547 = vadd.f32 0.0, %v1546
      %v1548 = vpop.f32.mrb[0].mxu0
      %1549 = vmatprep.mubr.f32.mxu0 0.0
      %1550 = vmatmul.mubr.f32.gmra.mrb[0].mxu0 %v1452
      %v1551 = vpop.f32.mrb[0].mxu0
      %v1552 = vadd.f32 0.0, %v1551
      %v1553 = vpop.f32.mrb[0].mxu0
      %1554 = vmatprep.mubr.f32.mxu0 0.0
      %1555 = vmatmul.mubr.f32.gmra.mrb[0].mxu0 %v1455
      %v1556 = vpop.f32.mrb[0].mxu0
      %v1557 = vadd.f32 0.0, %v1556
      %v1558 = vpop.f32.mrb[0].mxu0
      %1559 = vmatprep.mubr.f32.mxu0 0.0
      %1560 = vmatmul.mubr.f32.gmra.mrb[0].mxu0 %v1458
      %v1561 = vpop.f32.mrb[0].mxu0
      %v1562 = vadd.f32 0.0, %v1561
      %v1563 = vpop.f32.mrb[0].mxu0
      %1564 = vdwg.mxu0
      %v1565 = vadd.f32 %v1406, %v1527
      %v1566 = vadd.f32 %v1407, %v1532
      %v1567 = vadd.f32 %v1408, %v1537
      %v1568 = vadd.f32 %v1409, %v1542
      %v1569 = vadd.f32 %v1410, %v1547
      %v1570 = vadd.f32 %v1411, %v1552
      %v1571 = vadd.f32 %v1412, %v1557
      %v1572 = vadd.f32 %v1413, %v1562
      %s1573 = scalar_lea.vmem [#allocation2], 96
      %v1574 = vld [vmem:[%s1573] sm:$0xff]
      %v1575 = vld [vmem:[%s1573 + $0x8] sm:$0xff]
      %v1576 = vld [vmem:[%s1573 + $0x10] sm:$0xff]
      %v1577 = vld [vmem:[%s1573 + $0x18] sm:$0xff]
      %v1578 = vld [vmem:[%s1573 + $0x20] sm:$0xff]
      %v1579 = vld [vmem:[%s1573 + $0x28] sm:$0xff]
      %v1580 = vld [vmem:[%s1573 + $0x30] sm:$0xff]
      %v1581 = vld [vmem:[%s1573 + $0x38] sm:$0xff]
      %s1582 = scalar_lea.vmem %s3, 480
      %v1583 = vld [vmem:[%s1582] sm:$0xff]
      %v1584 = vld [vmem:[%s1582 + $0x8] sm:$0xff]
      %v1585 = vld [vmem:[%s1582 + $0x10] sm:$0xff]
      %v1586 = vld [vmem:[%s1582 + $0x18] sm:$0xff]
      %v1587 = vld [vmem:[%s1582 + $0x20] sm:$0xff]
      %v1588 = vld [vmem:[%s1582 + $0x28] sm:$0xff]
      %v1589 = vld [vmem:[%s1582 + $0x30] sm:$0xff]
      %v1590 = vld [vmem:[%s1582 + $0x38] sm:$0xff]
      %v1591 = vld [vmem:[%s1582 + $0x40] sm:$0xff]
      %v1592 = vld [vmem:[%s1582 + $0x48] sm:$0xff]
      %v1593 = vld [vmem:[%s1582 + $0x50] sm:$0xff]
      %v1594 = vld [vmem:[%s1582 + $0x58] sm:$0xff]
      %v1596 = vsel %vm627, %v1574, 0
      %v1599 = vsel %vm627, %v1575, 0
      %v1602 = vsel %vm627, %v1576, 0
      %v1605 = vsel %vm627, %v1577, 0
      %v1608 = vsel %vm627, %v1578, 0
      %v1611 = vsel %vm627, %v1579, 0
      %v1614 = vsel %vm627, %v1580, 0
      %v1617 = vsel %vm627, %v1581, 0
      %1619 = vmatprep.subr.mxu0 0.0
      %1620 = vmatpush1.msra.mxu0 %v1583
      %1621 = vmatprep.subr.mxu0 0.0
      %1622 = vmatpush1.msra.mxu0 %v1584
      %1623 = vmatprep.subr.mxu0 0.0
      %1624 = vmatpush1.msra.mxu0 %v1585
      %1625 = vmatprep.subr.mxu0 0.0
      %1626 = vmatpush1.msra.mxu0 %v1586
      %1627 = vmatprep.subr.mxu0 0.0
      %1628 = vmatpush1.msra.mxu0 %v1587
      %1629 = vmatprep.subr.mxu0 0.0
      %1630 = vmatpush1.msra.mxu0 %v1588
      %1631 = vmatprep.subr.mxu0 0.0
      %1632 = vmatpush1.msra.mxu0 %v1589
      %1633 = vmatprep.subr.mxu0 0.0
      %1634 = vmatpush1.msra.mxu0 %v1590
      %1635 = vmatprep.subr.mxu0 0.0
      %1636 = vmatpush1.msra.mxu0 %v1591
      %1637 = vmatprep.subr.mxu0 0.0
      %1638 = vmatpush1.msra.mxu0 %v1592
      %1639 = vmatprep.subr.mxu0 0.0
      %1640 = vmatpush1.msra.mxu0 %v1593
      %1641 = vmatprep.subr.mxu0 0.0
      %1642 = vmatpush1.msra.mxu0 %v1594
      %1643 = vmatprep.subr.mxu0 0.0
      %1644 = vmatpush1.msra.mxu0 0.0
      %1645 = vmatprep.subr.mxu0 0.0
      %1646 = vmatpush1.msra.mxu0 0.0
      %1647 = vmatprep.subr.mxu0 0.0
      %1648 = vmatpush1.msra.mxu0 0.0
      %1649 = vmatprep.subr.mxu0 0.0
      %1650 = vmatpush1.msra.mxu0 0.0
      %1651 = vmatprep.subr.mxu0 0.0
      %1652 = vmatpush1.msra.mxu0 0.0
      %1653 = vmatprep.subr.mxu0 0.0
      %1654 = vmatpush1.msra.mxu0 0.0
      %1655 = vmatprep.subr.mxu0 0.0
      %1656 = vmatpush1.msra.mxu0 0.0
      %1657 = vmatprep.subr.mxu0 0.0
      %1658 = vmatpush1.msra.mxu0 0.0
      %1659 = vmatprep.subr.mxu0 0.0
      %1660 = vmatpush1.msra.mxu0 0.0
      %1661 = vmatprep.subr.mxu0 0.0
      %1662 = vmatpush1.msra.mxu0 0.0
      %1663 = vmatprep.subr.mxu0 0.0
      %1664 = vmatpush1.msra.mxu0 0.0
      %1665 = vmatprep.subr.mxu0 0.0
      %1666 = vmatpush1.msra.mxu0 0.0
      %1667 = vmatprep.subr.mxu0 0.0
      %1668 = vmatpush1.msra.mxu0 0.0
      %1669 = vmatprep.subr.mxu0 0.0
      %1670 = vmatpush1.msra.mxu0 0.0
      %1671 = vmatprep.subr.mxu0 0.0
      %1672 = vmatpush1.msra.mxu0 0.0
      %1673 = vmatprep.subr.mxu0 0.0
      %1674 = vmatpush1.msra.mxu0 0.0
      %1675 = vmatprep.subr.mxu0 0.0
      %1676 = vmatpush1.msra.mxu0 0.0
      %1677 = vmatprep.subr.mxu0 0.0
      %1678 = vmatpush1.msra.mxu0 0.0
      %1679 = vmatprep.subr.mxu0 0.0
      %1680 = vmatpush1.msra.mxu0 0.0
      %1681 = vmatprep.subr.mxu0 0.0
      %1682 = vmatpush1.msra.mxu0 0.0
      %1683 = vmatprep.mubr.f32.mxu0 0.0
      %1684 = vmatmul.mubr.f32.gmra.mrb[0].mxu0 %v1596
      %v1685 = vpop.f32.mrb[0].mxu0
      %v1686 = vadd.f32 0.0, %v1685
      %v1687 = vpop.f32.mrb[0].mxu0
      %1688 = vmatprep.mubr.f32.mxu0 0.0
      %1689 = vmatmul.mubr.f32.gmra.mrb[0].mxu0 %v1599
      %v1690 = vpop.f32.mrb[0].mxu0
      %v1691 = vadd.f32 0.0, %v1690
      %v1692 = vpop.f32.mrb[0].mxu0
      %1693 = vmatprep.mubr.f32.mxu0 0.0
      %1694 = vmatmul.mubr.f32.gmra.mrb[0].mxu0 %v1602
      %v1695 = vpop.f32.mrb[0].mxu0
      %v1696 = vadd.f32 0.0, %v1695
      %v1697 = vpop.f32.mrb[0].mxu0
      %1698 = vmatprep.mubr.f32.mxu0 0.0
      %1699 = vmatmul.mubr.f32.gmra.mrb[0].mxu0 %v1605
      %v1700 = vpop.f32.mrb[0].mxu0
      %v1701 = vadd.f32 0.0, %v1700
      %v1702 = vpop.f32.mrb[0].mxu0
      %1703 = vmatprep.mubr.f32.mxu0 0.0
      %1704 = vmatmul.mubr.f32.gmra.mrb[0].mxu0 %v1608
      %v1705 = vpop.f32.mrb[0].mxu0
      %v1706 = vadd.f32 0.0, %v1705
      %v1707 = vpop.f32.mrb[0].mxu0
      %1708 = vmatprep.mubr.f32.mxu0 0.0
      %1709 = vmatmul.mubr.f32.gmra.mrb[0].mxu0 %v1611
      %v1710 = vpop.f32.mrb[0].mxu0
      %v1711 = vadd.f32 0.0, %v1710
      %v1712 = vpop.f32.mrb[0].mxu0
      %1713 = vmatprep.mubr.f32.mxu0 0.0
      %1714 = vmatmul.mubr.f32.gmra.mrb[0].mxu0 %v1614
      %v1715 = vpop.f32.mrb[0].mxu0
      %v1716 = vadd.f32 0.0, %v1715
      %v1717 = vpop.f32.mrb[0].mxu0
      %1718 = vmatprep.mubr.f32.mxu0 0.0
      %1719 = vmatmul.mubr.f32.gmra.mrb[0].mxu0 %v1617
      %v1720 = vpop.f32.mrb[0].mxu0
      %v1721 = vadd.f32 0.0, %v1720
      %v1722 = vpop.f32.mrb[0].mxu0
      %1723 = vdwg.mxu0
      %v1724 = vadd.f32 %v1565, %v1686
      %v1725 = vadd.f32 %v1566, %v1691
      %v1726 = vadd.f32 %v1567, %v1696
      %v1727 = vadd.f32 %v1568, %v1701
      %v1728 = vadd.f32 %v1569, %v1706
      %v1729 = vadd.f32 %v1570, %v1711
      %v1730 = vadd.f32 %v1571, %v1716
      %v1731 = vadd.f32 %v1572, %v1721
      %v1732 = vld [vmem:[%s359] sm:$0xff]
      %v1733 = vld [vmem:[%s359 + $0x8] sm:$0x3]
      %v1734 = vld [vmem:[%s359 + $0x10] sm:$0xff]
      %v1735 = vld [vmem:[%s359 + $0x18] sm:$0x3]
      %v1736 = vld [vmem:[%s359 + $0x20] sm:$0xff]
      %v1737 = vld [vmem:[%s359 + $0x28] sm:$0x3]
      %v1738 = vld [vmem:[%s359 + $0x30] sm:$0xff]
      %v1739 = vld [vmem:[%s359 + $0x38] sm:$0x3]
      %v1740 = vld [vmem:[%s359 + $0x40] sm:$0xff]
      %v1741 = vld [vmem:[%s359 + $0x48] sm:$0x3]
      %v1742 = vld [vmem:[%s359 + $0x50] sm:$0xff]
      %v1743 = vld [vmem:[%s359 + $0x58] sm:$0x3]
      %v1744 = vld [vmem:[%s359 + $0x60] sm:$0xff]
      %v1745 = vld [vmem:[%s359 + $0x68] sm:$0x3]
      %v1746 = vld [vmem:[%s359 + $0x70] sm:$0xff]
      %v1747 = vld [vmem:[%s359 + $0x78] sm:$0x3]
      %v1748 = vld [vmem:[%s359 + $0x80] sm:$0xff]
      %v1749 = vld [vmem:[%s359 + $0x88] sm:$0x3]
      %v1750 = vld [vmem:[%s359 + $0x90] sm:$0xff]
      %v1751 = vld [vmem:[%s359 + $0x98] sm:$0x3]
      %1752 = vst.msk [vmem:[#allocation2] sm:$0xff] %vm390, %v1732
      %1753 = vst.msk [vmem:[#allocation2 + $0x8] sm:$0xff] %vm390, %v1734
      %1754 = vst.msk [vmem:[#allocation2 + $0x10] sm:$0xff] %vm390, %v1736
      %1755 = vst.msk [vmem:[#allocation2 + $0x18] sm:$0xff] %vm390, %v1738
      %1756 = vst.msk [vmem:[#allocation2 + $0x20] sm:$0xff] %vm390, %v1740
      %1757 = vst.msk [vmem:[#allocation2 + $0x28] sm:$0xff] %vm390, %v1742
      %1758 = vst.msk [vmem:[#allocation2 + $0x30] sm:$0xff] %vm390, %v1744
      %1759 = vst.msk [vmem:[#allocation2 + $0x38] sm:$0xff] %vm390, %v1746
      %1760 = vst.msk [vmem:[#allocation2 + $0x40] sm:$0xff] %vm390, %v1748
      %1761 = vst.msk [vmem:[#allocation2 + $0x48] sm:$0xff] %vm390, %v1750
      %1782 = vrot.lane.b32.xlu0 %v1732, 32
      %v1783 = vpop.permute.xlu0 %1782
      %1784 = vrot.lane.b32.xlu0 %v1733, 32
      %v1785 = vpop.permute.xlu0 %1784
      %1786 = vrot.lane.b32.xlu0 %v1734, 32
      %v1787 = vpop.permute.xlu0 %1786
      %1788 = vrot.lane.b32.xlu0 %v1735, 32
      %v1789 = vpop.permute.xlu0 %1788
      %1790 = vrot.lane.b32.xlu0 %v1736, 32
      %v1791 = vpop.permute.xlu0 %1790
      %1792 = vrot.lane.b32.xlu0 %v1737, 32
      %v1793 = vpop.permute.xlu0 %1792
      %1794 = vrot.lane.b32.xlu0 %v1738, 32
      %v1795 = vpop.permute.xlu0 %1794
      %1796 = vrot.lane.b32.xlu0 %v1739, 32
      %v1797 = vpop.permute.xlu0 %1796
      %1798 = vrot.lane.b32.xlu0 %v1740, 32
      %v1799 = vpop.permute.xlu0 %1798
      %1800 = vrot.lane.b32.xlu0 %v1741, 32
      %v1801 = vpop.permute.xlu0 %1800
      %1802 = vrot.lane.b32.xlu0 %v1742, 32
      %v1803 = vpop.permute.xlu0 %1802
      %1804 = vrot.lane.b32.xlu0 %v1743, 32
      %v1805 = vpop.permute.xlu0 %1804
      %1806 = vrot.lane.b32.xlu0 %v1744, 32
      %v1807 = vpop.permute.xlu0 %1806
      %1808 = vrot.lane.b32.xlu0 %v1745, 32
      %v1809 = vpop.permute.xlu0 %1808
      %1810 = vrot.lane.b32.xlu0 %v1746, 32
      %v1811 = vpop.permute.xlu0 %1810
      %1812 = vrot.lane.b32.xlu0 %v1747, 32
      %v1813 = vpop.permute.xlu0 %1812
      %1814 = vrot.lane.b32.xlu0 %v1748, 32
      %v1815 = vpop.permute.xlu0 %1814
      %1816 = vrot.lane.b32.xlu0 %v1749, 32
      %v1817 = vpop.permute.xlu0 %1816
      %1818 = vrot.lane.b32.xlu0 %v1750, 32
      %v1819 = vpop.permute.xlu0 %1818
      %1820 = vrot.lane.b32.xlu0 %v1751, 32
      %v1821 = vpop.permute.xlu0 %1820
      %1842 = vst.msk [vmem:[#allocation2 - $0x1] sm:$0xfe] %vm481, %v1783
      %1843 = vst.msk [vmem:[#allocation2 + $0x7] sm:$0x1] %vm483, %v1785
      %1844 = vst.msk [vmem:[#allocation2 + $0x7] sm:$0xfe] %vm481, %v1787
      %1845 = vst.msk [vmem:[#allocation2 + $0xf] sm:$0x1] %vm483, %v1789
      %1846 = vst.msk [vmem:[#allocation2 + $0xf] sm:$0xfe] %vm481, %v1791
      %1847 = vst.msk [vmem:[#allocation2 + $0x17] sm:$0x1] %vm483, %v1793
      %1848 = vst.msk [vmem:[#allocation2 + $0x17] sm:$0xfe] %vm481, %v1795
      %1849 = vst.msk [vmem:[#allocation2 + $0x1f] sm:$0x1] %vm483, %v1797
      %1850 = vst.msk [vmem:[#allocation2 + $0x1f] sm:$0xfe] %vm481, %v1799
      %1851 = vst.msk [vmem:[#allocation2 + $0x27] sm:$0x1] %vm483, %v1801
      %1852 = vst.msk [vmem:[#allocation2 + $0x27] sm:$0xfe] %vm481, %v1803
      %1853 = vst.msk [vmem:[#allocation2 + $0x2f] sm:$0x1] %vm483, %v1805
      %1854 = vst.msk [vmem:[#allocation2 + $0x2f] sm:$0xfe] %vm481, %v1807
      %1855 = vst.msk [vmem:[#allocation2 + $0x37] sm:$0x1] %vm483, %v1809
      %1856 = vst.msk [vmem:[#allocation2 + $0x37] sm:$0xfe] %vm481, %v1811
      %1857 = vst.msk [vmem:[#allocation2 + $0x3f] sm:$0x1] %vm483, %v1813
      %1858 = vst.msk [vmem:[#allocation2 + $0x3f] sm:$0xfe] %vm481, %v1815
      %1859 = vst.msk [vmem:[#allocation2 + $0x47] sm:$0x1] %vm483, %v1817
      %1860 = vst.msk [vmem:[#allocation2 + $0x47] sm:$0xfe] %vm481, %v1819
      %1861 = vst.msk [vmem:[#allocation2 + $0x4f] sm:$0x1] %vm483, %v1821
      %1862 = vrot.lane.b32.xlu0 %v1732, 64
      %v1863 = vpop.permute.xlu0 %1862
      %1864 = vrot.lane.b32.xlu0 %v1733, 64
      %v1865 = vpop.permute.xlu0 %1864
      %1866 = vrot.lane.b32.xlu0 %v1734, 64
      %v1867 = vpop.permute.xlu0 %1866
      %1868 = vrot.lane.b32.xlu0 %v1735, 64
      %v1869 = vpop.permute.xlu0 %1868
      %1870 = vrot.lane.b32.xlu0 %v1736, 64
      %v1871 = vpop.permute.xlu0 %1870
      %1872 = vrot.lane.b32.xlu0 %v1737, 64
      %v1873 = vpop.permute.xlu0 %1872
      %1874 = vrot.lane.b32.xlu0 %v1738, 64
      %v1875 = vpop.permute.xlu0 %1874
      %1876 = vrot.lane.b32.xlu0 %v1739, 64
      %v1877 = vpop.permute.xlu0 %1876
      %1878 = vrot.lane.b32.xlu0 %v1740, 64
      %v1879 = vpop.permute.xlu0 %1878
      %1880 = vrot.lane.b32.xlu0 %v1741, 64
      %v1881 = vpop.permute.xlu0 %1880
      %1882 = vrot.lane.b32.xlu0 %v1742, 64
      %v1883 = vpop.permute.xlu0 %1882
      %1884 = vrot.lane.b32.xlu0 %v1743, 64
      %v1885 = vpop.permute.xlu0 %1884
      %1886 = vrot.lane.b32.xlu0 %v1744, 64
      %v1887 = vpop.permute.xlu0 %1886
      %1888 = vrot.lane.b32.xlu0 %v1745, 64
      %v1889 = vpop.permute.xlu0 %1888
      %1890 = vrot.lane.b32.xlu0 %v1746, 64
      %v1891 = vpop.permute.xlu0 %1890
      %1892 = vrot.lane.b32.xlu0 %v1747, 64
      %v1893 = vpop.permute.xlu0 %1892
      %1894 = vrot.lane.b32.xlu0 %v1748, 64
      %v1895 = vpop.permute.xlu0 %1894
      %1896 = vrot.lane.b32.xlu0 %v1749, 64
      %v1897 = vpop.permute.xlu0 %1896
      %1898 = vrot.lane.b32.xlu0 %v1750, 64
      %v1899 = vpop.permute.xlu0 %1898
      %1900 = vrot.lane.b32.xlu0 %v1751, 64
      %v1901 = vpop.permute.xlu0 %1900
      %1922 = vst.msk [vmem:[#allocation2 - $0x2] sm:$0xfc] %vm563, %v1863
      %1923 = vst.msk [vmem:[#allocation2 + $0x6] sm:$0x3] %vm565, %v1865
      %1924 = vst.msk [vmem:[#allocation2 + $0x6] sm:$0xfc] %vm563, %v1867
      %1925 = vst.msk [vmem:[#allocation2 + $0xe] sm:$0x3] %vm565, %v1869
      %1926 = vst.msk [vmem:[#allocation2 + $0xe] sm:$0xfc] %vm563, %v1871
      %1927 = vst.msk [vmem:[#allocation2 + $0x16] sm:$0x3] %vm565, %v1873
      %1928 = vst.msk [vmem:[#allocation2 + $0x16] sm:$0xfc] %vm563, %v1875
      %1929 = vst.msk [vmem:[#allocation2 + $0x1e] sm:$0x3] %vm565, %v1877
      %1930 = vst.msk [vmem:[#allocation2 + $0x1e] sm:$0xfc] %vm563, %v1879
      %1931 = vst.msk [vmem:[#allocation2 + $0x26] sm:$0x3] %vm565, %v1881
      %1932 = vst.msk [vmem:[#allocation2 + $0x26] sm:$0xfc] %vm563, %v1883
      %1933 = vst.msk [vmem:[#allocation2 + $0x2e] sm:$0x3] %vm565, %v1885
      %1934 = vst.msk [vmem:[#allocation2 + $0x2e] sm:$0xfc] %vm563, %v1887
      %1935 = vst.msk [vmem:[#allocation2 + $0x36] sm:$0x3] %vm565, %v1889
      %1936 = vst.msk [vmem:[#allocation2 + $0x36] sm:$0xfc] %vm563, %v1891
      %1937 = vst.msk [vmem:[#allocation2 + $0x3e] sm:$0x3] %vm565, %v1893
      %1938 = vst.msk [vmem:[#allocation2 + $0x3e] sm:$0xfc] %vm563, %v1895
      %1939 = vst.msk [vmem:[#allocation2 + $0x46] sm:$0x3] %vm565, %v1897
      %1940 = vst.msk [vmem:[#allocation2 + $0x46] sm:$0xfc] %vm563, %v1899
      %1941 = vst.msk [vmem:[#allocation2 + $0x4e] sm:$0x3] %vm565, %v1901
      %v1942 = vld [vmem:[#allocation2] sm:$0xff]
      %v1943 = vld [vmem:[#allocation2 + $0x8] sm:$0xff]
      %v1944 = vld [vmem:[#allocation2 + $0x10] sm:$0xff]
      %v1945 = vld [vmem:[#allocation2 + $0x18] sm:$0xff]
      %v1946 = vld [vmem:[#allocation2 + $0x20] sm:$0xff]
      %v1947 = vld [vmem:[#allocation2 + $0x28] sm:$0xff]
      %v1948 = vld [vmem:[#allocation2 + $0x30] sm:$0xff]
      %v1949 = vld [vmem:[#allocation2 + $0x38] sm:$0xff]
      %s1950 = scalar_lea.vmem %s3, 576
      %v1951 = vld [vmem:[%s1950] sm:$0xff]
      %v1952 = vld [vmem:[%s1950 + $0x8] sm:$0xff]
      %v1953 = vld [vmem:[%s1950 + $0x10] sm:$0xff]
      %v1954 = vld [vmem:[%s1950 + $0x18] sm:$0xff]
      %v1955 = vld [vmem:[%s1950 + $0x20] sm:$0xff]
      %v1956 = vld [vmem:[%s1950 + $0x28] sm:$0xff]
      %v1957 = vld [vmem:[%s1950 + $0x30] sm:$0xff]
      %v1958 = vld [vmem:[%s1950 + $0x38] sm:$0xff]
      %v1959 = vld [vmem:[%s1950 + $0x40] sm:$0xff]
      %v1960 = vld [vmem:[%s1950 + $0x48] sm:$0xff]
      %v1961 = vld [vmem:[%s1950 + $0x50] sm:$0xff]
      %v1962 = vld [vmem:[%s1950 + $0x58] sm:$0xff]
      %v1964 = vsel %vm627, %v1942, 0
      %v1967 = vsel %vm627, %v1943, 0
      %v1970 = vsel %vm627, %v1944, 0
      %v1973 = vsel %vm627, %v1945, 0
      %v1976 = vsel %vm627, %v1946, 0
      %v1979 = vsel %vm627, %v1947, 0
      %v1982 = vsel %vm627, %v1948, 0
      %v1985 = vsel %vm627, %v1949, 0
      %1987 = vmatprep.subr.mxu0 0.0
      %1988 = vmatpush1.msra.mxu0 %v1951
      %1989 = vmatprep.subr.mxu0 0.0
      %1990 = vmatpush1.msra.mxu0 %v1952
      %1991 = vmatprep.subr.mxu0 0.0
      %1992 = vmatpush1.msra.mxu0 %v1953
      %1993 = vmatprep.subr.mxu0 0.0
      %1994 = vmatpush1.msra.mxu0 %v1954
      %1995 = vmatprep.subr.mxu0 0.0
      %1996 = vmatpush1.msra.mxu0 %v1955
      %1997 = vmatprep.subr.mxu0 0.0
      %1998 = vmatpush1.msra.mxu0 %v1956
      %1999 = vmatprep.subr.mxu0 0.0
      %2000 = vmatpush1.msra.mxu0 %v1957
      %2001 = vmatprep.subr.mxu0 0.0
      %2002 = vmatpush1.msra.mxu0 %v1958
      %2003 = vmatprep.subr.mxu0 0.0
      %2004 = vmatpush1.msra.mxu0 %v1959
      %2005 = vmatprep.subr.mxu0 0.0
      %2006 = vmatpush1.msra.mxu0 %v1960
      %2007 = vmatprep.subr.mxu0 0.0
      %2008 = vmatpush1.msra.mxu0 %v1961
      %2009 = vmatprep.subr.mxu0 0.0
      %2010 = vmatpush1.msra.mxu0 %v1962
      %2011 = vmatprep.subr.mxu0 0.0
      %2012 = vmatpush1.msra.mxu0 0.0
      %2013 = vmatprep.subr.mxu0 0.0
      %2014 = vmatpush1.msra.mxu0 0.0
      %2015 = vmatprep.subr.mxu0 0.0
      %2016 = vmatpush1.msra.mxu0 0.0
      %2017 = vmatprep.subr.mxu0 0.0
      %2018 = vmatpush1.msra.mxu0 0.0
      %2019 = vmatprep.subr.mxu0 0.0
      %2020 = vmatpush1.msra.mxu0 0.0
      %2021 = vmatprep.subr.mxu0 0.0
      %2022 = vmatpush1.msra.mxu0 0.0
      %2023 = vmatprep.subr.mxu0 0.0
      %2024 = vmatpush1.msra.mxu0 0.0
      %2025 = vmatprep.subr.mxu0 0.0
      %2026 = vmatpush1.msra.mxu0 0.0
      %2027 = vmatprep.subr.mxu0 0.0
      %2028 = vmatpush1.msra.mxu0 0.0
      %2029 = vmatprep.subr.mxu0 0.0
      %2030 = vmatpush1.msra.mxu0 0.0
      %2031 = vmatprep.subr.mxu0 0.0
      %2032 = vmatpush1.msra.mxu0 0.0
      %2033 = vmatprep.subr.mxu0 0.0
      %2034 = vmatpush1.msra.mxu0 0.0
      %2035 = vmatprep.subr.mxu0 0.0
      %2036 = vmatpush1.msra.mxu0 0.0
      %2037 = vmatprep.subr.mxu0 0.0
      %2038 = vmatpush1.msra.mxu0 0.0
      %2039 = vmatprep.subr.mxu0 0.0
      %2040 = vmatpush1.msra.mxu0 0.0
      %2041 = vmatprep.subr.mxu0 0.0
      %2042 = vmatpush1.msra.mxu0 0.0
      %2043 = vmatprep.subr.mxu0 0.0
      %2044 = vmatpush1.msra.mxu0 0.0
      %2045 = vmatprep.subr.mxu0 0.0
      %2046 = vmatpush1.msra.mxu0 0.0
      %2047 = vmatprep.subr.mxu0 0.0
      %2048 = vmatpush1.msra.mxu0 0.0
      %2049 = vmatprep.subr.mxu0 0.0
      %2050 = vmatpush1.msra.mxu0 0.0
      %2051 = vmatprep.mubr.f32.mxu0 0.0
      %2052 = vmatmul.mubr.f32.gmra.mrb[0].mxu0 %v1964
      %v2053 = vpop.f32.mrb[0].mxu0
      %v2054 = vadd.f32 0.0, %v2053
      %v2055 = vpop.f32.mrb[0].mxu0
      %2056 = vmatprep.mubr.f32.mxu0 0.0
      %2057 = vmatmul.mubr.f32.gmra.mrb[0].mxu0 %v1967
      %v2058 = vpop.f32.mrb[0].mxu0
      %v2059 = vadd.f32 0.0, %v2058
      %v2060 = vpop.f32.mrb[0].mxu0
      %2061 = vmatprep.mubr.f32.mxu0 0.0
      %2062 = vmatmul.mubr.f32.gmra.mrb[0].mxu0 %v1970
      %v2063 = vpop.f32.mrb[0].mxu0
      %v2064 = vadd.f32 0.0, %v2063
      %v2065 = vpop.f32.mrb[0].mxu0
      %2066 = vmatprep.mubr.f32.mxu0 0.0
      %2067 = vmatmul.mubr.f32.gmra.mrb[0].mxu0 %v1973
      %v2068 = vpop.f32.mrb[0].mxu0
      %v2069 = vadd.f32 0.0, %v2068
      %v2070 = vpop.f32.mrb[0].mxu0
      %2071 = vmatprep.mubr.f32.mxu0 0.0
      %2072 = vmatmul.mubr.f32.gmra.mrb[0].mxu0 %v1976
      %v2073 = vpop.f32.mrb[0].mxu0
      %v2074 = vadd.f32 0.0, %v2073
      %v2075 = vpop.f32.mrb[0].mxu0
      %2076 = vmatprep.mubr.f32.mxu0 0.0
      %2077 = vmatmul.mubr.f32.gmra.mrb[0].mxu0 %v1979
      %v2078 = vpop.f32.mrb[0].mxu0
      %v2079 = vadd.f32 0.0, %v2078
      %v2080 = vpop.f32.mrb[0].mxu0
      %2081 = vmatprep.mubr.f32.mxu0 0.0
      %2082 = vmatmul.mubr.f32.gmra.mrb[0].mxu0 %v1982
      %v2083 = vpop.f32.mrb[0].mxu0
      %v2084 = vadd.f32 0.0, %v2083
      %v2085 = vpop.f32.mrb[0].mxu0
      %2086 = vmatprep.mubr.f32.mxu0 0.0
      %2087 = vmatmul.mubr.f32.gmra.mrb[0].mxu0 %v1985
      %v2088 = vpop.f32.mrb[0].mxu0
      %v2089 = vadd.f32 0.0, %v2088
      %v2090 = vpop.f32.mrb[0].mxu0
      %2091 = vdwg.mxu0
      %v2092 = vadd.f32 %v1724, %v2054
      %v2093 = vadd.f32 %v1725, %v2059
      %v2094 = vadd.f32 %v1726, %v2064
      %v2095 = vadd.f32 %v1727, %v2069
      %v2096 = vadd.f32 %v1728, %v2074
      %v2097 = vadd.f32 %v1729, %v2079
      %v2098 = vadd.f32 %v1730, %v2084
      %v2099 = vadd.f32 %v1731, %v2089
      %v2100 = vld [vmem:[%s605] sm:$0xff]
      %v2101 = vld [vmem:[%s605 + $0x8] sm:$0xff]
      %v2102 = vld [vmem:[%s605 + $0x10] sm:$0xff]
      %v2103 = vld [vmem:[%s605 + $0x18] sm:$0xff]
      %v2104 = vld [vmem:[%s605 + $0x20] sm:$0xff]
      %v2105 = vld [vmem:[%s605 + $0x28] sm:$0xff]
      %v2106 = vld [vmem:[%s605 + $0x30] sm:$0xff]
      %v2107 = vld [vmem:[%s605 + $0x38] sm:$0xff]
      %s2108 = scalar_lea.vmem %s3, 672
      %v2109 = vld [vmem:[%s2108] sm:$0xff]
      %v2110 = vld [vmem:[%s2108 + $0x8] sm:$0xff]
      %v2111 = vld [vmem:[%s2108 + $0x10] sm:$0xff]
      %v2112 = vld [vmem:[%s2108 + $0x18] sm:$0xff]
      %v2113 = vld [vmem:[%s2108 + $0x20] sm:$0xff]
      %v2114 = vld [vmem:[%s2108 + $0x28] sm:$0xff]
      %v2115 = vld [vmem:[%s2108 + $0x30] sm:$0xff]
      %v2116 = vld [vmem:[%s2108 + $0x38] sm:$0xff]
      %v2117 = vld [vmem:[%s2108 + $0x40] sm:$0xff]
      %v2118 = vld [vmem:[%s2108 + $0x48] sm:$0xff]
      %v2119 = vld [vmem:[%s2108 + $0x50] sm:$0xff]
      %v2120 = vld [vmem:[%s2108 + $0x58] sm:$0xff]
      %v2122 = vsel %vm627, %v2100, 0
      %v2125 = vsel %vm627, %v2101, 0
      %v2128 = vsel %vm627, %v2102, 0
      %v2131 = vsel %vm627, %v2103, 0
      %v2134 = vsel %vm627, %v2104, 0
      %v2137 = vsel %vm627, %v2105, 0
      %v2140 = vsel %vm627, %v2106, 0
      %v2143 = vsel %vm627, %v2107, 0
      %2145 = vmatprep.subr.mxu0 0.0
      %2146 = vmatpush1.msra.mxu0 %v2109
      %2147 = vmatprep.subr.mxu0 0.0
      %2148 = vmatpush1.msra.mxu0 %v2110
      %2149 = vmatprep.subr.mxu0 0.0
      %2150 = vmatpush1.msra.mxu0 %v2111
      %2151 = vmatprep.subr.mxu0 0.0
      %2152 = vmatpush1.msra.mxu0 %v2112
      %2153 = vmatprep.subr.mxu0 0.0
      %2154 = vmatpush1.msra.mxu0 %v2113
      %2155 = vmatprep.subr.mxu0 0.0
      %2156 = vmatpush1.msra.mxu0 %v2114
      %2157 = vmatprep.subr.mxu0 0.0
      %2158 = vmatpush1.msra.mxu0 %v2115
      %2159 = vmatprep.subr.mxu0 0.0
      %2160 = vmatpush1.msra.mxu0 %v2116
      %2161 = vmatprep.subr.mxu0 0.0
      %2162 = vmatpush1.msra.mxu0 %v2117
      %2163 = vmatprep.subr.mxu0 0.0
      %2164 = vmatpush1.msra.mxu0 %v2118
      %2165 = vmatprep.subr.mxu0 0.0
      %2166 = vmatpush1.msra.mxu0 %v2119
      %2167 = vmatprep.subr.mxu0 0.0
      %2168 = vmatpush1.msra.mxu0 %v2120
      %2169 = vmatprep.subr.mxu0 0.0
      %2170 = vmatpush1.msra.mxu0 0.0
      %2171 = vmatprep.subr.mxu0 0.0
      %2172 = vmatpush1.msra.mxu0 0.0
      %2173 = vmatprep.subr.mxu0 0.0
      %2174 = vmatpush1.msra.mxu0 0.0
      %2175 = vmatprep.subr.mxu0 0.0
      %2176 = vmatpush1.msra.mxu0 0.0
      %2177 = vmatprep.subr.mxu0 0.0
      %2178 = vmatpush1.msra.mxu0 0.0
      %2179 = vmatprep.subr.mxu0 0.0
      %2180 = vmatpush1.msra.mxu0 0.0
      %2181 = vmatprep.subr.mxu0 0.0
      %2182 = vmatpush1.msra.mxu0 0.0
      %2183 = vmatprep.subr.mxu0 0.0
      %2184 = vmatpush1.msra.mxu0 0.0
      %2185 = vmatprep.subr.mxu0 0.0
      %2186 = vmatpush1.msra.mxu0 0.0
      %2187 = vmatprep.subr.mxu0 0.0
      %2188 = vmatpush1.msra.mxu0 0.0
      %2189 = vmatprep.subr.mxu0 0.0
      %2190 = vmatpush1.msra.mxu0 0.0
      %2191 = vmatprep.subr.mxu0 0.0
      %2192 = vmatpush1.msra.mxu0 0.0
      %2193 = vmatprep.subr.mxu0 0.0
      %2194 = vmatpush1.msra.mxu0 0.0
      %2195 = vmatprep.subr.mxu0 0.0
      %2196 = vmatpush1.msra.mxu0 0.0
      %2197 = vmatprep.subr.mxu0 0.0
      %2198 = vmatpush1.msra.mxu0 0.0
      %2199 = vmatprep.subr.mxu0 0.0
      %2200 = vmatpush1.msra.mxu0 0.0
      %2201 = vmatprep.subr.mxu0 0.0
      %2202 = vmatpush1.msra.mxu0 0.0
      %2203 = vmatprep.subr.mxu0 0.0
      %2204 = vmatpush1.msra.mxu0 0.0
      %2205 = vmatprep.subr.mxu0 0.0
      %2206 = vmatpush1.msra.mxu0 0.0
      %2207 = vmatprep.subr.mxu0 0.0
      %2208 = vmatpush1.msra.mxu0 0.0
      %2209 = vmatprep.mubr.f32.mxu0 0.0
      %2210 = vmatmul.mubr.f32.gmra.mrb[0].mxu0 %v2122
      %v2211 = vpop.f32.mrb[0].mxu0
      %v2212 = vadd.f32 0.0, %v2211
      %v2213 = vpop.f32.mrb[0].mxu0
      %2214 = vmatprep.mubr.f32.mxu0 0.0
      %2215 = vmatmul.mubr.f32.gmra.mrb[0].mxu0 %v2125
      %v2216 = vpop.f32.mrb[0].mxu0
      %v2217 = vadd.f32 0.0, %v2216
      %v2218 = vpop.f32.mrb[0].mxu0
      %2219 = vmatprep.mubr.f32.mxu0 0.0
      %2220 = vmatmul.mubr.f32.gmra.mrb[0].mxu0 %v2128
      %v2221 = vpop.f32.mrb[0].mxu0
      %v2222 = vadd.f32 0.0, %v2221
      %v2223 = vpop.f32.mrb[0].mxu0
      %2224 = vmatprep.mubr.f32.mxu0 0.0
      %2225 = vmatmul.mubr.f32.gmra.mrb[0].mxu0 %v2131
      %v2226 = vpop.f32.mrb[0].mxu0
      %v2227 = vadd.f32 0.0, %v2226
      %v2228 = vpop.f32.mrb[0].mxu0
      %2229 = vmatprep.mubr.f32.mxu0 0.0
      %2230 = vmatmul.mubr.f32.gmra.mrb[0].mxu0 %v2134
      %v2231 = vpop.f32.mrb[0].mxu0
      %v2232 = vadd.f32 0.0, %v2231
      %v2233 = vpop.f32.mrb[0].mxu0
      %2234 = vmatprep.mubr.f32.mxu0 0.0
      %2235 = vmatmul.mubr.f32.gmra.mrb[0].mxu0 %v2137
      %v2236 = vpop.f32.mrb[0].mxu0
      %v2237 = vadd.f32 0.0, %v2236
      %v2238 = vpop.f32.mrb[0].mxu0
      %2239 = vmatprep.mubr.f32.mxu0 0.0
      %2240 = vmatmul.mubr.f32.gmra.mrb[0].mxu0 %v2140
      %v2241 = vpop.f32.mrb[0].mxu0
      %v2242 = vadd.f32 0.0, %v2241
      %v2243 = vpop.f32.mrb[0].mxu0
      %2244 = vmatprep.mubr.f32.mxu0 0.0
      %2245 = vmatmul.mubr.f32.gmra.mrb[0].mxu0 %v2143
      %v2246 = vpop.f32.mrb[0].mxu0
      %v2247 = vadd.f32 0.0, %v2246
      %v2248 = vpop.f32.mrb[0].mxu0
      %2249 = vdwg.mxu0
      %v2250 = vadd.f32 %v2092, %v2212
      %v2251 = vadd.f32 %v2093, %v2217
      %v2252 = vadd.f32 %v2094, %v2222
      %v2253 = vadd.f32 %v2095, %v2227
      %v2254 = vadd.f32 %v2096, %v2232
      %v2255 = vadd.f32 %v2097, %v2237
      %v2256 = vadd.f32 %v2098, %v2242
      %v2257 = vadd.f32 %v2099, %v2247
      %v2258 = vld [vmem:[%s886] sm:$0xff]
      %v2259 = vld [vmem:[%s886 + $0x8] sm:$0xff]
      %v2260 = vld [vmem:[%s886 + $0x10] sm:$0xff]
      %v2261 = vld [vmem:[%s886 + $0x18] sm:$0xff]
      %v2262 = vld [vmem:[%s886 + $0x20] sm:$0xff]
      %v2263 = vld [vmem:[%s886 + $0x28] sm:$0xff]
      %v2264 = vld [vmem:[%s886 + $0x30] sm:$0xff]
      %v2265 = vld [vmem:[%s886 + $0x38] sm:$0xff]
      %s2266 = scalar_lea.vmem %s3, 768
      %v2267 = vld [vmem:[%s2266] sm:$0xff]
      %v2268 = vld [vmem:[%s2266 + $0x8] sm:$0xff]
      %v2269 = vld [vmem:[%s2266 + $0x10] sm:$0xff]
      %v2270 = vld [vmem:[%s2266 + $0x18] sm:$0xff]
      %v2271 = vld [vmem:[%s2266 + $0x20] sm:$0xff]
      %v2272 = vld [vmem:[%s2266 + $0x28] sm:$0xff]
      %v2273 = vld [vmem:[%s2266 + $0x30] sm:$0xff]
      %v2274 = vld [vmem:[%s2266 + $0x38] sm:$0xff]
      %v2275 = vld [vmem:[%s2266 + $0x40] sm:$0xff]
      %v2276 = vld [vmem:[%s2266 + $0x48] sm:$0xff]
      %v2277 = vld [vmem:[%s2266 + $0x50] sm:$0xff]
      %v2278 = vld [vmem:[%s2266 + $0x58] sm:$0xff]
      %v2280 = vsel %vm627, %v2258, 0
      %v2283 = vsel %vm627, %v2259, 0
      %v2286 = vsel %vm627, %v2260, 0
      %v2289 = vsel %vm627, %v2261, 0
      %v2292 = vsel %vm627, %v2262, 0
      %v2295 = vsel %vm627, %v2263, 0
      %v2298 = vsel %vm627, %v2264, 0
      %v2301 = vsel %vm627, %v2265, 0
      %2303 = vmatprep.subr.mxu0 0.0
      %2304 = vmatpush1.msra.mxu0 %v2267
      %2305 = vmatprep.subr.mxu0 0.0
      %2306 = vmatpush1.msra.mxu0 %v2268
      %2307 = vmatprep.subr.mxu0 0.0
      %2308 = vmatpush1.msra.mxu0 %v2269
      %2309 = vmatprep.subr.mxu0 0.0
      %2310 = vmatpush1.msra.mxu0 %v2270
      %2311 = vmatprep.subr.mxu0 0.0
      %2312 = vmatpush1.msra.mxu0 %v2271
      %2313 = vmatprep.subr.mxu0 0.0
      %2314 = vmatpush1.msra.mxu0 %v2272
      %2315 = vmatprep.subr.mxu0 0.0
      %2316 = vmatpush1.msra.mxu0 %v2273
      %2317 = vmatprep.subr.mxu0 0.0
      %2318 = vmatpush1.msra.mxu0 %v2274
      %2319 = vmatprep.subr.mxu0 0.0
      %2320 = vmatpush1.msra.mxu0 %v2275
      %2321 = vmatprep.subr.mxu0 0.0
      %2322 = vmatpush1.msra.mxu0 %v2276
      %2323 = vmatprep.subr.mxu0 0.0
      %2324 = vmatpush1.msra.mxu0 %v2277
      %2325 = vmatprep.subr.mxu0 0.0
      %2326 = vmatpush1.msra.mxu0 %v2278
      %2327 = vmatprep.subr.mxu0 0.0
      %2328 = vmatpush1.msra.mxu0 0.0
      %2329 = vmatprep.subr.mxu0 0.0
      %2330 = vmatpush1.msra.mxu0 0.0
      %2331 = vmatprep.subr.mxu0 0.0
      %2332 = vmatpush1.msra.mxu0 0.0
      %2333 = vmatprep.subr.mxu0 0.0
      %2334 = vmatpush1.msra.mxu0 0.0
      %2335 = vmatprep.subr.mxu0 0.0
      %2336 = vmatpush1.msra.mxu0 0.0
      %2337 = vmatprep.subr.mxu0 0.0
      %2338 = vmatpush1.msra.mxu0 0.0
      %2339 = vmatprep.subr.mxu0 0.0
      %2340 = vmatpush1.msra.mxu0 0.0
      %2341 = vmatprep.subr.mxu0 0.0
      %2342 = vmatpush1.msra.mxu0 0.0
      %2343 = vmatprep.subr.mxu0 0.0
      %2344 = vmatpush1.msra.mxu0 0.0
      %2345 = vmatprep.subr.mxu0 0.0
      %2346 = vmatpush1.msra.mxu0 0.0
      %2347 = vmatprep.subr.mxu0 0.0
      %2348 = vmatpush1.msra.mxu0 0.0
      %2349 = vmatprep.subr.mxu0 0.0
      %2350 = vmatpush1.msra.mxu0 0.0
      %2351 = vmatprep.subr.mxu0 0.0
      %2352 = vmatpush1.msra.mxu0 0.0
      %2353 = vmatprep.subr.mxu0 0.0
      %2354 = vmatpush1.msra.mxu0 0.0
      %2355 = vmatprep.subr.mxu0 0.0
      %2356 = vmatpush1.msra.mxu0 0.0
      %2357 = vmatprep.subr.mxu0 0.0
      %2358 = vmatpush1.msra.mxu0 0.0
      %2359 = vmatprep.subr.mxu0 0.0
      %2360 = vmatpush1.msra.mxu0 0.0
      %2361 = vmatprep.subr.mxu0 0.0
      %2362 = vmatpush1.msra.mxu0 0.0
      %2363 = vmatprep.subr.mxu0 0.0
      %2364 = vmatpush1.msra.mxu0 0.0
      %2365 = vmatprep.subr.mxu0 0.0
      %2366 = vmatpush1.msra.mxu0 0.0
      %2367 = vmatprep.mubr.f32.mxu0 0.0
      %2368 = vmatmul.mubr.f32.gmra.mrb[0].mxu0 %v2280
      %v2369 = vpop.f32.mrb[0].mxu0
      %v2370 = vadd.f32 0.0, %v2369
      %v2371 = vpop.f32.mrb[0].mxu0
      %2372 = vmatprep.mubr.f32.mxu0 0.0
      %2373 = vmatmul.mubr.f32.gmra.mrb[0].mxu0 %v2283
      %v2374 = vpop.f32.mrb[0].mxu0
      %v2375 = vadd.f32 0.0, %v2374
      %v2376 = vpop.f32.mrb[0].mxu0
      %2377 = vmatprep.mubr.f32.mxu0 0.0
      %2378 = vmatmul.mubr.f32.gmra.mrb[0].mxu0 %v2286
      %v2379 = vpop.f32.mrb[0].mxu0
      %v2380 = vadd.f32 0.0, %v2379
      %v2381 = vpop.f32.mrb[0].mxu0
      %2382 = vmatprep.mubr.f32.mxu0 0.0
      %2383 = vmatmul.mubr.f32.gmra.mrb[0].mxu0 %v2289
      %v2384 = vpop.f32.mrb[0].mxu0
      %v2385 = vadd.f32 0.0, %v2384
      %v2386 = vpop.f32.mrb[0].mxu0
      %2387 = vmatprep.mubr.f32.mxu0 0.0
      %2388 = vmatmul.mubr.f32.gmra.mrb[0].mxu0 %v2292
      %v2389 = vpop.f32.mrb[0].mxu0
      %v2390 = vadd.f32 0.0, %v2389
      %v2391 = vpop.f32.mrb[0].mxu0
      %2392 = vmatprep.mubr.f32.mxu0 0.0
      %2393 = vmatmul.mubr.f32.gmra.mrb[0].mxu0 %v2295
      %v2394 = vpop.f32.mrb[0].mxu0
      %v2395 = vadd.f32 0.0, %v2394
      %v2396 = vpop.f32.mrb[0].mxu0
      %2397 = vmatprep.mubr.f32.mxu0 0.0
      %2398 = vmatmul.mubr.f32.gmra.mrb[0].mxu0 %v2298
      %v2399 = vpop.f32.mrb[0].mxu0
      %v2400 = vadd.f32 0.0, %v2399
      %v2401 = vpop.f32.mrb[0].mxu0
      %2402 = vmatprep.mubr.f32.mxu0 0.0
      %2403 = vmatmul.mubr.f32.gmra.mrb[0].mxu0 %v2301
      %v2404 = vpop.f32.mrb[0].mxu0
      %v2405 = vadd.f32 0.0, %v2404
      %v2406 = vpop.f32.mrb[0].mxu0
      %2407 = vdwg.mxu0
      %v2408 = vadd.f32 %v2250, %v2370
      %v2409 = vadd.f32 %v2251, %v2375
      %v2410 = vadd.f32 %v2252, %v2380
      %v2411 = vadd.f32 %v2253, %v2385
      %v2412 = vadd.f32 %v2254, %v2390
      %v2413 = vadd.f32 %v2255, %v2395
      %v2414 = vadd.f32 %v2256, %v2400
      %v2415 = vadd.f32 %v2257, %v2405
      %v2416 = vld [vmem:[%s4] sm:$0x1]
      %v2418 = vlaneseq
      %v2419 = vshrl.u32 %v2418, 7
      %v2420 = vsub.s32 0, %v2419
      %v2421 = vrot.slane %v2416, %v2420
      %v2423 = vmul.f32 %v2408, %v2421
      %v2424 = vmul.f32 %v2409, %v2421
      %v2425 = vmul.f32 %v2410, %v2421
      %v2426 = vmul.f32 %v2411, %v2421
      %v2427 = vmul.f32 %v2412, %v2421
      %v2428 = vmul.f32 %v2413, %v2421
      %v2429 = vmul.f32 %v2414, %v2421
      %v2430 = vmul.f32 %v2415, %v2421
      %v2431 = vld [vmem:[%s5] sm:$0x1]
      %v2433 = vlaneseq
      %v2434 = vshrl.u32 %v2433, 7
      %v2435 = vsub.s32 0, %v2434
      %v2436 = vrot.slane %v2431, %v2435
      %v2438 = vadd.f32 %v2423, %v2436
      %v2439 = vadd.f32 %v2424, %v2436
      %v2440 = vadd.f32 %v2425, %v2436
      %v2441 = vadd.f32 %v2426, %v2436
      %v2442 = vadd.f32 %v2427, %v2436
      %v2443 = vadd.f32 %v2428, %v2436
      %v2444 = vadd.f32 %v2429, %v2436
      %v2445 = vadd.f32 %v2430, %v2436
      %v2446 = vmax.f32 %v2438, 0.0
      %v2447 = vmax.f32 %v2439, 0.0
      %v2448 = vmax.f32 %v2440, 0.0
      %v2449 = vmax.f32 %v2441, 0.0
      %v2450 = vmax.f32 %v2442, 0.0
      %v2451 = vmax.f32 %v2443, 0.0
      %v2452 = vmax.f32 %v2444, 0.0
      %v2453 = vmax.f32 %v2445, 0.0
      %2454 = vst.msk [vmem:[%s369] sm:$0xff] %vm390, %v2446
      %2455 = vst.msk [vmem:[%s369 + $0x8] sm:$0xff] %vm390, %v2447
      %2456 = vst.msk [vmem:[%s369 + $0x10] sm:$0xff] %vm390, %v2448
      %2457 = vst.msk [vmem:[%s369 + $0x18] sm:$0xff] %vm390, %v2449
      %2458 = vst.msk [vmem:[%s369 + $0x20] sm:$0xff] %vm390, %v2450
      %2459 = vst.msk [vmem:[%s369 + $0x28] sm:$0xff] %vm390, %v2451
      %2460 = vst.msk [vmem:[%s369 + $0x30] sm:$0xff] %vm390, %v2452
      %2461 = vst.msk [vmem:[%s369 + $0x38] sm:$0xff] %vm390, %v2453
      %p2462 = scmp.lt.s32.totalorder %s21, 1
      %s2463 = scalar_select %p2462, %s21, 1
      %p2464 = scmp.lt.s32.totalorder %s22, 3
      %s2465 = scalar_select %p2464, %s22, 3
      %s2466 = smul.addr %s2465, 8
      %s2467 = smul.addr %s2463, 32
      %s2468 = sadd.s32 %s2466, %s2467
      %s2469 = smul.addr %s2468, 8
      %s2470 = scalar_lea.vmem %s6, %s2469
      // Predicated region
      $region45: #{basic_block_forward.2} parent=43 // pred_check
        %p2471 = pneg %p200
      $region46: #{basic_block_forward.2} parent=43 // pred_check_branch
        %2473 = sbr.rel (%p2471) target = $region48
      $region47: #{basic_block_forward.2} parent=43 // pred_region
        _
      $region48: #{basic_block_forward.2} parent=43 // pred_fallthru
        _
    $region44: #{basic_block_forward.2} parent=5 // pred_fallthru
      _
    %p2474 = scmp.le.s32.totalorder 2, %s12
    // Predicated region
    $region49: #{basic_block_forward.2} parent=5 // pred_check
      %p2475 = pneg %p2474
    $region50: #{basic_block_forward.2} parent=5 // pred_check_branch
      %2477 = sbr.rel (%p2475) target = $region52
    $region51: #{basic_block_forward.2} parent=5 // pred_region
      %s2478 = ssub.s32 %s12, 2
      // Predicated region
      $region53: #{basic_block_forward.2} parent=51 // pred_check
        %p2479 = pneg %p206
      $region54: #{basic_block_forward.2} parent=51 // pred_check_branch
        %2481 = sbr.rel (%p2479) target = $region56
      $region55: #{basic_block_forward.2} parent=51 // pred_region
        %p2482 = scmp.lt.s32.totalorder %s23, 1
        %s2483 = scalar_select %p2482, %s23, 1
        %p2484 = scmp.lt.s32.totalorder %s24, 3
        %s2485 = scalar_select %p2484, %s24, 3
        %s2486 = smul.addr %s2485, 8
        %s2487 = smul.addr %s2483, 32
        %s2488 = sadd.s32 %s2486, %s2487
        %s2489 = smul.addr %s2488, 8
        %s2490 = scalar_lea.vmem %s6, %s2489
      $region56: #{basic_block_forward.2} parent=51 // pred_fallthru
        _
    $region52: #{basic_block_forward.2} parent=5 // pred_fallthru
      _
  $region6: #{basic_block_forward.2} parent=0 // loop_footer
    %s16 = sadd.s32 1, %s12
  $region7: #{basic_block_forward.2} parent=0 // loop_footer_branch
    %11 = sbr.rel target = $region3
  $region8: #{basic_block_forward.2} parent=0 // loop_exit
    _

// kernel: basic_block_forward.3
$region0: #{basic_block_forward.3}
  #allocation0 [shape = 'u32[]', space=smem, size = 0x4, offset = 0x4, fixed_abs, tag = 'smem constant byte address 0x4 - core index']
  #allocation1 [shape = 'u32[144,128]{1,0:T(1,128)}', space=vmem, size = 0x12000, scoped, tag = 'internal scratch']
  #allocation2 [shape = 'f32[2,10,8,96]{3,2,1,0:T(8,128)}', space=vmem, size = 0x14000, scoped, tag = 'scratch operand']
  %s0 = inlined_call_operand.vmem [shape: f32[2,6,10,10,32], index: 0, kind: input, shape index: {}, may-alias: {0,1,2}]
  %s1 = inlined_call_operand.vmem [shape: f32[2,6,10,10,32], index: 1, kind: input, shape index: {}, may-alias: {0,1,2}]
  %s2 = inlined_call_operand.vmem [shape: f32[2,6,10,10,32], index: 2, kind: input, shape index: {}, may-alias: {0,1,2}]
  %s3 = inlined_call_operand.vmem [shape: f32[9,96,32], index: 3, kind: input, shape index: {}]
  %s4 = inlined_call_operand.vmem [shape: f32[1,32], index: 4, kind: input, shape index: {}]
  %s5 = inlined_call_operand.vmem [shape: f32[1,32], index: 5, kind: input, shape index: {}]
  %s6 = inlined_call_operand.vmem [shape: f32[2,4,8,8,32], index: 6, kind: input, shape index: {}]
  %s7 = inlined_call_operand.hbm [shape: f32[2,4,8,8,32], index: 7, kind: output, shape index: {}]
  %s8 = sld [smem:[#allocation0]]
  $region61: #{basic_block_forward.3} parent=0
    _
  %s10 = ssub.s32 1, %s8
  %s11 = scalar_select 0, %s10, %s8
  $region1: #{basic_block_forward.3} parent=0
    #allocation3 [shape = 'u8[65536]{0}', space=vmem, size = 0x10000, scoped, tag = 'output window, operand 0']
    #allocation4 [shape = 's32[2]{0}', space=sflag, size = 0x8, scoped, tag = 'scoped memory for basic_block_forward.3']
    %12 = vsyncpa [#allocation4], 0
    %s13 = scalar_lea.sflag [#allocation4], 1
    %14 = vsyncpa %s13, 0
    loop: start=0, step=1, limit=10
    $region2: #{basic_block_forward.3} parent=1 // loop_pre_header
      _
    $region3: #{basic_block_forward.3} parent=1 // loop_header
      %s16 = sphi 0, %s20
      %p17 = scmp.ge.s32.totalorder %s16, 10
      %s23 = sphi 0, %s35
      %s24 = sphi 0, %s31
      %s25 = sphi 0, %s23
      %s26 = sphi 0, %s24
      %s27 = sphi 0, %s25
      %s28 = sphi 0, %s26
      %s40 = sphi 0, %s42
      %s43 = sphi 0, %s40
      %s44 = sphi 0, %s43
      %s60 = sphi 0, %s44
      %s70 = sphi 0, %s72
      %s73 = sphi 0, %s70
      %s74 = sphi 0, %s73
      %s90 = sphi 0, %s74
      %s100 = sphi 0, %s102
      %s103 = sphi 0, %s100
      %s104 = sphi 0, %s103
      %s120 = sphi 0, %s104
      %s124 = sphi 0, %s124
      %s126 = sphi 0, %s124
      %s127 = sphi 0, %s126
      %s141 = sphi 0, %s127
      %s145 = sphi 0, %s145
      %s147 = sphi 0, %s145
      %s148 = sphi 0, %s147
      %s162 = sphi 0, %s148
      %s166 = sphi 0, %s166
      %s168 = sphi 0, %s166
      %s169 = sphi 0, %s168
      %s183 = sphi 0, %s169
      %s191 = sphi 0, %s193
      %s194 = sphi 0, %s191
      %s195 = sphi 0, %s194
      %s211 = sphi 0, %s195
      %s219 = sphi 0, %s221
      %s222 = sphi 0, %s219
      %s223 = sphi 0, %s222
      %s239 = sphi 0, %s223
    $region4: #{basic_block_forward.3} parent=1 // loop_header_branch
      %19 = sbr.rel (%p17) target = $region8
    $region5: #{basic_block_forward.3} parent=1 // loop_body
      %s21 = ssub.s32 %s16, 1
      %s22 = ssub.s32 %s16, 2
      %s29 = sadd.s32 1, %s24
      %p30 = scmp.ge.s32.totalorder %s29, 4
      %s31 = scalar_select %p30, 0, %s29
      %s32 = sadd.s32 1, %s23
      %s33 = scalar_select %p30, %s32, %s23
      %p34 = scmp.ge.s32.totalorder %s33, 2
      %s35 = scalar_select %p34, 0, %s33
      %s36 = ssub.s32 %s23, %s35
      %s37 = ssub.s32 %s24, %s31
      %s38 = sor.u32 %s36, %s37
      %p39 = scmp.eq.s32.totalorder %s38, 0
      %s41 = sadd.s32 %s40, 1
      %s42 = scalar_select %p39, %s40, %s41
      %p45 = pneg %p39
      %p46 = scmp.eq.s32.totalorder %s16, 7
      %p47 = por %p45, %p46
      %p48 = scmp.ne.s32.totalorder %s40, %s43
      %p49 = scmp.eq.s32.totalorder %s16, 0
      %p50 = por %p48, %p49
      %p51 = scmp.ne.s32.totalorder %s40, %s43
      %p52 = scmp.eq.s32.totalorder %s21, 7
      %p53 = por %p51, %p52
      %p54 = scmp.ne.s32.totalorder %s43, %s44
      %p55 = scmp.eq.s32.totalorder %s21, 0
      %p56 = por %p54, %p55
      %p57 = scmp.ne.s32.totalorder %s43, %s44
      %p58 = scmp.eq.s32.totalorder %s22, 7
      %p59 = por %p57, %p58
      %p61 = scmp.ne.s32.totalorder %s44, %s60
      %p62 = scmp.eq.s32.totalorder %s22, 0
      %p63 = por %p61, %p62
      %s64 = sadd.s32 %s24, 1
      %s65 = sadd.s32 %s31, 1
      %s66 = ssub.s32 %s23, %s35
      %s67 = ssub.s32 %s64, %s65
      %s68 = sor.u32 %s66, %s67
      %p69 = scmp.eq.s32.totalorder %s68, 0
      %s71 = sadd.s32 %s70, 1
      %s72 = scalar_select %p69, %s70, %s71
      %p75 = pneg %p69
      %p76 = scmp.eq.s32.totalorder %s16, 7
      %p77 = por %p75, %p76
      %p78 = scmp.ne.s32.totalorder %s70, %s73
      %p79 = scmp.eq.s32.totalorder %s16, 0
      %p80 = por %p78, %p79
      %p81 = scmp.ne.s32.totalorder %s70, %s73
      %p82 = scmp.eq.s32.totalorder %s21, 7
      %p83 = por %p81, %p82
      %p84 = scmp.ne.s32.totalorder %s73, %s74
      %p85 = scmp.eq.s32.totalorder %s21, 0
      %p86 = por %p84, %p85
      %p87 = scmp.ne.s32.totalorder %s73, %s74
      %p88 = scmp.eq.s32.totalorder %s22, 7
      %p89 = por %p87, %p88
      %p91 = scmp.ne.s32.totalorder %s74, %s90
      %p92 = scmp.eq.s32.totalorder %s22, 0
      %p93 = por %p91, %p92
      %s94 = sadd.s32 %s24, 2
      %s95 = sadd.s32 %s31, 2
      %s96 = ssub.s32 %s23, %s35
      %s97 = ssub.s32 %s94, %s95
      %s98 = sor.u32 %s96, %s97
      %p99 = scmp.eq.s32.totalorder %s98, 0
      %s101 = sadd.s32 %s100, 1
      %s102 = scalar_select %p99, %s100, %s101
      %p105 = pneg %p99
      %p106 = scmp.eq.s32.totalorder %s16, 7
      %p107 = por %p105, %p106
      %p108 = scmp.ne.s32.totalorder %s100, %s103
      %p109 = scmp.eq.s32.totalorder %s16, 0
      %p110 = por %p108, %p109
      %p111 = scmp.ne.s32.totalorder %s100, %s103
      %p112 = scmp.eq.s32.totalorder %s21, 7
      %p113 = por %p111, %p112
      %p114 = scmp.ne.s32.totalorder %s103, %s104
      %p115 = scmp.eq.s32.totalorder %s21, 0
      %p116 = por %p114, %p115
      %p117 = scmp.ne.s32.totalorder %s103, %s104
      %p118 = scmp.eq.s32.totalorder %s22, 7
      %p119 = por %p117, %p118
      %p121 = scmp.ne.s32.totalorder %s104, %s120
      %p122 = scmp.eq.s32.totalorder %s22, 0
      %p123 = por %p121, %p122
      %s125 = sadd.s32 %s124, 1
      %p128 = scmp.eq.s32.totalorder %s16, 7
      %p129 = scmp.ne.s32.totalorder %s124, %s126
      %p130 = scmp.eq.s32.totalorder %s16, 0
      %p131 = por %p129, %p130
      %p132 = scmp.ne.s32.totalorder %s124, %s126
      %p133 = scmp.eq.s32.totalorder %s21, 7
      %p134 = por %p132, %p133
      %p135 = scmp.ne.s32.totalorder %s126, %s127
      %p136 = scmp.eq.s32.totalorder %s21, 0
      %p137 = por %p135, %p136
      %p138 = scmp.ne.s32.totalorder %s126, %s127
      %p139 = scmp.eq.s32.totalorder %s22, 7
      %p140 = por %p138, %p139
      %p142 = scmp.ne.s32.totalorder %s127, %s141
      %p143 = scmp.eq.s32.totalorder %s22, 0
      %p144 = por %p142, %p143
      %s146 = sadd.s32 %s145, 1
      %p149 = scmp.eq.s32.totalorder %s16, 7
      %p150 = scmp.ne.s32.totalorder %s145, %s147
      %p151 = scmp.eq.s32.totalorder %s16, 0
      %p152 = por %p150, %p151
      %p153 = scmp.ne.s32.totalorder %s145, %s147
      %p154 = scmp.eq.s32.totalorder %s21, 7
      %p155 = por %p153, %p154
      %p156 = scmp.ne.s32.totalorder %s147, %s148
      %p157 = scmp.eq.s32.totalorder %s21, 0
      %p158 = por %p156, %p157
      %p159 = scmp.ne.s32.totalorder %s147, %s148
      %p160 = scmp.eq.s32.totalorder %s22, 7
      %p161 = por %p159, %p160
      %p163 = scmp.ne.s32.totalorder %s148, %s162
      %p164 = scmp.eq.s32.totalorder %s22, 0
      %p165 = por %p163, %p164
      %s167 = sadd.s32 %s166, 1
      %p170 = scmp.eq.s32.totalorder %s16, 7
      %p171 = scmp.ne.s32.totalorder %s166, %s168
      %p172 = scmp.eq.s32.totalorder %s16, 0
      %p173 = por %p171, %p172
      %p174 = scmp.ne.s32.totalorder %s166, %s168
      %p175 = scmp.eq.s32.totalorder %s21, 7
      %p176 = por %p174, %p175
      %p177 = scmp.ne.s32.totalorder %s168, %s169
      %p178 = scmp.eq.s32.totalorder %s21, 0
      %p179 = por %p177, %p178
      %p180 = scmp.ne.s32.totalorder %s168, %s169
      %p181 = scmp.eq.s32.totalorder %s22, 7
      %p182 = por %p180, %p181
      %p184 = scmp.ne.s32.totalorder %s169, %s183
      %p185 = scmp.eq.s32.totalorder %s22, 0
      %p186 = por %p184, %p185
      %s187 = ssub.s32 %s23, %s35
      %s188 = ssub.s32 %s24, %s31
      %s189 = sor.u32 %s187, %s188
      %p190 = scmp.eq.s32.totalorder %s189, 0
      %s192 = sadd.s32 %s191, 1
      %s193 = scalar_select %p190, %s191, %s192
      %p196 = pneg %p190
      %p197 = scmp.eq.s32.totalorder %s16, 7
      %p198 = por %p196, %p197
      %p199 = scmp.ne.s32.totalorder %s191, %s194
      %p200 = scmp.eq.s32.totalorder %s16, 0
      %p201 = por %p199, %p200
      %p202 = scmp.ne.s32.totalorder %s191, %s194
      %p203 = scmp.eq.s32.totalorder %s21, 7
      %p204 = por %p202, %p203
      %p205 = scmp.ne.s32.totalorder %s194, %s195
      %p206 = scmp.eq.s32.totalorder %s21, 0
      %p207 = por %p205, %p206
      %p208 = scmp.ne.s32.totalorder %s194, %s195
      %p209 = scmp.eq.s32.totalorder %s22, 7
      %p210 = por %p208, %p209
      %p212 = scmp.ne.s32.totalorder %s195, %s211
      %p213 = scmp.eq.s32.totalorder %s22, 0
      %p214 = por %p212, %p213
      %s215 = ssub.s32 %s23, %s35
      %s216 = ssub.s32 %s24, %s31
      %s217 = sor.u32 %s215, %s216
      %p218 = scmp.eq.s32.totalorder %s217, 0
      %s220 = sadd.s32 %s219, 1
      %s221 = scalar_select %p218, %s219, %s220
      %p224 = pneg %p218
      %p225 = scmp.eq.s32.totalorder %s16, 7
      %p226 = por %p224, %p225
      %p227 = scmp.ne.s32.totalorder %s219, %s222
      %p228 = scmp.eq.s32.totalorder %s16, 0
      %p229 = por %p227, %p228
      %p230 = scmp.ne.s32.totalorder %s219, %s222
      %p231 = scmp.eq.s32.totalorder %s21, 7
      %p232 = por %p230, %p231
      %p233 = scmp.ne.s32.totalorder %s222, %s223
      %p234 = scmp.eq.s32.totalorder %s21, 0
      %p235 = por %p233, %p234
      %p236 = scmp.ne.s32.totalorder %s222, %s223
      %p237 = scmp.eq.s32.totalorder %s22, 7
      %p238 = por %p236, %p237
      %p240 = scmp.ne.s32.totalorder %s223, %s239
      %p241 = scmp.eq.s32.totalorder %s22, 0
      %p242 = por %p240, %p241
      %p243 = scmp.le.s32.totalorder 1, %s16
      %p244 = scmp.lt.s32.totalorder %s16, 9
      %p245 = pnand %p243, %p244
      %p246 = pneg %p245
      // Predicated region
      $region9: #{basic_block_forward.3} parent=5 // pred_check
        _
      $region10: #{basic_block_forward.3} parent=5 // pred_check_branch
        %248 = sbr.rel (%p245) target = $region12
      $region11: #{basic_block_forward.3} parent=5 // pred_region
        %s249 = ssub.s32 %s16, 1
        // Predicated region
        $region13: #{basic_block_forward.3} parent=11 // pred_check
          %p250 = pneg %p137
        $region14: #{basic_block_forward.3} parent=11 // pred_check_branch
          %252 = sbr.rel (%p250) target = $region16
        $region15: #{basic_block_forward.3} parent=11 // pred_region
          _
        $region16: #{basic_block_forward.3} parent=11 // pred_fallthru
          _
        // Predicated region
        $region17: #{basic_block_forward.3} parent=11 // pred_check
          %p253 = pneg %p158
        $region18: #{basic_block_forward.3} parent=11 // pred_check_branch
          %255 = sbr.rel (%p253) target = $region20
        $region19: #{basic_block_forward.3} parent=11 // pred_region
          _
        $region20: #{basic_block_forward.3} parent=11 // pred_fallthru
          _
        // Predicated region
        $region21: #{basic_block_forward.3} parent=11 // pred_check
          %p256 = pneg %p179
        $region22: #{basic_block_forward.3} parent=11 // pred_check_branch
          %258 = sbr.rel (%p256) target = $region24
        $region23: #{basic_block_forward.3} parent=11 // pred_region
          _
        $region24: #{basic_block_forward.3} parent=11 // pred_fallthru
          _
      $region12: #{basic_block_forward.3} parent=5 // pred_fallthru
        _
      %p259 = scmp.lt.s32.totalorder %s16, 8
      // Predicated region
      $region25: #{basic_block_forward.3} parent=5 // pred_check
        %p260 = pneg %p259
      $region26: #{basic_block_forward.3} parent=5 // pred_check_branch
        %262 = sbr.rel (%p260) target = $region28
      $region27: #{basic_block_forward.3} parent=5 // pred_region
        // Predicated region
        $region29: #{basic_block_forward.3} parent=27 // pred_check
          %p263 = pneg %p50
        $region30: #{basic_block_forward.3} parent=27 // pred_check_branch
          %265 = sbr.rel (%p263) target = $region32
        $region31: #{basic_block_forward.3} parent=27 // pred_region
          %p266 = scmp.lt.s32.totalorder %s23, 1
          %s267 = scalar_select %p266, %s23, 1
          %p268 = scmp.lt.s32.totalorder %s24, 5
          %s269 = scalar_select %p268, %s24, 5
          %s270 = smul.addr %s269, 20
          %s271 = smul.addr %s267, 120
          %s272 = sadd.s32 %s270, %s271
          %s273 = smul.addr %s272, 8
          %s274 = scalar_lea.vmem %s0, %s273
        $region32: #{basic_block_forward.3} parent=27 // pred_fallthru
          _
        // Predicated region
        $region33: #{basic_block_forward.3} parent=27 // pred_check
          %p275 = pneg %p80
        $region34: #{basic_block_forward.3} parent=27 // pred_check_branch
          %277 = sbr.rel (%p275) target = $region36
        $region35: #{basic_block_forward.3} parent=27 // pred_region
          %s278 = sadd.s32 %s24, 1
          %p279 = scmp.lt.s32.totalorder %s23, 1
          %s280 = scalar_select %p279, %s23, 1
          %p281 = scmp.lt.s32.totalorder %s278, 5
          %s282 = scalar_select %p281, %s278, 5
          %s283 = smul.addr %s282, 20
          %s284 = smul.addr %s280, 120
          %s285 = sadd.s32 %s283, %s284
          %s286 = smul.addr %s285, 8
          %s287 = scalar_lea.vmem %s1, %s286
          %s288 = sadd.s32 %s24, 1
        $region36: #{basic_block_forward.3} parent=27 // pred_fallthru
          _
        // Predicated region
        $region37: #{basic_block_forward.3} parent=27 // pred_check
          %p289 = pneg %p110
        $region38: #{basic_block_forward.3} parent=27 // pred_check_branch
          %291 = sbr.rel (%p289) target = $region40
        $region39: #{basic_block_forward.3} parent=27 // pred_region
          %s292 = sadd.s32 %s24, 2
          %p293 = scmp.lt.s32.totalorder %s23, 1
          %s294 = scalar_select %p293, %s23, 1
          %p295 = scmp.lt.s32.totalorder %s292, 5
          %s296 = scalar_select %p295, %s292, 5
          %s297 = smul.addr %s296, 20
          %s298 = smul.addr %s294, 120
          %s299 = sadd.s32 %s297, %s298
          %s300 = smul.addr %s299, 8
          %s301 = scalar_lea.vmem %s2, %s300
          %s302 = sadd.s32 %s24, 2
        $region40: #{basic_block_forward.3} parent=27 // pred_fallthru
          _
        // Predicated region
        $region41: #{basic_block_forward.3} parent=27 // pred_check
          %p303 = pneg %p201
        $region42: #{basic_block_forward.3} parent=27 // pred_check_branch
          %305 = sbr.rel (%p303) target = $region44
        $region43: #{basic_block_forward.3} parent=27 // pred_region
          %p306 = scmp.lt.s32.totalorder %s23, 1
          %s307 = scalar_select %p306, %s23, 1
          %p308 = scmp.lt.s32.totalorder %s24, 3
          %s309 = scalar_select %p308, %s24, 3
          %s310 = smul.addr %s309, 8
          %s311 = smul.addr %s307, 32
          %s312 = sadd.s32 %s310, %s311
          %s313 = smul.addr %s312, 8
          %s314 = scalar_lea.vmem %s6, %s313
        $region44: #{basic_block_forward.3} parent=27 // pred_fallthru
          _
      $region28: #{basic_block_forward.3} parent=5 // pred_fallthru
        _
      %p315 = scmp.le.s32.totalorder 1, %s16
      %p316 = scmp.lt.s32.totalorder %s16, 9
      %p317 = pnand %p315, %p316
      %p318 = pneg %p317
      // Predicated region
      $region45: #{basic_block_forward.3} parent=5 // pred_check
        _
      $region46: #{basic_block_forward.3} parent=5 // pred_check_branch
        %320 = sbr.rel (%p317) target = $region48
      $region47: #{basic_block_forward.3} parent=5 // pred_region
        %s321 = ssub.s32 %s16, 1
        %p322 = scmp.lt.s32.totalorder %s25, 1
        %s323 = scalar_select %p322, %s25, 1
        %p324 = scmp.lt.s32.totalorder %s26, 5
        %s325 = scalar_select %p324, %s26, 5
        %s326 = smul.addr %s325, 20
        %s327 = smul.addr %s323, 120
        %s328 = sadd.s32 %s326, %s327
        %s329 = smul.addr %s328, 8
        %s330 = scalar_lea.vmem %s0, %s329
        %p331 = pneg %p56
        %p332 = pneg %p53
        %s333 = sadd.s32 %s26, 1
        %p334 = scmp.lt.s32.totalorder %s25, 1
        %s335 = scalar_select %p334, %s25, 1
        %p336 = scmp.lt.s32.totalorder %s333, 5
        %s337 = scalar_select %p336, %s333, 5
        %s338 = smul.addr %s337, 20
        %s339 = smul.addr %s335, 120
        %s340 = sadd.s32 %s338, %s339
        %s341 = smul.addr %s340, 8
        %s342 = scalar_lea.vmem %s1, %s341
        %p343 = pneg %p86
        %p344 = pneg %p83
        %s345 = sadd.s32 %s26, 2
        %p346 = scmp.lt.s32.totalorder %s25, 1
        %s347 = scalar_select %p346, %s25, 1
        %p348 = scmp.lt.s32.totalorder %s345, 5
        %s349 = scalar_select %p348, %s345, 5
        %s350 = smul.addr %s349, 20
        %s351 = smul.addr %s347, 120
        %s352 = sadd.s32 %s350, %s351
        %s353 = smul.addr %s352, 8
        %s354 = scalar_lea.vmem %s2, %s353
        %p355 = pneg %p116
        %p356 = pneg %p113
        %p357 = pneg %p137
        %p358 = pneg %p134
        %p359 = pneg %p158
        %p360 = pneg %p155
        %p361 = pneg %p179
        %p362 = pneg %p176
        %p363 = scmp.lt.s32.totalorder %s25, 1
        %s364 = scalar_select %p363, %s25, 1
        %p365 = scmp.lt.s32.totalorder %s26, 3
        %s366 = scalar_select %p365, %s26, 3
        %s367 = smul.addr %s366, 8
        %s368 = smul.addr %s364, 32
        %s369 = sadd.s32 %s367, %s368
        %s370 = smul.addr %s369, 8
        %s371 = scalar_lea.vmem %s6, %s370
        %p372 = pneg %p207
        %p373 = pneg %p204
        %p374 = pneg %p235
        %p375 = pneg %p232
        %s376 = sand.u32 %s222, 1
        %s377 = scalar_lea.sflag [#allocation4], %s376
        %s378 = sand.u32 %s222, 1
        %s379 = smul.addr %s378, 64
        %s380 = scalar_lea.vmem [#allocation3], %s379
        %p381 = scmp.lt.s32.totalorder %s25, 1
        %s382 = scalar_select %p381, %s25, 1
        %p383 = scmp.lt.s32.totalorder %s26, 5
        %s384 = scalar_select %p383, %s26, 5
        %s385 = smul.addr %s384, 20
        %s386 = smul.addr %s382, 120
        %s387 = sadd.s32 %s385, %s386
        %s388 = smul.addr %s387, 8
        %s389 = scalar_lea.vmem %s0, %s388
        %s390 = sadd.s32 %s26, 1
        %p391 = scmp.lt.s32.totalorder %s25, 1
        %s392 = scalar_select %p391, %s25, 1
        %p393 = scmp.lt.s32.totalorder %s390, 5
        %s394 = scalar_select %p393, %s390, 5
        %s395 = smul.addr %s394, 20
        %s396 = smul.addr %s392, 120
        %s397 = sadd.s32 %s395, %s396
        %s398 = smul.addr %s397, 8
        %s399 = scalar_lea.vmem %s1, %s398
        %s400 = sadd.s32 %s26, 1
        %s401 = sadd.s32 %s26, 2
        %p402 = scmp.lt.s32.totalorder %s25, 1
        %s403 = scalar_select %p402, %s25, 1
        %p404 = scmp.lt.s32.totalorder %s401, 5
        %s405 = scalar_select %p404, %s401, 5
        %s406 = smul.addr %s405, 20
        %s407 = smul.addr %s403, 120
        %s408 = sadd.s32 %s406, %s407
        %s409 = smul.addr %s408, 8
        %s410 = scalar_lea.vmem %s2, %s409
        %s411 = sadd.s32 %s26, 2
        %p412 = scmp.lt.s32.totalorder %s25, 1
        %s413 = scalar_select %p412, %s25, 1
        %p414 = scmp.lt.s32.totalorder %s26, 3
        %s415 = scalar_select %p414, %s26, 3
        %s416 = smul.addr %s415, 8
        %s417 = smul.addr %s413, 32
        %s418 = sadd.s32 %s416, %s417
        %s419 = smul.addr %s418, 8
        %s420 = scalar_lea.vmem %s6, %s419
        %v421 = vld [vmem:[%s389] sm:$0xff]
        %v422 = vld [vmem:[%s389 + $0x8] sm:$0x3]
        %v423 = vld [vmem:[%s389 + $0x10] sm:$0xff]
        %v424 = vld [vmem:[%s389 + $0x18] sm:$0x3]
        %v425 = vld [vmem:[%s389 + $0x20] sm:$0xff]
        %v426 = vld [vmem:[%s389 + $0x28] sm:$0x3]
        %v427 = vld [vmem:[%s389 + $0x30] sm:$0xff]
        %v428 = vld [vmem:[%s389 + $0x38] sm:$0x3]
        %v429 = vld [vmem:[%s389 + $0x40] sm:$0xff]
        %v430 = vld [vmem:[%s389 + $0x48] sm:$0x3]
        %v431 = vld [vmem:[%s389 + $0x50] sm:$0xff]
        %v432 = vld [vmem:[%s389 + $0x58] sm:$0x3]
        %v433 = vld [vmem:[%s389 + $0x60] sm:$0xff]
        %v434 = vld [vmem:[%s389 + $0x68] sm:$0x3]
        %v435 = vld [vmem:[%s389 + $0x70] sm:$0xff]
        %v436 = vld [vmem:[%s389 + $0x78] sm:$0x3]
        %v437 = vld [vmem:[%s389 + $0x80] sm:$0xff]
        %v438 = vld [vmem:[%s389 + $0x88] sm:$0x3]
        %v439 = vld [vmem:[%s389 + $0x90] sm:$0xff]
        %v440 = vld [vmem:[%s389 + $0x98] sm:$0x3]
        %vm441 = vcmask 261120
        %442 = vst.msk [vmem:[#allocation2] sm:$0xff] %vm441, %v421
        %443 = vst.msk [vmem:[#allocation2 + $0x8] sm:$0xff] %vm441, %v423
        %444 = vst.msk [vmem:[#allocation2 + $0x10] sm:$0xff] %vm441, %v425
        %445 = vst.msk [vmem:[#allocation2 + $0x18] sm:$0xff] %vm441, %v427
        %446 = vst.msk [vmem:[#allocation2 + $0x20] sm:$0xff] %vm441, %v429
        %447 = vst.msk [vmem:[#allocation2 + $0x28] sm:$0xff] %vm441, %v431
        %448 = vst.msk [vmem:[#allocation2 + $0x30] sm:$0xff] %vm441, %v433
        %449 = vst.msk [vmem:[#allocation2 + $0x38] sm:$0xff] %vm441, %v435
        %450 = vst.msk [vmem:[#allocation2 + $0x40] sm:$0xff] %vm441, %v437
        %451 = vst.msk [vmem:[#allocation2 + $0x48] sm:$0xff] %vm441, %v439
        %472 = vrot.lane.b32.xlu0 %v421, 32
        %v473 = vpop.permute.xlu0 %472
        %474 = vrot.lane.b32.xlu0 %v422, 32
        %v475 = vpop.permute.xlu0 %474
        %476 = vrot.lane.b32.xlu0 %v423, 32
        %v477 = vpop.permute.xlu0 %476
        %478 = vrot.lane.b32.xlu0 %v424, 32
        %v479 = vpop.permute.xlu0 %478
        %480 = vrot.lane.b32.xlu0 %v425, 32
        %v481 = vpop.permute.xlu0 %480
        %482 = vrot.lane.b32.xlu0 %v426, 32
        %v483 = vpop.permute.xlu0 %482
        %484 = vrot.lane.b32.xlu0 %v427, 32
        %v485 = vpop.permute.xlu0 %484
        %486 = vrot.lane.b32.xlu0 %v428, 32
        %v487 = vpop.permute.xlu0 %486
        %488 = vrot.lane.b32.xlu0 %v429, 32
        %v489 = vpop.permute.xlu0 %488
        %490 = vrot.lane.b32.xlu0 %v430, 32
        %v491 = vpop.permute.xlu0 %490
        %492 = vrot.lane.b32.xlu0 %v431, 32
        %v493 = vpop.permute.xlu0 %492
        %494 = vrot.lane.b32.xlu0 %v432, 32
        %v495 = vpop.permute.xlu0 %494
        %496 = vrot.lane.b32.xlu0 %v433, 32
        %v497 = vpop.permute.xlu0 %496
        %498 = vrot.lane.b32.xlu0 %v434, 32
        %v499 = vpop.permute.xlu0 %498
        %500 = vrot.lane.b32.xlu0 %v435, 32
        %v501 = vpop.permute.xlu0 %500
        %502 = vrot.lane.b32.xlu0 %v436, 32
        %v503 = vpop.permute.xlu0 %502
        %504 = vrot.lane.b32.xlu0 %v437, 32
        %v505 = vpop.permute.xlu0 %504
        %506 = vrot.lane.b32.xlu0 %v438, 32
        %v507 = vpop.permute.xlu0 %506
        %508 = vrot.lane.b32.xlu0 %v439, 32
        %v509 = vpop.permute.xlu0 %508
        %510 = vrot.lane.b32.xlu0 %v440, 32
        %v511 = vpop.permute.xlu0 %510
        %vm532 = vcmask 523521
        %533 = vst.msk [vmem:[#allocation2 - $0x1] sm:$0xfe] %vm532, %v473
        %vm534 = vcmask 516352
        %535 = vst.msk [vmem:[#allocation2 + $0x7] sm:$0x1] %vm534, %v475
        %536 = vst.msk [vmem:[#allocation2 + $0x7] sm:$0xfe] %vm532, %v477
        %537 = vst.msk [vmem:[#allocation2 + $0xf] sm:$0x1] %vm534, %v479
        %538 = vst.msk [vmem:[#allocation2 + $0xf] sm:$0xfe] %vm532, %v481
        %539 = vst.msk [vmem:[#allocation2 + $0x17] sm:$0x1] %vm534, %v483
        %540 = vst.msk [vmem:[#allocation2 + $0x17] sm:$0xfe] %vm532, %v485
        %541 = vst.msk [vmem:[#allocation2 + $0x1f] sm:$0x1] %vm534, %v487
        %542 = vst.msk [vmem:[#allocation2 + $0x1f] sm:$0xfe] %vm532, %v489
        %543 = vst.msk [vmem:[#allocation2 + $0x27] sm:$0x1] %vm534, %v491
        %544 = vst.msk [vmem:[#allocation2 + $0x27] sm:$0xfe] %vm532, %v493
        %545 = vst.msk [vmem:[#allocation2 + $0x2f] sm:$0x1] %vm534, %v495
        %546 = vst.msk [vmem:[#allocation2 + $0x2f] sm:$0xfe] %vm532, %v497
        %547 = vst.msk [vmem:[#allocation2 + $0x37] sm:$0x1] %vm534, %v499
        %548 = vst.msk [vmem:[#allocation2 + $0x37] sm:$0xfe] %vm532, %v501
        %549 = vst.msk [vmem:[#allocation2 + $0x3f] sm:$0x1] %vm534, %v503
        %550 = vst.msk [vmem:[#allocation2 + $0x3f] sm:$0xfe] %vm532, %v505
        %551 = vst.msk [vmem:[#allocation2 + $0x47] sm:$0x1] %vm534, %v507
        %552 = vst.msk [vmem:[#allocation2 + $0x47] sm:$0xfe] %vm532, %v509
        %553 = vst.msk [vmem:[#allocation2 + $0x4f] sm:$0x1] %vm534, %v511
        %554 = vrot.lane.b32.xlu0 %v421, 64
        %v555 = vpop.permute.xlu0 %554
        %556 = vrot.lane.b32.xlu0 %v422, 64
        %v557 = vpop.permute.xlu0 %556
        %558 = vrot.lane.b32.xlu0 %v423, 64
        %v559 = vpop.permute.xlu0 %558
        %560 = vrot.lane.b32.xlu0 %v424, 64
        %v561 = vpop.permute.xlu0 %560
        %562 = vrot.lane.b32.xlu0 %v425, 64
        %v563 = vpop.permute.xlu0 %562
        %564 = vrot.lane.b32.xlu0 %v426, 64
        %v565 = vpop.permute.xlu0 %564
        %566 = vrot.lane.b32.xlu0 %v427, 64
        %v567 = vpop.permute.xlu0 %566
        %568 = vrot.lane.b32.xlu0 %v428, 64
        %v569 = vpop.permute.xlu0 %568
        %570 = vrot.lane.b32.xlu0 %v429, 64
        %v571 = vpop.permute.xlu0 %570
        %572 = vrot.lane.b32.xlu0 %v430, 64
        %v573 = vpop.permute.xlu0 %572
        %574 = vrot.lane.b32.xlu0 %v431, 64
        %v575 = vpop.permute.xlu0 %574
        %576 = vrot.lane.b32.xlu0 %v432, 64
        %v577 = vpop.permute.xlu0 %576
        %578 = vrot.lane.b32.xlu0 %v433, 64
        %v579 = vpop.permute.xlu0 %578
        %580 = vrot.lane.b32.xlu0 %v434, 64
        %v581 = vpop.permute.xlu0 %580
        %582 = vrot.lane.b32.xlu0 %v435, 64
        %v583 = vpop.permute.xlu0 %582
        %584 = vrot.lane.b32.xlu0 %v436, 64
        %v585 = vpop.permute.xlu0 %584
        %586 = vrot.lane.b32.xlu0 %v437, 64
        %v587 = vpop.permute.xlu0 %586
        %588 = vrot.lane.b32.xlu0 %v438, 64
        %v589 = vpop.permute.xlu0 %588
        %590 = vrot.lane.b32.xlu0 %v439, 64
        %v591 = vpop.permute.xlu0 %590
        %592 = vrot.lane.b32.xlu0 %v440, 64
        %v593 = vpop.permute.xlu0 %592
        %vm614 = vcmask 785922
        %615 = vst.msk [vmem:[#allocation2 - $0x2] sm:$0xfc] %vm614, %v555
        %vm616 = vcmask 779776
        %617 = vst.msk [vmem:[#allocation2 + $0x6] sm:$0x3] %vm616, %v557
        %618 = vst.msk [vmem:[#allocation2 + $0x6] sm:$0xfc] %vm614, %v559
        %619 = vst.msk [vmem:[#allocation2 + $0xe] sm:$0x3] %vm616, %v561
        %620 = vst.msk [vmem:[#allocation2 + $0xe] sm:$0xfc] %vm614, %v563
        %621 = vst.msk [vmem:[#allocation2 + $0x16] sm:$0x3] %vm616, %v565
        %622 = vst.msk [vmem:[#allocation2 + $0x16] sm:$0xfc] %vm614, %v567
        %623 = vst.msk [vmem:[#allocation2 + $0x1e] sm:$0x3] %vm616, %v569
        %624 = vst.msk [vmem:[#allocation2 + $0x1e] sm:$0xfc] %vm614, %v571
        %625 = vst.msk [vmem:[#allocation2 + $0x26] sm:$0x3] %vm616, %v573
        %626 = vst.msk [vmem:[#allocation2 + $0x26] sm:$0xfc] %vm614, %v575
        %627 = vst.msk [vmem:[#allocation2 + $0x2e] sm:$0x3] %vm616, %v577
        %628 = vst.msk [vmem:[#allocation2 + $0x2e] sm:$0xfc] %vm614, %v579
        %629 = vst.msk [vmem:[#allocation2 + $0x36] sm:$0x3] %vm616, %v581
        %630 = vst.msk [vmem:[#allocation2 + $0x36] sm:$0xfc] %vm614, %v583
        %631 = vst.msk [vmem:[#allocation2 + $0x3e] sm:$0x3] %vm616, %v585
        %632 = vst.msk [vmem:[#allocation2 + $0x3e] sm:$0xfc] %vm614, %v587
        %633 = vst.msk [vmem:[#allocation2 + $0x46] sm:$0x3] %vm616, %v589
        %634 = vst.msk [vmem:[#allocation2 + $0x46] sm:$0xfc] %vm614, %v591
        %635 = vst.msk [vmem:[#allocation2 + $0x4e] sm:$0x3] %vm616, %v593
        %v636 = vld [vmem:[#allocation2] sm:$0xff]
        %v637 = vld [vmem:[#allocation2 + $0x8] sm:$0xff]
        %v638 = vld [vmem:[#allocation2 + $0x10] sm:$0xff]
        %v639 = vld [vmem:[#allocation2 + $0x18] sm:$0xff]
        %v640 = vld [vmem:[#allocation2 + $0x20] sm:$0xff]
        %v641 = vld [vmem:[#allocation2 + $0x28] sm:$0xff]
        %v642 = vld [vmem:[#allocation2 + $0x30] sm:$0xff]
        %v643 = vld [vmem:[#allocation2 + $0x38] sm:$0xff]
        %v644 = vld [vmem:[%s3] sm:$0xff]
        %v645 = vld [vmem:[%s3 + $0x8] sm:$0xff]
        %v646 = vld [vmem:[%s3 + $0x10] sm:$0xff]
        %v647 = vld [vmem:[%s3 + $0x18] sm:$0xff]
        %v648 = vld [vmem:[%s3 + $0x20] sm:$0xff]
        %v649 = vld [vmem:[%s3 + $0x28] sm:$0xff]
        %v650 = vld [vmem:[%s3 + $0x30] sm:$0xff]
        %v651 = vld [vmem:[%s3 + $0x38] sm:$0xff]
        %v652 = vld [vmem:[%s3 + $0x40] sm:$0xff]
        %v653 = vld [vmem:[%s3 + $0x48] sm:$0xff]
        %v654 = vld [vmem:[%s3 + $0x50] sm:$0xff]
        %v655 = vld [vmem:[%s3 + $0x58] sm:$0xff]
        %s656 = scalar_lea.vmem [#allocation2], 8
        %v657 = vld [vmem:[%s656] sm:$0xff]
        %v658 = vld [vmem:[%s656 + $0x8] sm:$0xff]
        %v659 = vld [vmem:[%s656 + $0x10] sm:$0xff]
        %v660 = vld [vmem:[%s656 + $0x18] sm:$0xff]
        %v661 = vld [vmem:[%s656 + $0x20] sm:$0xff]
        %v662 = vld [vmem:[%s656 + $0x28] sm:$0xff]
        %v663 = vld [vmem:[%s656 + $0x30] sm:$0xff]
        %v664 = vld [vmem:[%s656 + $0x38] sm:$0xff]
        %s665 = scalar_lea.vmem %s3, 96
        %v666 = vld [vmem:[%s665] sm:$0xff]
        %v667 = vld [vmem:[%s665 + $0x8] sm:$0xff]
        %v668 = vld [vmem:[%s665 + $0x10] sm:$0xff]
        %v669 = vld [vmem:[%s665 + $0x18] sm:$0xff]
        %v670 = vld [vmem:[%s665 + $0x20] sm:$0xff]
        %v671 = vld [vmem:[%s665 + $0x28] sm:$0xff]
        %v672 = vld [vmem:[%s665 + $0x30] sm:$0xff]
        %v673 = vld [vmem:[%s665 + $0x38] sm:$0xff]
        %v674 = vld [vmem:[%s665 + $0x40] sm:$0xff]
        %v675 = vld [vmem:[%s665 + $0x48] sm:$0xff]
        %v676 = vld [vmem:[%s665 + $0x50] sm:$0xff]
        %v677 = vld [vmem:[%s665 + $0x58] sm:$0xff]
        %vm678 = vcmask 785408
        %v680 = vsel %vm678, %v657, 0
        %v683 = vsel %vm678, %v658, 0
        %v686 = vsel %vm678, %v659, 0
        %v689 = vsel %vm678, %v660, 0
        %v692 = vsel %vm678, %v661, 0
        %v695 = vsel %vm678, %v662, 0
        %v698 = vsel %vm678, %v663, 0
        %v701 = vsel %vm678, %v664, 0
        %703 = vmatprep.subr.mxu0 0.0
        %704 = vmatpush1.msra.mxu0 %v666
        %705 = vmatprep.subr.mxu0 0.0
        %706 = vmatpush1.msra.mxu0 %v667
        %707 = vmatprep.subr.mxu0 0.0
        %708 = vmatpush1.msra.mxu0 %v668
        %709 = vmatprep.subr.mxu0 0.0
        %710 = vmatpush1.msra.mxu0 %v669
        %711 = vmatprep.subr.mxu0 0.0
        %712 = vmatpush1.msra.mxu0 %v670
        %713 = vmatprep.subr.mxu0 0.0
        %714 = vmatpush1.msra.mxu0 %v671
        %715 = vmatprep.subr.mxu0 0.0
        %716 = vmatpush1.msra.mxu0 %v672
        %717 = vmatprep.subr.mxu0 0.0
        %718 = vmatpush1.msra.mxu0 %v673
        %719 = vmatprep.subr.mxu0 0.0
        %720 = vmatpush1.msra.mxu0 %v674
        %721 = vmatprep.subr.mxu0 0.0
        %722 = vmatpush1.msra.mxu0 %v675
        %723 = vmatprep.subr.mxu0 0.0
        %724 = vmatpush1.msra.mxu0 %v676
        %725 = vmatprep.subr.mxu0 0.0
        %726 = vmatpush1.msra.mxu0 %v677
        %727 = vmatprep.subr.mxu0 0.0
        %728 = vmatpush1.msra.mxu0 0.0
        %729 = vmatprep.subr.mxu0 0.0
        %730 = vmatpush1.msra.mxu0 0.0
        %731 = vmatprep.subr.mxu0 0.0
        %732 = vmatpush1.msra.mxu0 0.0
        %733 = vmatprep.subr.mxu0 0.0
        %734 = vmatpush1.msra.mxu0 0.0
        %735 = vmatprep.subr.mxu0 0.0
        %736 = vmatpush1.msra.mxu0 0.0
        %737 = vmatprep.subr.mxu0 0.0
        %738 = vmatpush1.msra.mxu0 0.0
        %739 = vmatprep.subr.mxu0 0.0
        %740 = vmatpush1.msra.mxu0 0.0
        %741 = vmatprep.subr.mxu0 0.0
        %742 = vmatpush1.msra.mxu0 0.0
        %743 = vmatprep.subr.mxu0 0.0
        %744 = vmatpush1.msra.mxu0 0.0
        %745 = vmatprep.subr.mxu0 0.0
        %746 = vmatpush1.msra.mxu0 0.0
        %747 = vmatprep.subr.mxu0 0.0
        %748 = vmatpush1.msra.mxu0 0.0
        %749 = vmatprep.subr.mxu0 0.0
        %750 = vmatpush1.msra.mxu0 0.0
        %751 = vmatprep.subr.mxu0 0.0
        %752 = vmatpush1.msra.mxu0 0.0
        %753 = vmatprep.subr.mxu0 0.0
        %754 = vmatpush1.msra.mxu0 0.0
        %755 = vmatprep.subr.mxu0 0.0
        %756 = vmatpush1.msra.mxu0 0.0
        %757 = vmatprep.subr.mxu0 0.0
        %758 = vmatpush1.msra.mxu0 0.0
        %759 = vmatprep.subr.mxu0 0.0
        %760 = vmatpush1.msra.mxu0 0.0
        %761 = vmatprep.subr.mxu0 0.0
        %762 = vmatpush1.msra.mxu0 0.0
        %763 = vmatprep.subr.mxu0 0.0
        %764 = vmatpush1.msra.mxu0 0.0
        %765 = vmatprep.subr.mxu0 0.0
        %766 = vmatpush1.msra.mxu0 0.0
        %767 = vmatprep.mubr.f32.mxu0 0.0
        %768 = vmatmul.mubr.f32.gmra.mrb[0].mxu0 %v680
        %v769 = vpop.f32.mrb[0].mxu0
        %v770 = vadd.f32 0.0, %v769
        %v771 = vpop.f32.mrb[0].mxu0
        %772 = vmatprep.mubr.f32.mxu0 0.0
        %773 = vmatmul.mubr.f32.gmra.mrb[0].mxu0 %v683
        %v774 = vpop.f32.mrb[0].mxu0
        %v775 = vadd.f32 0.0, %v774
        %v776 = vpop.f32.mrb[0].mxu0
        %777 = vmatprep.mubr.f32.mxu0 0.0
        %778 = vmatmul.mubr.f32.gmra.mrb[0].mxu0 %v686
        %v779 = vpop.f32.mrb[0].mxu0
        %v780 = vadd.f32 0.0, %v779
        %v781 = vpop.f32.mrb[0].mxu0
        %782 = vmatprep.mubr.f32.mxu0 0.0
        %783 = vmatmul.mubr.f32.gmra.mrb[0].mxu0 %v689
        %v784 = vpop.f32.mrb[0].mxu0
        %v785 = vadd.f32 0.0, %v784
        %v786 = vpop.f32.mrb[0].mxu0
        %787 = vmatprep.mubr.f32.mxu0 0.0
        %788 = vmatmul.mubr.f32.gmra.mrb[0].mxu0 %v692
        %v789 = vpop.f32.mrb[0].mxu0
        %v790 = vadd.f32 0.0, %v789
        %v791 = vpop.f32.mrb[0].mxu0
        %792 = vmatprep.mubr.f32.mxu0 0.0
        %793 = vmatmul.mubr.f32.gmra.mrb[0].mxu0 %v695
        %v794 = vpop.f32.mrb[0].mxu0
        %v795 = vadd.f32 0.0, %v794
        %v796 = vpop.f32.mrb[0].mxu0
        %797 = vmatprep.mubr.f32.mxu0 0.0
        %798 = vmatmul.mubr.f32.gmra.mrb[0].mxu0 %v698
        %v799 = vpop.f32.mrb[0].mxu0
        %v800 = vadd.f32 0.0, %v799
        %v801 = vpop.f32.mrb[0].mxu0
        %802 = vmatprep.mubr.f32.mxu0 0.0
        %803 = vmatmul.mubr.f32.gmra.mrb[0].mxu0 %v701
        %v804 = vpop.f32.mrb[0].mxu0
        %v805 = vadd.f32 0.0, %v804
        %v806 = vpop.f32.mrb[0].mxu0
        %807 = vdwg.mxu0
        %v809 = vsel %vm678, %v636, 0
        %v812 = vsel %vm678, %v637, 0
        %v815 = vsel %vm678, %v638, 0
        %v818 = vsel %vm678, %v639, 0
        %v821 = vsel %vm678, %v640, 0
        %v824 = vsel %vm678, %v641, 0
        %v827 = vsel %vm678, %v642, 0
        %v830 = vsel %vm678, %v643, 0
        %832 = vmatprep.subr.mxu0 0.0
        %833 = vmatpush1.msra.mxu0 %v644
        %834 = vmatprep.subr.mxu0 0.0
        %835 = vmatpush1.msra.mxu0 %v645
        %836 = vmatprep.subr.mxu0 0.0
        %837 = vmatpush1.msra.mxu0 %v646
        %838 = vmatprep.subr.mxu0 0.0
        %839 = vmatpush1.msra.mxu0 %v647
        %840 = vmatprep.subr.mxu0 0.0
        %841 = vmatpush1.msra.mxu0 %v648
        %842 = vmatprep.subr.mxu0 0.0
        %843 = vmatpush1.msra.mxu0 %v649
        %844 = vmatprep.subr.mxu0 0.0
        %845 = vmatpush1.msra.mxu0 %v650
        %846 = vmatprep.subr.mxu0 0.0
        %847 = vmatpush1.msra.mxu0 %v651
        %848 = vmatprep.subr.mxu0 0.0
        %849 = vmatpush1.msra.mxu0 %v652
        %850 = vmatprep.subr.mxu0 0.0
        %851 = vmatpush1.msra.mxu0 %v653
        %852 = vmatprep.subr.mxu0 0.0
        %853 = vmatpush1.msra.mxu0 %v654
        %854 = vmatprep.subr.mxu0 0.0
        %855 = vmatpush1.msra.mxu0 %v655
        %856 = vmatprep.subr.mxu0 0.0
        %857 = vmatpush1.msra.mxu0 0.0
        %858 = vmatprep.subr.mxu0 0.0
        %859 = vmatpush1.msra.mxu0 0.0
        %860 = vmatprep.subr.mxu0 0.0
        %861 = vmatpush1.msra.mxu0 0.0
        %862 = vmatprep.subr.mxu0 0.0
        %863 = vmatpush1.msra.mxu0 0.0
        %864 = vmatprep.subr.mxu0 0.0
        %865 = vmatpush1.msra.mxu0 0.0
        %866 = vmatprep.subr.mxu0 0.0
        %867 = vmatpush1.msra.mxu0 0.0
        %868 = vmatprep.subr.mxu0 0.0
        %869 = vmatpush1.msra.mxu0 0.0
        %870 = vmatprep.subr.mxu0 0.0
        %871 = vmatpush1.msra.mxu0 0.0
        %872 = vmatprep.subr.mxu0 0.0
        %873 = vmatpush1.msra.mxu0 0.0
        %874 = vmatprep.subr.mxu0 0.0
        %875 = vmatpush1.msra.mxu0 0.0
        %876 = vmatprep.subr.mxu0 0.0
        %877 = vmatpush1.msra.mxu0 0.0
        %878 = vmatprep.subr.mxu0 0.0
        %879 = vmatpush1.msra.mxu0 0.0
        %880 = vmatprep.subr.mxu0 0.0
        %881 = vmatpush1.msra.mxu0 0.0
        %882 = vmatprep.subr.mxu0 0.0
        %883 = vmatpush1.msra.mxu0 0.0
        %884 = vmatprep.subr.mxu0 0.0
        %885 = vmatpush1.msra.mxu0 0.0
        %886 = vmatprep.subr.mxu0 0.0
        %887 = vmatpush1.msra.mxu0 0.0
        %888 = vmatprep.subr.mxu0 0.0
        %889 = vmatpush1.msra.mxu0 0.0
        %890 = vmatprep.subr.mxu0 0.0
        %891 = vmatpush1.msra.mxu0 0.0
        %892 = vmatprep.subr.mxu0 0.0
        %893 = vmatpush1.msra.mxu0 0.0
        %894 = vmatprep.subr.mxu0 0.0
        %895 = vmatpush1.msra.mxu0 0.0
        %896 = vmatprep.mubr.f32.mxu0 0.0
        %897 = vmatmul.mubr.f32.gmra.mrb[0].mxu0 %v809
        %v898 = vpop.f32.mrb[0].mxu0
        %v899 = vadd.f32 %v770, %v898
        %v900 = vpop.f32.mrb[0].mxu0
        %901 = vmatprep.mubr.f32.mxu0 0.0
        %902 = vmatmul.mubr.f32.gmra.mrb[0].mxu0 %v812
        %v903 = vpop.f32.mrb[0].mxu0
        %v904 = vadd.f32 %v775, %v903
        %v905 = vpop.f32.mrb[0].mxu0
        %906 = vmatprep.mubr.f32.mxu0 0.0
        %907 = vmatmul.mubr.f32.gmra.mrb[0].mxu0 %v815
        %v908 = vpop.f32.mrb[0].mxu0
        %v909 = vadd.f32 %v780, %v908
        %v910 = vpop.f32.mrb[0].mxu0
        %911 = vmatprep.mubr.f32.mxu0 0.0
        %912 = vmatmul.mubr.f32.gmra.mrb[0].mxu0 %v818
        %v913 = vpop.f32.mrb[0].mxu0
        %v914 = vadd.f32 %v785, %v913
        %v915 = vpop.f32.mrb[0].mxu0
        %916 = vmatprep.mubr.f32.mxu0 0.0
        %917 = vmatmul.mubr.f32.gmra.mrb[0].mxu0 %v821
        %v918 = vpop.f32.mrb[0].mxu0
        %v919 = vadd.f32 %v790, %v918
        %v920 = vpop.f32.mrb[0].mxu0
        %921 = vmatprep.mubr.f32.mxu0 0.0
        %922 = vmatmul.mubr.f32.gmra.mrb[0].mxu0 %v824
        %v923 = vpop.f32.mrb[0].mxu0
        %v924 = vadd.f32 %v795, %v923
        %v925 = vpop.f32.mrb[0].mxu0
        %926 = vmatprep.mubr.f32.mxu0 0.0
        %927 = vmatmul.mubr.f32.gmra.mrb[0].mxu0 %v827
        %v928 = vpop.f32.mrb[0].mxu0
        %v929 = vadd.f32 %v800, %v928
        %v930 = vpop.f32.mrb[0].mxu0
        %931 = vmatprep.mubr.f32.mxu0 0.0
        %932 = vmatmul.mubr.f32.gmra.mrb[0].mxu0 %v830
        %v933 = vpop.f32.mrb[0].mxu0
        %v934 = vadd.f32 %v805, %v933
        %v935 = vpop.f32.mrb[0].mxu0
        %936 = vdwg.mxu0
        %s937 = scalar_lea.vmem [#allocation2], 16
        %v938 = vld [vmem:[%s937] sm:$0xff]
        %v939 = vld [vmem:[%s937 + $0x8] sm:$0xff]
        %v940 = vld [vmem:[%s937 + $0x10] sm:$0xff]
        %v941 = vld [vmem:[%s937 + $0x18] sm:$0xff]
        %v942 = vld [vmem:[%s937 + $0x20] sm:$0xff]
        %v943 = vld [vmem:[%s937 + $0x28] sm:$0xff]
        %v944 = vld [vmem:[%s937 + $0x30] sm:$0xff]
        %v945 = vld [vmem:[%s937 + $0x38] sm:$0xff]
        %s946 = scalar_lea.vmem %s3, 192
        %v947 = vld [vmem:[%s946] sm:$0xff]
        %v948 = vld [vmem:[%s946 + $0x8] sm:$0xff]
        %v949 = vld [vmem:[%s946 + $0x10] sm:$0xff]
        %v950 = vld [vmem:[%s946 + $0x18] sm:$0xff]
        %v951 = vld [vmem:[%s946 + $0x20] sm:$0xff]
        %v952 = vld [vmem:[%s946 + $0x28] sm:$0xff]
        %v953 = vld [vmem:[%s946 + $0x30] sm:$0xff]
        %v954 = vld [vmem:[%s946 + $0x38] sm:$0xff]
        %v955 = vld [vmem:[%s946 + $0x40] sm:$0xff]
        %v956 = vld [vmem:[%s946 + $0x48] sm:$0xff]
        %v957 = vld [vmem:[%s946 + $0x50] sm:$0xff]
        %v958 = vld [vmem:[%s946 + $0x58] sm:$0xff]
        %v960 = vsel %vm678, %v938, 0
        %v963 = vsel %vm678, %v939, 0
        %v966 = vsel %vm678, %v940, 0
        %v969 = vsel %vm678, %v941, 0
        %v972 = vsel %vm678, %v942, 0
        %v975 = vsel %vm678, %v943, 0
        %v978 = vsel %vm678, %v944, 0
        %v981 = vsel %vm678, %v945, 0
        %983 = vmatprep.subr.mxu0 0.0
        %984 = vmatpush1.msra.mxu0 %v947
        %985 = vmatprep.subr.mxu0 0.0
        %986 = vmatpush1.msra.mxu0 %v948
        %987 = vmatprep.subr.mxu0 0.0
        %988 = vmatpush1.msra.mxu0 %v949
        %989 = vmatprep.subr.mxu0 0.0
        %990 = vmatpush1.msra.mxu0 %v950
        %991 = vmatprep.subr.mxu0 0.0
        %992 = vmatpush1.msra.mxu0 %v951
        %993 = vmatprep.subr.mxu0 0.0
        %994 = vmatpush1.msra.mxu0 %v952
        %995 = vmatprep.subr.mxu0 0.0
        %996 = vmatpush1.msra.mxu0 %v953
        %997 = vmatprep.subr.mxu0 0.0
        %998 = vmatpush1.msra.mxu0 %v954
        %999 = vmatprep.subr.mxu0 0.0
        %1000 = vmatpush1.msra.mxu0 %v955
        %1001 = vmatprep.subr.mxu0 0.0
        %1002 = vmatpush1.msra.mxu0 %v956
        %1003 = vmatprep.subr.mxu0 0.0
        %1004 = vmatpush1.msra.mxu0 %v957
        %1005 = vmatprep.subr.mxu0 0.0
        %1006 = vmatpush1.msra.mxu0 %v958
        %1007 = vmatprep.subr.mxu0 0.0
        %1008 = vmatpush1.msra.mxu0 0.0
        %1009 = vmatprep.subr.mxu0 0.0
        %1010 = vmatpush1.msra.mxu0 0.0
        %1011 = vmatprep.subr.mxu0 0.0
        %1012 = vmatpush1.msra.mxu0 0.0
        %1013 = vmatprep.subr.mxu0 0.0
        %1014 = vmatpush1.msra.mxu0 0.0
        %1015 = vmatprep.subr.mxu0 0.0
        %1016 = vmatpush1.msra.mxu0 0.0
        %1017 = vmatprep.subr.mxu0 0.0
        %1018 = vmatpush1.msra.mxu0 0.0
        %1019 = vmatprep.subr.mxu0 0.0
        %1020 = vmatpush1.msra.mxu0 0.0
        %1021 = vmatprep.subr.mxu0 0.0
        %1022 = vmatpush1.msra.mxu0 0.0
        %1023 = vmatprep.subr.mxu0 0.0
        %1024 = vmatpush1.msra.mxu0 0.0
        %1025 = vmatprep.subr.mxu0 0.0
        %1026 = vmatpush1.msra.mxu0 0.0
        %1027 = vmatprep.subr.mxu0 0.0
        %1028 = vmatpush1.msra.mxu0 0.0
        %1029 = vmatprep.subr.mxu0 0.0
        %1030 = vmatpush1.msra.mxu0 0.0
        %1031 = vmatprep.subr.mxu0 0.0
        %1032 = vmatpush1.msra.mxu0 0.0
        %1033 = vmatprep.subr.mxu0 0.0
        %1034 = vmatpush1.msra.mxu0 0.0
        %1035 = vmatprep.subr.mxu0 0.0
        %1036 = vmatpush1.msra.mxu0 0.0
        %1037 = vmatprep.subr.mxu0 0.0
        %1038 = vmatpush1.msra.mxu0 0.0
        %1039 = vmatprep.subr.mxu0 0.0
        %1040 = vmatpush1.msra.mxu0 0.0
        %1041 = vmatprep.subr.mxu0 0.0
        %1042 = vmatpush1.msra.mxu0 0.0
        %1043 = vmatprep.subr.mxu0 0.0
        %1044 = vmatpush1.msra.mxu0 0.0
        %1045 = vmatprep.subr.mxu0 0.0
        %1046 = vmatpush1.msra.mxu0 0.0
        %1047 = vmatprep.mubr.f32.mxu0 0.0
        %1048 = vmatmul.mubr.f32.gmra.mrb[0].mxu0 %v960
        %v1049 = vpop.f32.mrb[0].mxu0
        %v1050 = vadd.f32 0.0, %v1049
        %v1051 = vpop.f32.mrb[0].mxu0
        %1052 = vmatprep.mubr.f32.mxu0 0.0
        %1053 = vmatmul.mubr.f32.gmra.mrb[0].mxu0 %v963
        %v1054 = vpop.f32.mrb[0].mxu0
        %v1055 = vadd.f32 0.0, %v1054
        %v1056 = vpop.f32.mrb[0].mxu0
        %1057 = vmatprep.mubr.f32.mxu0 0.0
        %1058 = vmatmul.mubr.f32.gmra.mrb[0].mxu0 %v966
        %v1059 = vpop.f32.mrb[0].mxu0
        %v1060 = vadd.f32 0.0, %v1059
        %v1061 = vpop.f32.mrb[0].mxu0
        %1062 = vmatprep.mubr.f32.mxu0 0.0
        %1063 = vmatmul.mubr.f32.gmra.mrb[0].mxu0 %v969
        %v1064 = vpop.f32.mrb[0].mxu0
        %v1065 = vadd.f32 0.0, %v1064
        %v1066 = vpop.f32.mrb[0].mxu0
        %1067 = vmatprep.mubr.f32.mxu0 0.0
        %1068 = vmatmul.mubr.f32.gmra.mrb[0].mxu0 %v972
        %v1069 = vpop.f32.mrb[0].mxu0
        %v1070 = vadd.f32 0.0, %v1069
        %v1071 = vpop.f32.mrb[0].mxu0
        %1072 = vmatprep.mubr.f32.mxu0 0.0
        %1073 = vmatmul.mubr.f32.gmra.mrb[0].mxu0 %v975
        %v1074 = vpop.f32.mrb[0].mxu0
        %v1075 = vadd.f32 0.0, %v1074
        %v1076 = vpop.f32.mrb[0].mxu0
        %1077 = vmatprep.mubr.f32.mxu0 0.0
        %1078 = vmatmul.mubr.f32.gmra.mrb[0].mxu0 %v978
        %v1079 = vpop.f32.mrb[0].mxu0
        %v1080 = vadd.f32 0.0, %v1079
        %v1081 = vpop.f32.mrb[0].mxu0
        %1082 = vmatprep.mubr.f32.mxu0 0.0
        %1083 = vmatmul.mubr.f32.gmra.mrb[0].mxu0 %v981
        %v1084 = vpop.f32.mrb[0].mxu0
        %v1085 = vadd.f32 0.0, %v1084
        %v1086 = vpop.f32.mrb[0].mxu0
        %1087 = vdwg.mxu0
        %v1088 = vadd.f32 %v899, %v1050
        %v1089 = vadd.f32 %v904, %v1055
        %v1090 = vadd.f32 %v909, %v1060
        %v1091 = vadd.f32 %v914, %v1065
        %v1092 = vadd.f32 %v919, %v1070
        %v1093 = vadd.f32 %v924, %v1075
        %v1094 = vadd.f32 %v929, %v1080
        %v1095 = vadd.f32 %v934, %v1085
        %v1096 = vld [vmem:[%s399] sm:$0xff]
        %v1097 = vld [vmem:[%s399 + $0x8] sm:$0x3]
        %v1098 = vld [vmem:[%s399 + $0x10] sm:$0xff]
        %v1099 = vld [vmem:[%s399 + $0x18] sm:$0x3]
        %v1100 = vld [vmem:[%s399 + $0x20] sm:$0xff]
        %v1101 = vld [vmem:[%s399 + $0x28] sm:$0x3]
        %v1102 = vld [vmem:[%s399 + $0x30] sm:$0xff]
        %v1103 = vld [vmem:[%s399 + $0x38] sm:$0x3]
        %v1104 = vld [vmem:[%s399 + $0x40] sm:$0xff]
        %v1105 = vld [vmem:[%s399 + $0x48] sm:$0x3]
        %v1106 = vld [vmem:[%s399 + $0x50] sm:$0xff]
        %v1107 = vld [vmem:[%s399 + $0x58] sm:$0x3]
        %v1108 = vld [vmem:[%s399 + $0x60] sm:$0xff]
        %v1109 = vld [vmem:[%s399 + $0x68] sm:$0x3]
        %v1110 = vld [vmem:[%s399 + $0x70] sm:$0xff]
        %v1111 = vld [vmem:[%s399 + $0x78] sm:$0x3]
        %v1112 = vld [vmem:[%s399 + $0x80] sm:$0xff]
        %v1113 = vld [vmem:[%s399 + $0x88] sm:$0x3]
        %v1114 = vld [vmem:[%s399 + $0x90] sm:$0xff]
        %v1115 = vld [vmem:[%s399 + $0x98] sm:$0x3]
        %s1116 = scalar_lea.vmem [#allocation2], 80
        %1117 = vst.msk [vmem:[%s1116] sm:$0xff] %vm441, %v1096
        %1118 = vst.msk [vmem:[%s1116 + $0x8] sm:$0xff] %vm441, %v1098
        %1119 = vst.msk [vmem:[%s1116 + $0x10] sm:$0xff] %vm441, %v1100
        %1120 = vst.msk [vmem:[%s1116 + $0x18] sm:$0xff] %vm441, %v1102
        %1121 = vst.msk [vmem:[%s1116 + $0x20] sm:$0xff] %vm441, %v1104
        %1122 = vst.msk [vmem:[%s1116 + $0x28] sm:$0xff] %vm441, %v1106
        %1123 = vst.msk [vmem:[%s1116 + $0x30] sm:$0xff] %vm441, %v1108
        %1124 = vst.msk [vmem:[%s1116 + $0x38] sm:$0xff] %vm441, %v1110
        %1125 = vst.msk [vmem:[%s1116 + $0x40] sm:$0xff] %vm441, %v1112
        %1126 = vst.msk [vmem:[%s1116 + $0x48] sm:$0xff] %vm441, %v1114
        %1147 = vrot.lane.b32.xlu0 %v1096, 32
        %v1148 = vpop.permute.xlu0 %1147
        %1149 = vrot.lane.b32.xlu0 %v1097, 32
        %v1150 = vpop.permute.xlu0 %1149
        %1151 = vrot.lane.b32.xlu0 %v1098, 32
        %v1152 = vpop.permute.xlu0 %1151
        %1153 = vrot.lane.b32.xlu0 %v1099, 32
        %v1154 = vpop.permute.xlu0 %1153
        %1155 = vrot.lane.b32.xlu0 %v1100, 32
        %v1156 = vpop.permute.xlu0 %1155
        %1157 = vrot.lane.b32.xlu0 %v1101, 32
        %v1158 = vpop.permute.xlu0 %1157
        %1159 = vrot.lane.b32.xlu0 %v1102, 32
        %v1160 = vpop.permute.xlu0 %1159
        %1161 = vrot.lane.b32.xlu0 %v1103, 32
        %v1162 = vpop.permute.xlu0 %1161
        %1163 = vrot.lane.b32.xlu0 %v1104, 32
        %v1164 = vpop.permute.xlu0 %1163
        %1165 = vrot.lane.b32.xlu0 %v1105, 32
        %v1166 = vpop.permute.xlu0 %1165
        %1167 = vrot.lane.b32.xlu0 %v1106, 32
        %v1168 = vpop.permute.xlu0 %1167
        %1169 = vrot.lane.b32.xlu0 %v1107, 32
        %v1170 = vpop.permute.xlu0 %1169
        %1171 = vrot.lane.b32.xlu0 %v1108, 32
        %v1172 = vpop.permute.xlu0 %1171
        %1173 = vrot.lane.b32.xlu0 %v1109, 32
        %v1174 = vpop.permute.xlu0 %1173
        %1175 = vrot.lane.b32.xlu0 %v1110, 32
        %v1176 = vpop.permute.xlu0 %1175
        %1177 = vrot.lane.b32.xlu0 %v1111, 32
        %v1178 = vpop.permute.xlu0 %1177
        %1179 = vrot.lane.b32.xlu0 %v1112, 32
        %v1180 = vpop.permute.xlu0 %1179
        %1181 = vrot.lane.b32.xlu0 %v1113, 32
        %v1182 = vpop.permute.xlu0 %1181
        %1183 = vrot.lane.b32.xlu0 %v1114, 32
        %v1184 = vpop.permute.xlu0 %1183
        %1185 = vrot.lane.b32.xlu0 %v1115, 32
        %v1186 = vpop.permute.xlu0 %1185
        %1207 = vst.msk [vmem:[%s1116 - $0x1] sm:$0xfe] %vm532, %v1148
        %1208 = vst.msk [vmem:[%s1116 + $0x7] sm:$0x1] %vm534, %v1150
        %1209 = vst.msk [vmem:[%s1116 + $0x7] sm:$0xfe] %vm532, %v1152
        %1210 = vst.msk [vmem:[%s1116 + $0xf] sm:$0x1] %vm534, %v1154
        %1211 = vst.msk [vmem:[%s1116 + $0xf] sm:$0xfe] %vm532, %v1156
        %1212 = vst.msk [vmem:[%s1116 + $0x17] sm:$0x1] %vm534, %v1158
        %1213 = vst.msk [vmem:[%s1116 + $0x17] sm:$0xfe] %vm532, %v1160
        %1214 = vst.msk [vmem:[%s1116 + $0x1f] sm:$0x1] %vm534, %v1162
        %1215 = vst.msk [vmem:[%s1116 + $0x1f] sm:$0xfe] %vm532, %v1164
        %1216 = vst.msk [vmem:[%s1116 + $0x27] sm:$0x1] %vm534, %v1166
        %1217 = vst.msk [vmem:[%s1116 + $0x27] sm:$0xfe] %vm532, %v1168
        %1218 = vst.msk [vmem:[%s1116 + $0x2f] sm:$0x1] %vm534, %v1170
        %1219 = vst.msk [vmem:[%s1116 + $0x2f] sm:$0xfe] %vm532, %v1172
        %1220 = vst.msk [vmem:[%s1116 + $0x37] sm:$0x1] %vm534, %v1174
        %1221 = vst.msk [vmem:[%s1116 + $0x37] sm:$0xfe] %vm532, %v1176
        %1222 = vst.msk [vmem:[%s1116 + $0x3f] sm:$0x1] %vm534, %v1178
        %1223 = vst.msk [vmem:[%s1116 + $0x3f] sm:$0xfe] %vm532, %v1180
        %1224 = vst.msk [vmem:[%s1116 + $0x47] sm:$0x1] %vm534, %v1182
        %1225 = vst.msk [vmem:[%s1116 + $0x47] sm:$0xfe] %vm532, %v1184
        %1226 = vst.msk [vmem:[%s1116 + $0x4f] sm:$0x1] %vm534, %v1186
        %1227 = vrot.lane.b32.xlu0 %v1096, 64
        %v1228 = vpop.permute.xlu0 %1227
        %1229 = vrot.lane.b32.xlu0 %v1097, 64
        %v1230 = vpop.permute.xlu0 %1229
        %1231 = vrot.lane.b32.xlu0 %v1098, 64
        %v1232 = vpop.permute.xlu0 %1231
        %1233 = vrot.lane.b32.xlu0 %v1099, 64
        %v1234 = vpop.permute.xlu0 %1233
        %1235 = vrot.lane.b32.xlu0 %v1100, 64
        %v1236 = vpop.permute.xlu0 %1235
        %1237 = vrot.lane.b32.xlu0 %v1101, 64
        %v1238 = vpop.permute.xlu0 %1237
        %1239 = vrot.lane.b32.xlu0 %v1102, 64
        %v1240 = vpop.permute.xlu0 %1239
        %1241 = vrot.lane.b32.xlu0 %v1103, 64
        %v1242 = vpop.permute.xlu0 %1241
        %1243 = vrot.lane.b32.xlu0 %v1104, 64
        %v1244 = vpop.permute.xlu0 %1243
        %1245 = vrot.lane.b32.xlu0 %v1105, 64
        %v1246 = vpop.permute.xlu0 %1245
        %1247 = vrot.lane.b32.xlu0 %v1106, 64
        %v1248 = vpop.permute.xlu0 %1247
        %1249 = vrot.lane.b32.xlu0 %v1107, 64
        %v1250 = vpop.permute.xlu0 %1249
        %1251 = vrot.lane.b32.xlu0 %v1108, 64
        %v1252 = vpop.permute.xlu0 %1251
        %1253 = vrot.lane.b32.xlu0 %v1109, 64
        %v1254 = vpop.permute.xlu0 %1253
        %1255 = vrot.lane.b32.xlu0 %v1110, 64
        %v1256 = vpop.permute.xlu0 %1255
        %1257 = vrot.lane.b32.xlu0 %v1111, 64
        %v1258 = vpop.permute.xlu0 %1257
        %1259 = vrot.lane.b32.xlu0 %v1112, 64
        %v1260 = vpop.permute.xlu0 %1259
        %1261 = vrot.lane.b32.xlu0 %v1113, 64
        %v1262 = vpop.permute.xlu0 %1261
        %1263 = vrot.lane.b32.xlu0 %v1114, 64
        %v1264 = vpop.permute.xlu0 %1263
        %1265 = vrot.lane.b32.xlu0 %v1115, 64
        %v1266 = vpop.permute.xlu0 %1265
        %1287 = vst.msk [vmem:[%s1116 - $0x2] sm:$0xfc] %vm614, %v1228
        %1288 = vst.msk [vmem:[%s1116 + $0x6] sm:$0x3] %vm616, %v1230
        %1289 = vst.msk [vmem:[%s1116 + $0x6] sm:$0xfc] %vm614, %v1232
        %1290 = vst.msk [vmem:[%s1116 + $0xe] sm:$0x3] %vm616, %v1234
        %1291 = vst.msk [vmem:[%s1116 + $0xe] sm:$0xfc] %vm614, %v1236
        %1292 = vst.msk [vmem:[%s1116 + $0x16] sm:$0x3] %vm616, %v1238
        %1293 = vst.msk [vmem:[%s1116 + $0x16] sm:$0xfc] %vm614, %v1240
        %1294 = vst.msk [vmem:[%s1116 + $0x1e] sm:$0x3] %vm616, %v1242
        %1295 = vst.msk [vmem:[%s1116 + $0x1e] sm:$0xfc] %vm614, %v1244
        %1296 = vst.msk [vmem:[%s1116 + $0x26] sm:$0x3] %vm616, %v1246
        %1297 = vst.msk [vmem:[%s1116 + $0x26] sm:$0xfc] %vm614, %v1248
        %1298 = vst.msk [vmem:[%s1116 + $0x2e] sm:$0x3] %vm616, %v1250
        %1299 = vst.msk [vmem:[%s1116 + $0x2e] sm:$0xfc] %vm614, %v1252
        %1300 = vst.msk [vmem:[%s1116 + $0x36] sm:$0x3] %vm616, %v1254
        %1301 = vst.msk [vmem:[%s1116 + $0x36] sm:$0xfc] %vm614, %v1256
        %1302 = vst.msk [vmem:[%s1116 + $0x3e] sm:$0x3] %vm616, %v1258
        %1303 = vst.msk [vmem:[%s1116 + $0x3e] sm:$0xfc] %vm614, %v1260
        %1304 = vst.msk [vmem:[%s1116 + $0x46] sm:$0x3] %vm616, %v1262
        %1305 = vst.msk [vmem:[%s1116 + $0x46] sm:$0xfc] %vm614, %v1264
        %1306 = vst.msk [vmem:[%s1116 + $0x4e] sm:$0x3] %vm616, %v1266
        %v1307 = vld [vmem:[%s1116] sm:$0xff]
        %v1308 = vld [vmem:[%s1116 + $0x8] sm:$0xff]
        %v1309 = vld [vmem:[%s1116 + $0x10] sm:$0xff]
        %v1310 = vld [vmem:[%s1116 + $0x18] sm:$0xff]
        %v1311 = vld [vmem:[%s1116 + $0x20] sm:$0xff]
        %v1312 = vld [vmem:[%s1116 + $0x28] sm:$0xff]
        %v1313 = vld [vmem:[%s1116 + $0x30] sm:$0xff]
        %v1314 = vld [vmem:[%s1116 + $0x38] sm:$0xff]
        %s1315 = scalar_lea.vmem %s3, 288
        %v1316 = vld [vmem:[%s1315] sm:$0xff]
        %v1317 = vld [vmem:[%s1315 + $0x8] sm:$0xff]
        %v1318 = vld [vmem:[%s1315 + $0x10] sm:$0xff]
        %v1319 = vld [vmem:[%s1315 + $0x18] sm:$0xff]
        %v1320 = vld [vmem:[%s1315 + $0x20] sm:$0xff]
        %v1321 = vld [vmem:[%s1315 + $0x28] sm:$0xff]
        %v1322 = vld [vmem:[%s1315 + $0x30] sm:$0xff]
        %v1323 = vld [vmem:[%s1315 + $0x38] sm:$0xff]
        %v1324 = vld [vmem:[%s1315 + $0x40] sm:$0xff]
        %v1325 = vld [vmem:[%s1315 + $0x48] sm:$0xff]
        %v1326 = vld [vmem:[%s1315 + $0x50] sm:$0xff]
        %v1327 = vld [vmem:[%s1315 + $0x58] sm:$0xff]
        %v1329 = vsel %vm678, %v1307, 0
        %v1332 = vsel %vm678, %v1308, 0
        %v1335 = vsel %vm678, %v1309, 0
        %v1338 = vsel %vm678, %v1310, 0
        %v1341 = vsel %vm678, %v1311, 0
        %v1344 = vsel %vm678, %v1312, 0
        %v1347 = vsel %vm678, %v1313, 0
        %v1350 = vsel %vm678, %v1314, 0
        %1352 = vmatprep.subr.mxu0 0.0
        %1353 = vmatpush1.msra.mxu0 %v1316
        %1354 = vmatprep.subr.mxu0 0.0
        %1355 = vmatpush1.msra.mxu0 %v1317
        %1356 = vmatprep.subr.mxu0 0.0
        %1357 = vmatpush1.msra.mxu0 %v1318
        %1358 = vmatprep.subr.mxu0 0.0
        %1359 = vmatpush1.msra.mxu0 %v1319
        %1360 = vmatprep.subr.mxu0 0.0
        %1361 = vmatpush1.msra.mxu0 %v1320
        %1362 = vmatprep.subr.mxu0 0.0
        %1363 = vmatpush1.msra.mxu0 %v1321
        %1364 = vmatprep.subr.mxu0 0.0
        %1365 = vmatpush1.msra.mxu0 %v1322
        %1366 = vmatprep.subr.mxu0 0.0
        %1367 = vmatpush1.msra.mxu0 %v1323
        %1368 = vmatprep.subr.mxu0 0.0
        %1369 = vmatpush1.msra.mxu0 %v1324
        %1370 = vmatprep.subr.mxu0 0.0
        %1371 = vmatpush1.msra.mxu0 %v1325
        %1372 = vmatprep.subr.mxu0 0.0
        %1373 = vmatpush1.msra.mxu0 %v1326
        %1374 = vmatprep.subr.mxu0 0.0
        %1375 = vmatpush1.msra.mxu0 %v1327
        %1376 = vmatprep.subr.mxu0 0.0
        %1377 = vmatpush1.msra.mxu0 0.0
        %1378 = vmatprep.subr.mxu0 0.0
        %1379 = vmatpush1.msra.mxu0 0.0
        %1380 = vmatprep.subr.mxu0 0.0
        %1381 = vmatpush1.msra.mxu0 0.0
        %1382 = vmatprep.subr.mxu0 0.0
        %1383 = vmatpush1.msra.mxu0 0.0
        %1384 = vmatprep.subr.mxu0 0.0
        %1385 = vmatpush1.msra.mxu0 0.0
        %1386 = vmatprep.subr.mxu0 0.0
        %1387 = vmatpush1.msra.mxu0 0.0
        %1388 = vmatprep.subr.mxu0 0.0
        %1389 = vmatpush1.msra.mxu0 0.0
        %1390 = vmatprep.subr.mxu0 0.0
        %1391 = vmatpush1.msra.mxu0 0.0
        %1392 = vmatprep.subr.mxu0 0.0
        %1393 = vmatpush1.msra.mxu0 0.0
        %1394 = vmatprep.subr.mxu0 0.0
        %1395 = vmatpush1.msra.mxu0 0.0
        %1396 = vmatprep.subr.mxu0 0.0
        %1397 = vmatpush1.msra.mxu0 0.0
        %1398 = vmatprep.subr.mxu0 0.0
        %1399 = vmatpush1.msra.mxu0 0.0
        %1400 = vmatprep.subr.mxu0 0.0
        %1401 = vmatpush1.msra.mxu0 0.0
        %1402 = vmatprep.subr.mxu0 0.0
        %1403 = vmatpush1.msra.mxu0 0.0
        %1404 = vmatprep.subr.mxu0 0.0
        %1405 = vmatpush1.msra.mxu0 0.0
        %1406 = vmatprep.subr.mxu0 0.0
        %1407 = vmatpush1.msra.mxu0 0.0
        %1408 = vmatprep.subr.mxu0 0.0
        %1409 = vmatpush1.msra.mxu0 0.0
        %1410 = vmatprep.subr.mxu0 0.0
        %1411 = vmatpush1.msra.mxu0 0.0
        %1412 = vmatprep.subr.mxu0 0.0
        %1413 = vmatpush1.msra.mxu0 0.0
        %1414 = vmatprep.subr.mxu0 0.0
        %1415 = vmatpush1.msra.mxu0 0.0
        %1416 = vmatprep.mubr.f32.mxu0 0.0
        %1417 = vmatmul.mubr.f32.gmra.mrb[0].mxu0 %v1329
        %v1418 = vpop.f32.mrb[0].mxu0
        %v1419 = vadd.f32 0.0, %v1418
        %v1420 = vpop.f32.mrb[0].mxu0
        %1421 = vmatprep.mubr.f32.mxu0 0.0
        %1422 = vmatmul.mubr.f32.gmra.mrb[0].mxu0 %v1332
        %v1423 = vpop.f32.mrb[0].mxu0
        %v1424 = vadd.f32 0.0, %v1423
        %v1425 = vpop.f32.mrb[0].mxu0
        %1426 = vmatprep.mubr.f32.mxu0 0.0
        %1427 = vmatmul.mubr.f32.gmra.mrb[0].mxu0 %v1335
        %v1428 = vpop.f32.mrb[0].mxu0
        %v1429 = vadd.f32 0.0, %v1428
        %v1430 = vpop.f32.mrb[0].mxu0
        %1431 = vmatprep.mubr.f32.mxu0 0.0
        %1432 = vmatmul.mubr.f32.gmra.mrb[0].mxu0 %v1338
        %v1433 = vpop.f32.mrb[0].mxu0
        %v1434 = vadd.f32 0.0, %v1433
        %v1435 = vpop.f32.mrb[0].mxu0
        %1436 = vmatprep.mubr.f32.mxu0 0.0
        %1437 = vmatmul.mubr.f32.gmra.mrb[0].mxu0 %v1341
        %v1438 = vpop.f32.mrb[0].mxu0
        %v1439 = vadd.f32 0.0, %v1438
        %v1440 = vpop.f32.mrb[0].mxu0
        %1441 = vmatprep.mubr.f32.mxu0 0.0
        %1442 = vmatmul.mubr.f32.gmra.mrb[0].mxu0 %v1344
        %v1443 = vpop.f32.mrb[0].mxu0
        %v1444 = vadd.f32 0.0, %v1443
        %v1445 = vpop.f32.mrb[0].mxu0
        %1446 = vmatprep.mubr.f32.mxu0 0.0
        %1447 = vmatmul.mubr.f32.gmra.mrb[0].mxu0 %v1347
        %v1448 = vpop.f32.mrb[0].mxu0
        %v1449 = vadd.f32 0.0, %v1448
        %v1450 = vpop.f32.mrb[0].mxu0
        %1451 = vmatprep.mubr.f32.mxu0 0.0
        %1452 = vmatmul.mubr.f32.gmra.mrb[0].mxu0 %v1350
        %v1453 = vpop.f32.mrb[0].mxu0
        %v1454 = vadd.f32 0.0, %v1453
        %v1455 = vpop.f32.mrb[0].mxu0
        %1456 = vdwg.mxu0
        %v1457 = vadd.f32 %v1088, %v1419
        %v1458 = vadd.f32 %v1089, %v1424
        %v1459 = vadd.f32 %v1090, %v1429
        %v1460 = vadd.f32 %v1091, %v1434
        %v1461 = vadd.f32 %v1092, %v1439
        %v1462 = vadd.f32 %v1093, %v1444
        %v1463 = vadd.f32 %v1094, %v1449
        %v1464 = vadd.f32 %v1095, %v1454
        %s1465 = scalar_lea.vmem [#allocation2], 88
        %v1466 = vld [vmem:[%s1465] sm:$0xff]
        %v1467 = vld [vmem:[%s1465 + $0x8] sm:$0xff]
        %v1468 = vld [vmem:[%s1465 + $0x10] sm:$0xff]
        %v1469 = vld [vmem:[%s1465 + $0x18] sm:$0xff]
        %v1470 = vld [vmem:[%s1465 + $0x20] sm:$0xff]
        %v1471 = vld [vmem:[%s1465 + $0x28] sm:$0xff]
        %v1472 = vld [vmem:[%s1465 + $0x30] sm:$0xff]
        %v1473 = vld [vmem:[%s1465 + $0x38] sm:$0xff]
        %s1474 = scalar_lea.vmem %s3, 384
        %v1475 = vld [vmem:[%s1474] sm:$0xff]
        %v1476 = vld [vmem:[%s1474 + $0x8] sm:$0xff]
        %v1477 = vld [vmem:[%s1474 + $0x10] sm:$0xff]
        %v1478 = vld [vmem:[%s1474 + $0x18] sm:$0xff]
        %v1479 = vld [vmem:[%s1474 + $0x20] sm:$0xff]
        %v1480 = vld [vmem:[%s1474 + $0x28] sm:$0xff]
        %v1481 = vld [vmem:[%s1474 + $0x30] sm:$0xff]
        %v1482 = vld [vmem:[%s1474 + $0x38] sm:$0xff]
        %v1483 = vld [vmem:[%s1474 + $0x40] sm:$0xff]
        %v1484 = vld [vmem:[%s1474 + $0x48] sm:$0xff]
        %v1485 = vld [vmem:[%s1474 + $0x50] sm:$0xff]
        %v1486 = vld [vmem:[%s1474 + $0x58] sm:$0xff]
        %v1488 = vsel %vm678, %v1466, 0
        %v1491 = vsel %vm678, %v1467, 0
        %v1494 = vsel %vm678, %v1468, 0
        %v1497 = vsel %vm678, %v1469, 0
        %v1500 = vsel %vm678, %v1470, 0
        %v1503 = vsel %vm678, %v1471, 0
        %v1506 = vsel %vm678, %v1472, 0
        %v1509 = vsel %vm678, %v1473, 0
        %1511 = vmatprep.subr.mxu0 0.0
        %1512 = vmatpush1.msra.mxu0 %v1475
        %1513 = vmatprep.subr.mxu0 0.0
        %1514 = vmatpush1.msra.mxu0 %v1476
        %1515 = vmatprep.subr.mxu0 0.0
        %1516 = vmatpush1.msra.mxu0 %v1477
        %1517 = vmatprep.subr.mxu0 0.0
        %1518 = vmatpush1.msra.mxu0 %v1478
        %1519 = vmatprep.subr.mxu0 0.0
        %1520 = vmatpush1.msra.mxu0 %v1479
        %1521 = vmatprep.subr.mxu0 0.0
        %1522 = vmatpush1.msra.mxu0 %v1480
        %1523 = vmatprep.subr.mxu0 0.0
        %1524 = vmatpush1.msra.mxu0 %v1481
        %1525 = vmatprep.subr.mxu0 0.0
        %1526 = vmatpush1.msra.mxu0 %v1482
        %1527 = vmatprep.subr.mxu0 0.0
        %1528 = vmatpush1.msra.mxu0 %v1483
        %1529 = vmatprep.subr.mxu0 0.0
        %1530 = vmatpush1.msra.mxu0 %v1484
        %1531 = vmatprep.subr.mxu0 0.0
        %1532 = vmatpush1.msra.mxu0 %v1485
        %1533 = vmatprep.subr.mxu0 0.0
        %1534 = vmatpush1.msra.mxu0 %v1486
        %1535 = vmatprep.subr.mxu0 0.0
        %1536 = vmatpush1.msra.mxu0 0.0
        %1537 = vmatprep.subr.mxu0 0.0
        %1538 = vmatpush1.msra.mxu0 0.0
        %1539 = vmatprep.subr.mxu0 0.0
        %1540 = vmatpush1.msra.mxu0 0.0
        %1541 = vmatprep.subr.mxu0 0.0
        %1542 = vmatpush1.msra.mxu0 0.0
        %1543 = vmatprep.subr.mxu0 0.0
        %1544 = vmatpush1.msra.mxu0 0.0
        %1545 = vmatprep.subr.mxu0 0.0
        %1546 = vmatpush1.msra.mxu0 0.0
        %1547 = vmatprep.subr.mxu0 0.0
        %1548 = vmatpush1.msra.mxu0 0.0
        %1549 = vmatprep.subr.mxu0 0.0
        %1550 = vmatpush1.msra.mxu0 0.0
        %1551 = vmatprep.subr.mxu0 0.0
        %1552 = vmatpush1.msra.mxu0 0.0
        %1553 = vmatprep.subr.mxu0 0.0
        %1554 = vmatpush1.msra.mxu0 0.0
        %1555 = vmatprep.subr.mxu0 0.0
        %1556 = vmatpush1.msra.mxu0 0.0
        %1557 = vmatprep.subr.mxu0 0.0
        %1558 = vmatpush1.msra.mxu0 0.0
        %1559 = vmatprep.subr.mxu0 0.0
        %1560 = vmatpush1.msra.mxu0 0.0
        %1561 = vmatprep.subr.mxu0 0.0
        %1562 = vmatpush1.msra.mxu0 0.0
        %1563 = vmatprep.subr.mxu0 0.0
        %1564 = vmatpush1.msra.mxu0 0.0
        %1565 = vmatprep.subr.mxu0 0.0
        %1566 = vmatpush1.msra.mxu0 0.0
        %1567 = vmatprep.subr.mxu0 0.0
        %1568 = vmatpush1.msra.mxu0 0.0
        %1569 = vmatprep.subr.mxu0 0.0
        %1570 = vmatpush1.msra.mxu0 0.0
        %1571 = vmatprep.subr.mxu0 0.0
        %1572 = vmatpush1.msra.mxu0 0.0
        %1573 = vmatprep.subr.mxu0 0.0
        %1574 = vmatpush1.msra.mxu0 0.0
        %1575 = vmatprep.mubr.f32.mxu0 0.0
        %1576 = vmatmul.mubr.f32.gmra.mrb[0].mxu0 %v1488
        %v1577 = vpop.f32.mrb[0].mxu0
        %v1578 = vadd.f32 0.0, %v1577
        %v1579 = vpop.f32.mrb[0].mxu0
        %1580 = vmatprep.mubr.f32.mxu0 0.0
        %1581 = vmatmul.mubr.f32.gmra.mrb[0].mxu0 %v1491
        %v1582 = vpop.f32.mrb[0].mxu0
        %v1583 = vadd.f32 0.0, %v1582
        %v1584 = vpop.f32.mrb[0].mxu0
        %1585 = vmatprep.mubr.f32.mxu0 0.0
        %1586 = vmatmul.mubr.f32.gmra.mrb[0].mxu0 %v1494
        %v1587 = vpop.f32.mrb[0].mxu0
        %v1588 = vadd.f32 0.0, %v1587
        %v1589 = vpop.f32.mrb[0].mxu0
        %1590 = vmatprep.mubr.f32.mxu0 0.0
        %1591 = vmatmul.mubr.f32.gmra.mrb[0].mxu0 %v1497
        %v1592 = vpop.f32.mrb[0].mxu0
        %v1593 = vadd.f32 0.0, %v1592
        %v1594 = vpop.f32.mrb[0].mxu0
        %1595 = vmatprep.mubr.f32.mxu0 0.0
        %1596 = vmatmul.mubr.f32.gmra.mrb[0].mxu0 %v1500
        %v1597 = vpop.f32.mrb[0].mxu0
        %v1598 = vadd.f32 0.0, %v1597
        %v1599 = vpop.f32.mrb[0].mxu0
        %1600 = vmatprep.mubr.f32.mxu0 0.0
        %1601 = vmatmul.mubr.f32.gmra.mrb[0].mxu0 %v1503
        %v1602 = vpop.f32.mrb[0].mxu0
        %v1603 = vadd.f32 0.0, %v1602
        %v1604 = vpop.f32.mrb[0].mxu0
        %1605 = vmatprep.mubr.f32.mxu0 0.0
        %1606 = vmatmul.mubr.f32.gmra.mrb[0].mxu0 %v1506
        %v1607 = vpop.f32.mrb[0].mxu0
        %v1608 = vadd.f32 0.0, %v1607
        %v1609 = vpop.f32.mrb[0].mxu0
        %1610 = vmatprep.mubr.f32.mxu0 0.0
        %1611 = vmatmul.mubr.f32.gmra.mrb[0].mxu0 %v1509
        %v1612 = vpop.f32.mrb[0].mxu0
        %v1613 = vadd.f32 0.0, %v1612
        %v1614 = vpop.f32.mrb[0].mxu0
        %1615 = vdwg.mxu0
        %v1616 = vadd.f32 %v1457, %v1578
        %v1617 = vadd.f32 %v1458, %v1583
        %v1618 = vadd.f32 %v1459, %v1588
        %v1619 = vadd.f32 %v1460, %v1593
        %v1620 = vadd.f32 %v1461, %v1598
        %v1621 = vadd.f32 %v1462, %v1603
        %v1622 = vadd.f32 %v1463, %v1608
        %v1623 = vadd.f32 %v1464, %v1613
        %s1624 = scalar_lea.vmem [#allocation2], 96
        %v1625 = vld [vmem:[%s1624] sm:$0xff]
        %v1626 = vld [vmem:[%s1624 + $0x8] sm:$0xff]
        %v1627 = vld [vmem:[%s1624 + $0x10] sm:$0xff]
        %v1628 = vld [vmem:[%s1624 + $0x18] sm:$0xff]
        %v1629 = vld [vmem:[%s1624 + $0x20] sm:$0xff]
        %v1630 = vld [vmem:[%s1624 + $0x28] sm:$0xff]
        %v1631 = vld [vmem:[%s1624 + $0x30] sm:$0xff]
        %v1632 = vld [vmem:[%s1624 + $0x38] sm:$0xff]
        %s1633 = scalar_lea.vmem %s3, 480
        %v1634 = vld [vmem:[%s1633] sm:$0xff]
        %v1635 = vld [vmem:[%s1633 + $0x8] sm:$0xff]
        %v1636 = vld [vmem:[%s1633 + $0x10] sm:$0xff]
        %v1637 = vld [vmem:[%s1633 + $0x18] sm:$0xff]
        %v1638 = vld [vmem:[%s1633 + $0x20] sm:$0xff]
        %v1639 = vld [vmem:[%s1633 + $0x28] sm:$0xff]
        %v1640 = vld [vmem:[%s1633 + $0x30] sm:$0xff]
        %v1641 = vld [vmem:[%s1633 + $0x38] sm:$0xff]
        %v1642 = vld [vmem:[%s1633 + $0x40] sm:$0xff]
        %v1643 = vld [vmem:[%s1633 + $0x48] sm:$0xff]
        %v1644 = vld [vmem:[%s1633 + $0x50] sm:$0xff]
        %v1645 = vld [vmem:[%s1633 + $0x58] sm:$0xff]
        %v1647 = vsel %vm678, %v1625, 0
        %v1650 = vsel %vm678, %v1626, 0
        %v1653 = vsel %vm678, %v1627, 0
        %v1656 = vsel %vm678, %v1628, 0
        %v1659 = vsel %vm678, %v1629, 0
        %v1662 = vsel %vm678, %v1630, 0
        %v1665 = vsel %vm678, %v1631, 0
        %v1668 = vsel %vm678, %v1632, 0
        %1670 = vmatprep.subr.mxu0 0.0
        %1671 = vmatpush1.msra.mxu0 %v1634
        %1672 = vmatprep.subr.mxu0 0.0
        %1673 = vmatpush1.msra.mxu0 %v1635
        %1674 = vmatprep.subr.mxu0 0.0
        %1675 = vmatpush1.msra.mxu0 %v1636
        %1676 = vmatprep.subr.mxu0 0.0
        %1677 = vmatpush1.msra.mxu0 %v1637
        %1678 = vmatprep.subr.mxu0 0.0
        %1679 = vmatpush1.msra.mxu0 %v1638
        %1680 = vmatprep.subr.mxu0 0.0
        %1681 = vmatpush1.msra.mxu0 %v1639
        %1682 = vmatprep.subr.mxu0 0.0
        %1683 = vmatpush1.msra.mxu0 %v1640
        %1684 = vmatprep.subr.mxu0 0.0
        %1685 = vmatpush1.msra.mxu0 %v1641
        %1686 = vmatprep.subr.mxu0 0.0
        %1687 = vmatpush1.msra.mxu0 %v1642
        %1688 = vmatprep.subr.mxu0 0.0
        %1689 = vmatpush1.msra.mxu0 %v1643
        %1690 = vmatprep.subr.mxu0 0.0
        %1691 = vmatpush1.msra.mxu0 %v1644
        %1692 = vmatprep.subr.mxu0 0.0
        %1693 = vmatpush1.msra.mxu0 %v1645
        %1694 = vmatprep.subr.mxu0 0.0
        %1695 = vmatpush1.msra.mxu0 0.0
        %1696 = vmatprep.subr.mxu0 0.0
        %1697 = vmatpush1.msra.mxu0 0.0
        %1698 = vmatprep.subr.mxu0 0.0
        %1699 = vmatpush1.msra.mxu0 0.0
        %1700 = vmatprep.subr.mxu0 0.0
        %1701 = vmatpush1.msra.mxu0 0.0
        %1702 = vmatprep.subr.mxu0 0.0
        %1703 = vmatpush1.msra.mxu0 0.0
        %1704 = vmatprep.subr.mxu0 0.0
        %1705 = vmatpush1.msra.mxu0 0.0
        %1706 = vmatprep.subr.mxu0 0.0
        %1707 = vmatpush1.msra.mxu0 0.0
        %1708 = vmatprep.subr.mxu0 0.0
        %1709 = vmatpush1.msra.mxu0 0.0
        %1710 = vmatprep.subr.mxu0 0.0
        %1711 = vmatpush1.msra.mxu0 0.0
        %1712 = vmatprep.subr.mxu0 0.0
        %1713 = vmatpush1.msra.mxu0 0.0
        %1714 = vmatprep.subr.mxu0 0.0
        %1715 = vmatpush1.msra.mxu0 0.0
        %1716 = vmatprep.subr.mxu0 0.0
        %1717 = vmatpush1.msra.mxu0 0.0
        %1718 = vmatprep.subr.mxu0 0.0
        %1719 = vmatpush1.msra.mxu0 0.0
        %1720 = vmatprep.subr.mxu0 0.0
        %1721 = vmatpush1.msra.mxu0 0.0
        %1722 = vmatprep.subr.mxu0 0.0
        %1723 = vmatpush1.msra.mxu0 0.0
        %1724 = vmatprep.subr.mxu0 0.0
        %1725 = vmatpush1.msra.mxu0 0.0
        %1726 = vmatprep.subr.mxu0 0.0
        %1727 = vmatpush1.msra.mxu0 0.0
        %1728 = vmatprep.subr.mxu0 0.0
        %1729 = vmatpush1.msra.mxu0 0.0
        %1730 = vmatprep.subr.mxu0 0.0
        %1731 = vmatpush1.msra.mxu0 0.0
        %1732 = vmatprep.subr.mxu0 0.0
        %1733 = vmatpush1.msra.mxu0 0.0
        %1734 = vmatprep.mubr.f32.mxu0 0.0
        %1735 = vmatmul.mubr.f32.gmra.mrb[0].mxu0 %v1647
        %v1736 = vpop.f32.mrb[0].mxu0
        %v1737 = vadd.f32 0.0, %v1736
        %v1738 = vpop.f32.mrb[0].mxu0
        %1739 = vmatprep.mubr.f32.mxu0 0.0
        %1740 = vmatmul.mubr.f32.gmra.mrb[0].mxu0 %v1650
        %v1741 = vpop.f32.mrb[0].mxu0
        %v1742 = vadd.f32 0.0, %v1741
        %v1743 = vpop.f32.mrb[0].mxu0
        %1744 = vmatprep.mubr.f32.mxu0 0.0
        %1745 = vmatmul.mubr.f32.gmra.mrb[0].mxu0 %v1653
        %v1746 = vpop.f32.mrb[0].mxu0
        %v1747 = vadd.f32 0.0, %v1746
        %v1748 = vpop.f32.mrb[0].mxu0
        %1749 = vmatprep.mubr.f32.mxu0 0.0
        %1750 = vmatmul.mubr.f32.gmra.mrb[0].mxu0 %v1656
        %v1751 = vpop.f32.mrb[0].mxu0
        %v1752 = vadd.f32 0.0, %v1751
        %v1753 = vpop.f32.mrb[0].mxu0
        %1754 = vmatprep.mubr.f32.mxu0 0.0
        %1755 = vmatmul.mubr.f32.gmra.mrb[0].mxu0 %v1659
        %v1756 = vpop.f32.mrb[0].mxu0
        %v1757 = vadd.f32 0.0, %v1756
        %v1758 = vpop.f32.mrb[0].mxu0
        %1759 = vmatprep.mubr.f32.mxu0 0.0
        %1760 = vmatmul.mubr.f32.gmra.mrb[0].mxu0 %v1662
        %v1761 = vpop.f32.mrb[0].mxu0
        %v1762 = vadd.f32 0.0, %v1761
        %v1763 = vpop.f32.mrb[0].mxu0
        %1764 = vmatprep.mubr.f32.mxu0 0.0
        %1765 = vmatmul.mubr.f32.gmra.mrb[0].mxu0 %v1665
        %v1766 = vpop.f32.mrb[0].mxu0
        %v1767 = vadd.f32 0.0, %v1766
        %v1768 = vpop.f32.mrb[0].mxu0
        %1769 = vmatprep.mubr.f32.mxu0 0.0
        %1770 = vmatmul.mubr.f32.gmra.mrb[0].mxu0 %v1668
        %v1771 = vpop.f32.mrb[0].mxu0
        %v1772 = vadd.f32 0.0, %v1771
        %v1773 = vpop.f32.mrb[0].mxu0
        %1774 = vdwg.mxu0
        %v1775 = vadd.f32 %v1616, %v1737
        %v1776 = vadd.f32 %v1617, %v1742
        %v1777 = vadd.f32 %v1618, %v1747
        %v1778 = vadd.f32 %v1619, %v1752
        %v1779 = vadd.f32 %v1620, %v1757
        %v1780 = vadd.f32 %v1621, %v1762
        %v1781 = vadd.f32 %v1622, %v1767
        %v1782 = vadd.f32 %v1623, %v1772
        %v1783 = vld [vmem:[%s410] sm:$0xff]
        %v1784 = vld [vmem:[%s410 + $0x8] sm:$0x3]
        %v1785 = vld [vmem:[%s410 + $0x10] sm:$0xff]
        %v1786 = vld [vmem:[%s410 + $0x18] sm:$0x3]
        %v1787 = vld [vmem:[%s410 + $0x20] sm:$0xff]
        %v1788 = vld [vmem:[%s410 + $0x28] sm:$0x3]
        %v1789 = vld [vmem:[%s410 + $0x30] sm:$0xff]
        %v1790 = vld [vmem:[%s410 + $0x38] sm:$0x3]
        %v1791 = vld [vmem:[%s410 + $0x40] sm:$0xff]
        %v1792 = vld [vmem:[%s410 + $0x48] sm:$0x3]
        %v1793 = vld [vmem:[%s410 + $0x50] sm:$0xff]
        %v1794 = vld [vmem:[%s410 + $0x58] sm:$0x3]
        %v1795 = vld [vmem:[%s410 + $0x60] sm:$0xff]
        %v1796 = vld [vmem:[%s410 + $0x68] sm:$0x3]
        %v1797 = vld [vmem:[%s410 + $0x70] sm:$0xff]
        %v1798 = vld [vmem:[%s410 + $0x78] sm:$0x3]
        %v1799 = vld [vmem:[%s410 + $0x80] sm:$0xff]
        %v1800 = vld [vmem:[%s410 + $0x88] sm:$0x3]
        %v1801 = vld [vmem:[%s410 + $0x90] sm:$0xff]
        %v1802 = vld [vmem:[%s410 + $0x98] sm:$0x3]
        %1803 = vst.msk [vmem:[#allocation2] sm:$0xff] %vm441, %v1783
        %1804 = vst.msk [vmem:[#allocation2 + $0x8] sm:$0xff] %vm441, %v1785
        %1805 = vst.msk [vmem:[#allocation2 + $0x10] sm:$0xff] %vm441, %v1787
        %1806 = vst.msk [vmem:[#allocation2 + $0x18] sm:$0xff] %vm441, %v1789
        %1807 = vst.msk [vmem:[#allocation2 + $0x20] sm:$0xff] %vm441, %v1791
        %1808 = vst.msk [vmem:[#allocation2 + $0x28] sm:$0xff] %vm441, %v1793
        %1809 = vst.msk [vmem:[#allocation2 + $0x30] sm:$0xff] %vm441, %v1795
        %1810 = vst.msk [vmem:[#allocation2 + $0x38] sm:$0xff] %vm441, %v1797
        %1811 = vst.msk [vmem:[#allocation2 + $0x40] sm:$0xff] %vm441, %v1799
        %1812 = vst.msk [vmem:[#allocation2 + $0x48] sm:$0xff] %vm441, %v1801
        %1833 = vrot.lane.b32.xlu0 %v1783, 32
        %v1834 = vpop.permute.xlu0 %1833
        %1835 = vrot.lane.b32.xlu0 %v1784, 32
        %v1836 = vpop.permute.xlu0 %1835
        %1837 = vrot.lane.b32.xlu0 %v1785, 32
        %v1838 = vpop.permute.xlu0 %1837
        %1839 = vrot.lane.b32.xlu0 %v1786, 32
        %v1840 = vpop.permute.xlu0 %1839
        %1841 = vrot.lane.b32.xlu0 %v1787, 32
        %v1842 = vpop.permute.xlu0 %1841
        %1843 = vrot.lane.b32.xlu0 %v1788, 32
        %v1844 = vpop.permute.xlu0 %1843
        %1845 = vrot.lane.b32.xlu0 %v1789, 32
        %v1846 = vpop.permute.xlu0 %1845
        %1847 = vrot.lane.b32.xlu0 %v1790, 32
        %v1848 = vpop.permute.xlu0 %1847
        %1849 = vrot.lane.b32.xlu0 %v1791, 32
        %v1850 = vpop.permute.xlu0 %1849
        %1851 = vrot.lane.b32.xlu0 %v1792, 32
        %v1852 = vpop.permute.xlu0 %1851
        %1853 = vrot.lane.b32.xlu0 %v1793, 32
        %v1854 = vpop.permute.xlu0 %1853
        %1855 = vrot.lane.b32.xlu0 %v1794, 32
        %v1856 = vpop.permute.xlu0 %1855
        %1857 = vrot.lane.b32.xlu0 %v1795, 32
        %v1858 = vpop.permute.xlu0 %1857
        %1859 = vrot.lane.b32.xlu0 %v1796, 32
        %v1860 = vpop.permute.xlu0 %1859
        %1861 = vrot.lane.b32.xlu0 %v1797, 32
        %v1862 = vpop.permute.xlu0 %1861
        %1863 = vrot.lane.b32.xlu0 %v1798, 32
        %v1864 = vpop.permute.xlu0 %1863
        %1865 = vrot.lane.b32.xlu0 %v1799, 32
        %v1866 = vpop.permute.xlu0 %1865
        %1867 = vrot.lane.b32.xlu0 %v1800, 32
        %v1868 = vpop.permute.xlu0 %1867
        %1869 = vrot.lane.b32.xlu0 %v1801, 32
        %v1870 = vpop.permute.xlu0 %1869
        %1871 = vrot.lane.b32.xlu0 %v1802, 32
        %v1872 = vpop.permute.xlu0 %1871
        %1893 = vst.msk [vmem:[#allocation2 - $0x1] sm:$0xfe] %vm532, %v1834
        %1894 = vst.msk [vmem:[#allocation2 + $0x7] sm:$0x1] %vm534, %v1836
        %1895 = vst.msk [vmem:[#allocation2 + $0x7] sm:$0xfe] %vm532, %v1838
        %1896 = vst.msk [vmem:[#allocation2 + $0xf] sm:$0x1] %vm534, %v1840
        %1897 = vst.msk [vmem:[#allocation2 + $0xf] sm:$0xfe] %vm532, %v1842
        %1898 = vst.msk [vmem:[#allocation2 + $0x17] sm:$0x1] %vm534, %v1844
        %1899 = vst.msk [vmem:[#allocation2 + $0x17] sm:$0xfe] %vm532, %v1846
        %1900 = vst.msk [vmem:[#allocation2 + $0x1f] sm:$0x1] %vm534, %v1848
        %1901 = vst.msk [vmem:[#allocation2 + $0x1f] sm:$0xfe] %vm532, %v1850
        %1902 = vst.msk [vmem:[#allocation2 + $0x27] sm:$0x1] %vm534, %v1852
        %1903 = vst.msk [vmem:[#allocation2 + $0x27] sm:$0xfe] %vm532, %v1854
        %1904 = vst.msk [vmem:[#allocation2 + $0x2f] sm:$0x1] %vm534, %v1856
        %1905 = vst.msk [vmem:[#allocation2 + $0x2f] sm:$0xfe] %vm532, %v1858
        %1906 = vst.msk [vmem:[#allocation2 + $0x37] sm:$0x1] %vm534, %v1860
        %1907 = vst.msk [vmem:[#allocation2 + $0x37] sm:$0xfe] %vm532, %v1862
        %1908 = vst.msk [vmem:[#allocation2 + $0x3f] sm:$0x1] %vm534, %v1864
        %1909 = vst.msk [vmem:[#allocation2 + $0x3f] sm:$0xfe] %vm532, %v1866
        %1910 = vst.msk [vmem:[#allocation2 + $0x47] sm:$0x1] %vm534, %v1868
        %1911 = vst.msk [vmem:[#allocation2 + $0x47] sm:$0xfe] %vm532, %v1870
        %1912 = vst.msk [vmem:[#allocation2 + $0x4f] sm:$0x1] %vm534, %v1872
        %1913 = vrot.lane.b32.xlu0 %v1783, 64
        %v1914 = vpop.permute.xlu0 %1913
        %1915 = vrot.lane.b32.xlu0 %v1784, 64
        %v1916 = vpop.permute.xlu0 %1915
        %1917 = vrot.lane.b32.xlu0 %v1785, 64
        %v1918 = vpop.permute.xlu0 %1917
        %1919 = vrot.lane.b32.xlu0 %v1786, 64
        %v1920 = vpop.permute.xlu0 %1919
        %1921 = vrot.lane.b32.xlu0 %v1787, 64
        %v1922 = vpop.permute.xlu0 %1921
        %1923 = vrot.lane.b32.xlu0 %v1788, 64
        %v1924 = vpop.permute.xlu0 %1923
        %1925 = vrot.lane.b32.xlu0 %v1789, 64
        %v1926 = vpop.permute.xlu0 %1925
        %1927 = vrot.lane.b32.xlu0 %v1790, 64
        %v1928 = vpop.permute.xlu0 %1927
        %1929 = vrot.lane.b32.xlu0 %v1791, 64
        %v1930 = vpop.permute.xlu0 %1929
        %1931 = vrot.lane.b32.xlu0 %v1792, 64
        %v1932 = vpop.permute.xlu0 %1931
        %1933 = vrot.lane.b32.xlu0 %v1793, 64
        %v1934 = vpop.permute.xlu0 %1933
        %1935 = vrot.lane.b32.xlu0 %v1794, 64
        %v1936 = vpop.permute.xlu0 %1935
        %1937 = vrot.lane.b32.xlu0 %v1795, 64
        %v1938 = vpop.permute.xlu0 %1937
        %1939 = vrot.lane.b32.xlu0 %v1796, 64
        %v1940 = vpop.permute.xlu0 %1939
        %1941 = vrot.lane.b32.xlu0 %v1797, 64
        %v1942 = vpop.permute.xlu0 %1941
        %1943 = vrot.lane.b32.xlu0 %v1798, 64
        %v1944 = vpop.permute.xlu0 %1943
        %1945 = vrot.lane.b32.xlu0 %v1799, 64
        %v1946 = vpop.permute.xlu0 %1945
        %1947 = vrot.lane.b32.xlu0 %v1800, 64
        %v1948 = vpop.permute.xlu0 %1947
        %1949 = vrot.lane.b32.xlu0 %v1801, 64
        %v1950 = vpop.permute.xlu0 %1949
        %1951 = vrot.lane.b32.xlu0 %v1802, 64
        %v1952 = vpop.permute.xlu0 %1951
        %1973 = vst.msk [vmem:[#allocation2 - $0x2] sm:$0xfc] %vm614, %v1914
        %1974 = vst.msk [vmem:[#allocation2 + $0x6] sm:$0x3] %vm616, %v1916
        %1975 = vst.msk [vmem:[#allocation2 + $0x6] sm:$0xfc] %vm614, %v1918
        %1976 = vst.msk [vmem:[#allocation2 + $0xe] sm:$0x3] %vm616, %v1920
        %1977 = vst.msk [vmem:[#allocation2 + $0xe] sm:$0xfc] %vm614, %v1922
        %1978 = vst.msk [vmem:[#allocation2 + $0x16] sm:$0x3] %vm616, %v1924
        %1979 = vst.msk [vmem:[#allocation2 + $0x16] sm:$0xfc] %vm614, %v1926
        %1980 = vst.msk [vmem:[#allocation2 + $0x1e] sm:$0x3] %vm616, %v1928
        %1981 = vst.msk [vmem:[#allocation2 + $0x1e] sm:$0xfc] %vm614, %v1930
        %1982 = vst.msk [vmem:[#allocation2 + $0x26] sm:$0x3] %vm616, %v1932
        %1983 = vst.msk [vmem:[#allocation2 + $0x26] sm:$0xfc] %vm614, %v1934
        %1984 = vst.msk [vmem:[#allocation2 + $0x2e] sm:$0x3] %vm616, %v1936
        %1985 = vst.msk [vmem:[#allocation2 + $0x2e] sm:$0xfc] %vm614, %v1938
        %1986 = vst.msk [vmem:[#allocation2 + $0x36] sm:$0x3] %vm616, %v1940
        %1987 = vst.msk [vmem:[#allocation2 + $0x36] sm:$0xfc] %vm614, %v1942
        %1988 = vst.msk [vmem:[#allocation2 + $0x3e] sm:$0x3] %vm616, %v1944
        %1989 = vst.msk [vmem:[#allocation2 + $0x3e] sm:$0xfc] %vm614, %v1946
        %1990 = vst.msk [vmem:[#allocation2 + $0x46] sm:$0x3] %vm616, %v1948
        %1991 = vst.msk [vmem:[#allocation2 + $0x46] sm:$0xfc] %vm614, %v1950
        %1992 = vst.msk [vmem:[#allocation2 + $0x4e] sm:$0x3] %vm616, %v1952
        %v1993 = vld [vmem:[#allocation2] sm:$0xff]
        %v1994 = vld [vmem:[#allocation2 + $0x8] sm:$0xff]
        %v1995 = vld [vmem:[#allocation2 + $0x10] sm:$0xff]
        %v1996 = vld [vmem:[#allocation2 + $0x18] sm:$0xff]
        %v1997 = vld [vmem:[#allocation2 + $0x20] sm:$0xff]
        %v1998 = vld [vmem:[#allocation2 + $0x28] sm:$0xff]
        %v1999 = vld [vmem:[#allocation2 + $0x30] sm:$0xff]
        %v2000 = vld [vmem:[#allocation2 + $0x38] sm:$0xff]
        %s2001 = scalar_lea.vmem %s3, 576
        %v2002 = vld [vmem:[%s2001] sm:$0xff]
        %v2003 = vld [vmem:[%s2001 + $0x8] sm:$0xff]
        %v2004 = vld [vmem:[%s2001 + $0x10] sm:$0xff]
        %v2005 = vld [vmem:[%s2001 + $0x18] sm:$0xff]
        %v2006 = vld [vmem:[%s2001 + $0x20] sm:$0xff]
        %v2007 = vld [vmem:[%s2001 + $0x28] sm:$0xff]
        %v2008 = vld [vmem:[%s2001 + $0x30] sm:$0xff]
        %v2009 = vld [vmem:[%s2001 + $0x38] sm:$0xff]
        %v2010 = vld [vmem:[%s2001 + $0x40] sm:$0xff]
        %v2011 = vld [vmem:[%s2001 + $0x48] sm:$0xff]
        %v2012 = vld [vmem:[%s2001 + $0x50] sm:$0xff]
        %v2013 = vld [vmem:[%s2001 + $0x58] sm:$0xff]
        %v2015 = vsel %vm678, %v1993, 0
        %v2018 = vsel %vm678, %v1994, 0
        %v2021 = vsel %vm678, %v1995, 0
        %v2024 = vsel %vm678, %v1996, 0
        %v2027 = vsel %vm678, %v1997, 0
        %v2030 = vsel %vm678, %v1998, 0
        %v2033 = vsel %vm678, %v1999, 0
        %v2036 = vsel %vm678, %v2000, 0
        %2038 = vmatprep.subr.mxu0 0.0
        %2039 = vmatpush1.msra.mxu0 %v2002
        %2040 = vmatprep.subr.mxu0 0.0
        %2041 = vmatpush1.msra.mxu0 %v2003
        %2042 = vmatprep.subr.mxu0 0.0
        %2043 = vmatpush1.msra.mxu0 %v2004
        %2044 = vmatprep.subr.mxu0 0.0
        %2045 = vmatpush1.msra.mxu0 %v2005
        %2046 = vmatprep.subr.mxu0 0.0
        %2047 = vmatpush1.msra.mxu0 %v2006
        %2048 = vmatprep.subr.mxu0 0.0
        %2049 = vmatpush1.msra.mxu0 %v2007
        %2050 = vmatprep.subr.mxu0 0.0
        %2051 = vmatpush1.msra.mxu0 %v2008
        %2052 = vmatprep.subr.mxu0 0.0
        %2053 = vmatpush1.msra.mxu0 %v2009
        %2054 = vmatprep.subr.mxu0 0.0
        %2055 = vmatpush1.msra.mxu0 %v2010
        %2056 = vmatprep.subr.mxu0 0.0
        %2057 = vmatpush1.msra.mxu0 %v2011
        %2058 = vmatprep.subr.mxu0 0.0
        %2059 = vmatpush1.msra.mxu0 %v2012
        %2060 = vmatprep.subr.mxu0 0.0
        %2061 = vmatpush1.msra.mxu0 %v2013
        %2062 = vmatprep.subr.mxu0 0.0
        %2063 = vmatpush1.msra.mxu0 0.0
        %2064 = vmatprep.subr.mxu0 0.0
        %2065 = vmatpush1.msra.mxu0 0.0
        %2066 = vmatprep.subr.mxu0 0.0
        %2067 = vmatpush1.msra.mxu0 0.0
        %2068 = vmatprep.subr.mxu0 0.0
        %2069 = vmatpush1.msra.mxu0 0.0
        %2070 = vmatprep.subr.mxu0 0.0
        %2071 = vmatpush1.msra.mxu0 0.0
        %2072 = vmatprep.subr.mxu0 0.0
        %2073 = vmatpush1.msra.mxu0 0.0
        %2074 = vmatprep.subr.mxu0 0.0
        %2075 = vmatpush1.msra.mxu0 0.0
        %2076 = vmatprep.subr.mxu0 0.0
        %2077 = vmatpush1.msra.mxu0 0.0
        %2078 = vmatprep.subr.mxu0 0.0
        %2079 = vmatpush1.msra.mxu0 0.0
        %2080 = vmatprep.subr.mxu0 0.0
        %2081 = vmatpush1.msra.mxu0 0.0
        %2082 = vmatprep.subr.mxu0 0.0
        %2083 = vmatpush1.msra.mxu0 0.0
        %2084 = vmatprep.subr.mxu0 0.0
        %2085 = vmatpush1.msra.mxu0 0.0
        %2086 = vmatprep.subr.mxu0 0.0
        %2087 = vmatpush1.msra.mxu0 0.0
        %2088 = vmatprep.subr.mxu0 0.0
        %2089 = vmatpush1.msra.mxu0 0.0
        %2090 = vmatprep.subr.mxu0 0.0
        %2091 = vmatpush1.msra.mxu0 0.0
        %2092 = vmatprep.subr.mxu0 0.0
        %2093 = vmatpush1.msra.mxu0 0.0
        %2094 = vmatprep.subr.mxu0 0.0
        %2095 = vmatpush1.msra.mxu0 0.0
        %2096 = vmatprep.subr.mxu0 0.0
        %2097 = vmatpush1.msra.mxu0 0.0
        %2098 = vmatprep.subr.mxu0 0.0
        %2099 = vmatpush1.msra.mxu0 0.0
        %2100 = vmatprep.subr.mxu0 0.0
        %2101 = vmatpush1.msra.mxu0 0.0
        %2102 = vmatprep.mubr.f32.mxu0 0.0
        %2103 = vmatmul.mubr.f32.gmra.mrb[0].mxu0 %v2015
        %v2104 = vpop.f32.mrb[0].mxu0
        %v2105 = vadd.f32 0.0, %v2104
        %v2106 = vpop.f32.mrb[0].mxu0
        %2107 = vmatprep.mubr.f32.mxu0 0.0
        %2108 = vmatmul.mubr.f32.gmra.mrb[0].mxu0 %v2018
        %v2109 = vpop.f32.mrb[0].mxu0
        %v2110 = vadd.f32 0.0, %v2109
        %v2111 = vpop.f32.mrb[0].mxu0
        %2112 = vmatprep.mubr.f32.mxu0 0.0
        %2113 = vmatmul.mubr.f32.gmra.mrb[0].mxu0 %v2021
        %v2114 = vpop.f32.mrb[0].mxu0
        %v2115 = vadd.f32 0.0, %v2114
        %v2116 = vpop.f32.mrb[0].mxu0
        %2117 = vmatprep.mubr.f32.mxu0 0.0
        %2118 = vmatmul.mubr.f32.gmra.mrb[0].mxu0 %v2024
        %v2119 = vpop.f32.mrb[0].mxu0
        %v2120 = vadd.f32 0.0, %v2119
        %v2121 = vpop.f32.mrb[0].mxu0
        %2122 = vmatprep.mubr.f32.mxu0 0.0
        %2123 = vmatmul.mubr.f32.gmra.mrb[0].mxu0 %v2027
        %v2124 = vpop.f32.mrb[0].mxu0
        %v2125 = vadd.f32 0.0, %v2124
        %v2126 = vpop.f32.mrb[0].mxu0
        %2127 = vmatprep.mubr.f32.mxu0 0.0
        %2128 = vmatmul.mubr.f32.gmra.mrb[0].mxu0 %v2030
        %v2129 = vpop.f32.mrb[0].mxu0
        %v2130 = vadd.f32 0.0, %v2129
        %v2131 = vpop.f32.mrb[0].mxu0
        %2132 = vmatprep.mubr.f32.mxu0 0.0
        %2133 = vmatmul.mubr.f32.gmra.mrb[0].mxu0 %v2033
        %v2134 = vpop.f32.mrb[0].mxu0
        %v2135 = vadd.f32 0.0, %v2134
        %v2136 = vpop.f32.mrb[0].mxu0
        %2137 = vmatprep.mubr.f32.mxu0 0.0
        %2138 = vmatmul.mubr.f32.gmra.mrb[0].mxu0 %v2036
        %v2139 = vpop.f32.mrb[0].mxu0
        %v2140 = vadd.f32 0.0, %v2139
        %v2141 = vpop.f32.mrb[0].mxu0
        %2142 = vdwg.mxu0
        %v2143 = vadd.f32 %v1775, %v2105
        %v2144 = vadd.f32 %v1776, %v2110
        %v2145 = vadd.f32 %v1777, %v2115
        %v2146 = vadd.f32 %v1778, %v2120
        %v2147 = vadd.f32 %v1779, %v2125
        %v2148 = vadd.f32 %v1780, %v2130
        %v2149 = vadd.f32 %v1781, %v2135
        %v2150 = vadd.f32 %v1782, %v2140
        %v2151 = vld [vmem:[%s656] sm:$0xff]
        %v2152 = vld [vmem:[%s656 + $0x8] sm:$0xff]
        %v2153 = vld [vmem:[%s656 + $0x10] sm:$0xff]
        %v2154 = vld [vmem:[%s656 + $0x18] sm:$0xff]
        %v2155 = vld [vmem:[%s656 + $0x20] sm:$0xff]
        %v2156 = vld [vmem:[%s656 + $0x28] sm:$0xff]
        %v2157 = vld [vmem:[%s656 + $0x30] sm:$0xff]
        %v2158 = vld [vmem:[%s656 + $0x38] sm:$0xff]
        %s2159 = scalar_lea.vmem %s3, 672
        %v2160 = vld [vmem:[%s2159] sm:$0xff]
        %v2161 = vld [vmem:[%s2159 + $0x8] sm:$0xff]
        %v2162 = vld [vmem:[%s2159 + $0x10] sm:$0xff]
        %v2163 = vld [vmem:[%s2159 + $0x18] sm:$0xff]
        %v2164 = vld [vmem:[%s2159 + $0x20] sm:$0xff]
        %v2165 = vld [vmem:[%s2159 + $0x28] sm:$0xff]
        %v2166 = vld [vmem:[%s2159 + $0x30] sm:$0xff]
        %v2167 = vld [vmem:[%s2159 + $0x38] sm:$0xff]
        %v2168 = vld [vmem:[%s2159 + $0x40] sm:$0xff]
        %v2169 = vld [vmem:[%s2159 + $0x48] sm:$0xff]
        %v2170 = vld [vmem:[%s2159 + $0x50] sm:$0xff]
        %v2171 = vld [vmem:[%s2159 + $0x58] sm:$0xff]
        %v2173 = vsel %vm678, %v2151, 0
        %v2176 = vsel %vm678, %v2152, 0
        %v2179 = vsel %vm678, %v2153, 0
        %v2182 = vsel %vm678, %v2154, 0
        %v2185 = vsel %vm678, %v2155, 0
        %v2188 = vsel %vm678, %v2156, 0
        %v2191 = vsel %vm678, %v2157, 0
        %v2194 = vsel %vm678, %v2158, 0
        %2196 = vmatprep.subr.mxu0 0.0
        %2197 = vmatpush1.msra.mxu0 %v2160
        %2198 = vmatprep.subr.mxu0 0.0
        %2199 = vmatpush1.msra.mxu0 %v2161
        %2200 = vmatprep.subr.mxu0 0.0
        %2201 = vmatpush1.msra.mxu0 %v2162
        %2202 = vmatprep.subr.mxu0 0.0
        %2203 = vmatpush1.msra.mxu0 %v2163
        %2204 = vmatprep.subr.mxu0 0.0
        %2205 = vmatpush1.msra.mxu0 %v2164
        %2206 = vmatprep.subr.mxu0 0.0
        %2207 = vmatpush1.msra.mxu0 %v2165
        %2208 = vmatprep.subr.mxu0 0.0
        %2209 = vmatpush1.msra.mxu0 %v2166
        %2210 = vmatprep.subr.mxu0 0.0
        %2211 = vmatpush1.msra.mxu0 %v2167
        %2212 = vmatprep.subr.mxu0 0.0
        %2213 = vmatpush1.msra.mxu0 %v2168
        %2214 = vmatprep.subr.mxu0 0.0
        %2215 = vmatpush1.msra.mxu0 %v2169
        %2216 = vmatprep.subr.mxu0 0.0
        %2217 = vmatpush1.msra.mxu0 %v2170
        %2218 = vmatprep.subr.mxu0 0.0
        %2219 = vmatpush1.msra.mxu0 %v2171
        %2220 = vmatprep.subr.mxu0 0.0
        %2221 = vmatpush1.msra.mxu0 0.0
        %2222 = vmatprep.subr.mxu0 0.0
        %2223 = vmatpush1.msra.mxu0 0.0
        %2224 = vmatprep.subr.mxu0 0.0
        %2225 = vmatpush1.msra.mxu0 0.0
        %2226 = vmatprep.subr.mxu0 0.0
        %2227 = vmatpush1.msra.mxu0 0.0
        %2228 = vmatprep.subr.mxu0 0.0
        %2229 = vmatpush1.msra.mxu0 0.0
        %2230 = vmatprep.subr.mxu0 0.0
        %2231 = vmatpush1.msra.mxu0 0.0
        %2232 = vmatprep.subr.mxu0 0.0
        %2233 = vmatpush1.msra.mxu0 0.0
        %2234 = vmatprep.subr.mxu0 0.0
        %2235 = vmatpush1.msra.mxu0 0.0
        %2236 = vmatprep.subr.mxu0 0.0
        %2237 = vmatpush1.msra.mxu0 0.0
        %2238 = vmatprep.subr.mxu0 0.0
        %2239 = vmatpush1.msra.mxu0 0.0
        %2240 = vmatprep.subr.mxu0 0.0
        %2241 = vmatpush1.msra.mxu0 0.0
        %2242 = vmatprep.subr.mxu0 0.0
        %2243 = vmatpush1.msra.mxu0 0.0
        %2244 = vmatprep.subr.mxu0 0.0
        %2245 = vmatpush1.msra.mxu0 0.0
        %2246 = vmatprep.subr.mxu0 0.0
        %2247 = vmatpush1.msra.mxu0 0.0
        %2248 = vmatprep.subr.mxu0 0.0
        %2249 = vmatpush1.msra.mxu0 0.0
        %2250 = vmatprep.subr.mxu0 0.0
        %2251 = vmatpush1.msra.mxu0 0.0
        %2252 = vmatprep.subr.mxu0 0.0
        %2253 = vmatpush1.msra.mxu0 0.0
        %2254 = vmatprep.subr.mxu0 0.0
        %2255 = vmatpush1.msra.mxu0 0.0
        %2256 = vmatprep.subr.mxu0 0.0
        %2257 = vmatpush1.msra.mxu0 0.0
        %2258 = vmatprep.subr.mxu0 0.0
        %2259 = vmatpush1.msra.mxu0 0.0
        %2260 = vmatprep.mubr.f32.mxu0 0.0
        %2261 = vmatmul.mubr.f32.gmra.mrb[0].mxu0 %v2173
        %v2262 = vpop.f32.mrb[0].mxu0
        %v2263 = vadd.f32 0.0, %v2262
        %v2264 = vpop.f32.mrb[0].mxu0
        %2265 = vmatprep.mubr.f32.mxu0 0.0
        %2266 = vmatmul.mubr.f32.gmra.mrb[0].mxu0 %v2176
        %v2267 = vpop.f32.mrb[0].mxu0
        %v2268 = vadd.f32 0.0, %v2267
        %v2269 = vpop.f32.mrb[0].mxu0
        %2270 = vmatprep.mubr.f32.mxu0 0.0
        %2271 = vmatmul.mubr.f32.gmra.mrb[0].mxu0 %v2179
        %v2272 = vpop.f32.mrb[0].mxu0
        %v2273 = vadd.f32 0.0, %v2272
        %v2274 = vpop.f32.mrb[0].mxu0
        %2275 = vmatprep.mubr.f32.mxu0 0.0
        %2276 = vmatmul.mubr.f32.gmra.mrb[0].mxu0 %v2182
        %v2277 = vpop.f32.mrb[0].mxu0
        %v2278 = vadd.f32 0.0, %v2277
        %v2279 = vpop.f32.mrb[0].mxu0
        %2280 = vmatprep.mubr.f32.mxu0 0.0
        %2281 = vmatmul.mubr.f32.gmra.mrb[0].mxu0 %v2185
        %v2282 = vpop.f32.mrb[0].mxu0
        %v2283 = vadd.f32 0.0, %v2282
        %v2284 = vpop.f32.mrb[0].mxu0
        %2285 = vmatprep.mubr.f32.mxu0 0.0
        %2286 = vmatmul.mubr.f32.gmra.mrb[0].mxu0 %v2188
        %v2287 = vpop.f32.mrb[0].mxu0
        %v2288 = vadd.f32 0.0, %v2287
        %v2289 = vpop.f32.mrb[0].mxu0
        %2290 = vmatprep.mubr.f32.mxu0 0.0
        %2291 = vmatmul.mubr.f32.gmra.mrb[0].mxu0 %v2191
        %v2292 = vpop.f32.mrb[0].mxu0
        %v2293 = vadd.f32 0.0, %v2292
        %v2294 = vpop.f32.mrb[0].mxu0
        %2295 = vmatprep.mubr.f32.mxu0 0.0
        %2296 = vmatmul.mubr.f32.gmra.mrb[0].mxu0 %v2194
        %v2297 = vpop.f32.mrb[0].mxu0
        %v2298 = vadd.f32 0.0, %v2297
        %v2299 = vpop.f32.mrb[0].mxu0
        %2300 = vdwg.mxu0
        %v2301 = vadd.f32 %v2143, %v2263
        %v2302 = vadd.f32 %v2144, %v2268
        %v2303 = vadd.f32 %v2145, %v2273
        %v2304 = vadd.f32 %v2146, %v2278
        %v2305 = vadd.f32 %v2147, %v2283
        %v2306 = vadd.f32 %v2148, %v2288
        %v2307 = vadd.f32 %v2149, %v2293
        %v2308 = vadd.f32 %v2150, %v2298
        %v2309 = vld [vmem:[%s937] sm:$0xff]
        %v2310 = vld [vmem:[%s937 + $0x8] sm:$0xff]
        %v2311 = vld [vmem:[%s937 + $0x10] sm:$0xff]
        %v2312 = vld [vmem:[%s937 + $0x18] sm:$0xff]
        %v2313 = vld [vmem:[%s937 + $0x20] sm:$0xff]
        %v2314 = vld [vmem:[%s937 + $0x28] sm:$0xff]
        %v2315 = vld [vmem:[%s937 + $0x30] sm:$0xff]
        %v2316 = vld [vmem:[%s937 + $0x38] sm:$0xff]
        %s2317 = scalar_lea.vmem %s3, 768
        %v2318 = vld [vmem:[%s2317] sm:$0xff]
        %v2319 = vld [vmem:[%s2317 + $0x8] sm:$0xff]
        %v2320 = vld [vmem:[%s2317 + $0x10] sm:$0xff]
        %v2321 = vld [vmem:[%s2317 + $0x18] sm:$0xff]
        %v2322 = vld [vmem:[%s2317 + $0x20] sm:$0xff]
        %v2323 = vld [vmem:[%s2317 + $0x28] sm:$0xff]
        %v2324 = vld [vmem:[%s2317 + $0x30] sm:$0xff]
        %v2325 = vld [vmem:[%s2317 + $0x38] sm:$0xff]
        %v2326 = vld [vmem:[%s2317 + $0x40] sm:$0xff]
        %v2327 = vld [vmem:[%s2317 + $0x48] sm:$0xff]
        %v2328 = vld [vmem:[%s2317 + $0x50] sm:$0xff]
        %v2329 = vld [vmem:[%s2317 + $0x58] sm:$0xff]
        %v2331 = vsel %vm678, %v2309, 0
        %v2334 = vsel %vm678, %v2310, 0
        %v2337 = vsel %vm678, %v2311, 0
        %v2340 = vsel %vm678, %v2312, 0
        %v2343 = vsel %vm678, %v2313, 0
        %v2346 = vsel %vm678, %v2314, 0
        %v2349 = vsel %vm678, %v2315, 0
        %v2352 = vsel %vm678, %v2316, 0
        %2354 = vmatprep.subr.mxu0 0.0
        %2355 = vmatpush1.msra.mxu0 %v2318
        %2356 = vmatprep.subr.mxu0 0.0
        %2357 = vmatpush1.msra.mxu0 %v2319
        %2358 = vmatprep.subr.mxu0 0.0
        %2359 = vmatpush1.msra.mxu0 %v2320
        %2360 = vmatprep.subr.mxu0 0.0
        %2361 = vmatpush1.msra.mxu0 %v2321
        %2362 = vmatprep.subr.mxu0 0.0
        %2363 = vmatpush1.msra.mxu0 %v2322
        %2364 = vmatprep.subr.mxu0 0.0
        %2365 = vmatpush1.msra.mxu0 %v2323
        %2366 = vmatprep.subr.mxu0 0.0
        %2367 = vmatpush1.msra.mxu0 %v2324
        %2368 = vmatprep.subr.mxu0 0.0
        %2369 = vmatpush1.msra.mxu0 %v2325
        %2370 = vmatprep.subr.mxu0 0.0
        %2371 = vmatpush1.msra.mxu0 %v2326
        %2372 = vmatprep.subr.mxu0 0.0
        %2373 = vmatpush1.msra.mxu0 %v2327
        %2374 = vmatprep.subr.mxu0 0.0
        %2375 = vmatpush1.msra.mxu0 %v2328
        %2376 = vmatprep.subr.mxu0 0.0
        %2377 = vmatpush1.msra.mxu0 %v2329
        %2378 = vmatprep.subr.mxu0 0.0
        %2379 = vmatpush1.msra.mxu0 0.0
        %2380 = vmatprep.subr.mxu0 0.0
        %2381 = vmatpush1.msra.mxu0 0.0
        %2382 = vmatprep.subr.mxu0 0.0
        %2383 = vmatpush1.msra.mxu0 0.0
        %2384 = vmatprep.subr.mxu0 0.0
        %2385 = vmatpush1.msra.mxu0 0.0
        %2386 = vmatprep.subr.mxu0 0.0
        %2387 = vmatpush1.msra.mxu0 0.0
        %2388 = vmatprep.subr.mxu0 0.0
        %2389 = vmatpush1.msra.mxu0 0.0
        %2390 = vmatprep.subr.mxu0 0.0
        %2391 = vmatpush1.msra.mxu0 0.0
        %2392 = vmatprep.subr.mxu0 0.0
        %2393 = vmatpush1.msra.mxu0 0.0
        %2394 = vmatprep.subr.mxu0 0.0
        %2395 = vmatpush1.msra.mxu0 0.0
        %2396 = vmatprep.subr.mxu0 0.0
        %2397 = vmatpush1.msra.mxu0 0.0
        %2398 = vmatprep.subr.mxu0 0.0
        %2399 = vmatpush1.msra.mxu0 0.0
        %2400 = vmatprep.subr.mxu0 0.0
        %2401 = vmatpush1.msra.mxu0 0.0
        %2402 = vmatprep.subr.mxu0 0.0
        %2403 = vmatpush1.msra.mxu0 0.0
        %2404 = vmatprep.subr.mxu0 0.0
        %2405 = vmatpush1.msra.mxu0 0.0
        %2406 = vmatprep.subr.mxu0 0.0
        %2407 = vmatpush1.msra.mxu0 0.0
        %2408 = vmatprep.subr.mxu0 0.0
        %2409 = vmatpush1.msra.mxu0 0.0
        %2410 = vmatprep.subr.mxu0 0.0
        %2411 = vmatpush1.msra.mxu0 0.0
        %2412 = vmatprep.subr.mxu0 0.0
        %2413 = vmatpush1.msra.mxu0 0.0
        %2414 = vmatprep.subr.mxu0 0.0
        %2415 = vmatpush1.msra.mxu0 0.0
        %2416 = vmatprep.subr.mxu0 0.0
        %2417 = vmatpush1.msra.mxu0 0.0
        %2418 = vmatprep.mubr.f32.mxu0 0.0
        %2419 = vmatmul.mubr.f32.gmra.mrb[0].mxu0 %v2331
        %v2420 = vpop.f32.mrb[0].mxu0
        %v2421 = vadd.f32 0.0, %v2420
        %v2422 = vpop.f32.mrb[0].mxu0
        %2423 = vmatprep.mubr.f32.mxu0 0.0
        %2424 = vmatmul.mubr.f32.gmra.mrb[0].mxu0 %v2334
        %v2425 = vpop.f32.mrb[0].mxu0
        %v2426 = vadd.f32 0.0, %v2425
        %v2427 = vpop.f32.mrb[0].mxu0
        %2428 = vmatprep.mubr.f32.mxu0 0.0
        %2429 = vmatmul.mubr.f32.gmra.mrb[0].mxu0 %v2337
        %v2430 = vpop.f32.mrb[0].mxu0
        %v2431 = vadd.f32 0.0, %v2430
        %v2432 = vpop.f32.mrb[0].mxu0
        %2433 = vmatprep.mubr.f32.mxu0 0.0
        %2434 = vmatmul.mubr.f32.gmra.mrb[0].mxu0 %v2340
        %v2435 = vpop.f32.mrb[0].mxu0
        %v2436 = vadd.f32 0.0, %v2435
        %v2437 = vpop.f32.mrb[0].mxu0
        %2438 = vmatprep.mubr.f32.mxu0 0.0
        %2439 = vmatmul.mubr.f32.gmra.mrb[0].mxu0 %v2343
        %v2440 = vpop.f32.mrb[0].mxu0
        %v2441 = vadd.f32 0.0, %v2440
        %v2442 = vpop.f32.mrb[0].mxu0
        %2443 = vmatprep.mubr.f32.mxu0 0.0
        %2444 = vmatmul.mubr.f32.gmra.mrb[0].mxu0 %v2346
        %v2445 = vpop.f32.mrb[0].mxu0
        %v2446 = vadd.f32 0.0, %v2445
        %v2447 = vpop.f32.mrb[0].mxu0
        %2448 = vmatprep.mubr.f32.mxu0 0.0
        %2449 = vmatmul.mubr.f32.gmra.mrb[0].mxu0 %v2349
        %v2450 = vpop.f32.mrb[0].mxu0
        %v2451 = vadd.f32 0.0, %v2450
        %v2452 = vpop.f32.mrb[0].mxu0
        %2453 = vmatprep.mubr.f32.mxu0 0.0
        %2454 = vmatmul.mubr.f32.gmra.mrb[0].mxu0 %v2352
        %v2455 = vpop.f32.mrb[0].mxu0
        %v2456 = vadd.f32 0.0, %v2455
        %v2457 = vpop.f32.mrb[0].mxu0
        %2458 = vdwg.mxu0
        %v2459 = vadd.f32 %v2301, %v2421
        %v2460 = vadd.f32 %v2302, %v2426
        %v2461 = vadd.f32 %v2303, %v2431
        %v2462 = vadd.f32 %v2304, %v2436
        %v2463 = vadd.f32 %v2305, %v2441
        %v2464 = vadd.f32 %v2306, %v2446
        %v2465 = vadd.f32 %v2307, %v2451
        %v2466 = vadd.f32 %v2308, %v2456
        %v2467 = vld [vmem:[%s4] sm:$0x1]
        %v2469 = vlaneseq
        %v2470 = vshrl.u32 %v2469, 7
        %v2471 = vsub.s32 0, %v2470
        %v2472 = vrot.slane %v2467, %v2471
        %v2474 = vmul.f32 %v2459, %v2472
        %v2475 = vmul.f32 %v2460, %v2472
        %v2476 = vmul.f32 %v2461, %v2472
        %v2477 = vmul.f32 %v2462, %v2472
        %v2478 = vmul.f32 %v2463, %v2472
        %v2479 = vmul.f32 %v2464, %v2472
        %v2480 = vmul.f32 %v2465, %v2472
        %v2481 = vmul.f32 %v2466, %v2472
        %v2482 = vld [vmem:[%s5] sm:$0x1]
        %v2484 = vlaneseq
        %v2485 = vshrl.u32 %v2484, 7
        %v2486 = vsub.s32 0, %v2485
        %v2487 = vrot.slane %v2482, %v2486
        %v2489 = vadd.f32 %v2474, %v2487
        %v2490 = vadd.f32 %v2475, %v2487
        %v2491 = vadd.f32 %v2476, %v2487
        %v2492 = vadd.f32 %v2477, %v2487
        %v2493 = vadd.f32 %v2478, %v2487
        %v2494 = vadd.f32 %v2479, %v2487
        %v2495 = vadd.f32 %v2480, %v2487
        %v2496 = vadd.f32 %v2481, %v2487
        %v2497 = vld [vmem:[%s420] sm:$0xff]
        %v2498 = vld [vmem:[%s420 + $0x8] sm:$0xff]
        %v2499 = vld [vmem:[%s420 + $0x10] sm:$0xff]
        %v2500 = vld [vmem:[%s420 + $0x18] sm:$0xff]
        %v2501 = vld [vmem:[%s420 + $0x20] sm:$0xff]
        %v2502 = vld [vmem:[%s420 + $0x28] sm:$0xff]
        %v2503 = vld [vmem:[%s420 + $0x30] sm:$0xff]
        %v2504 = vld [vmem:[%s420 + $0x38] sm:$0xff]
        %v2505 = vadd.f32 %v2489, %v2497
        %v2506 = vadd.f32 %v2490, %v2498
        %v2507 = vadd.f32 %v2491, %v2499
        %v2508 = vadd.f32 %v2492, %v2500
        %v2509 = vadd.f32 %v2493, %v2501
        %v2510 = vadd.f32 %v2494, %v2502
        %v2511 = vadd.f32 %v2495, %v2503
        %v2512 = vadd.f32 %v2496, %v2504
        %v2513 = vmax.f32 %v2505, 0.0
        %v2514 = vmax.f32 %v2506, 0.0
        %v2515 = vmax.f32 %v2507, 0.0
        %v2516 = vmax.f32 %v2508, 0.0
        %v2517 = vmax.f32 %v2509, 0.0
        %v2518 = vmax.f32 %v2510, 0.0
        %v2519 = vmax.f32 %v2511, 0.0
        %v2520 = vmax.f32 %v2512, 0.0
        %2521 = vst.msk [vmem:[%s380] sm:$0xff] %vm441, %v2513
        %2522 = vst.msk [vmem:[%s380 + $0x8] sm:$0xff] %vm441, %v2514
        %2523 = vst.msk [vmem:[%s380 + $0x10] sm:$0xff] %vm441, %v2515
        %2524 = vst.msk [vmem:[%s380 + $0x18] sm:$0xff] %vm441, %v2516
        %2525 = vst.msk [vmem:[%s380 + $0x20] sm:$0xff] %vm441, %v2517
        %2526 = vst.msk [vmem:[%s380 + $0x28] sm:$0xff] %vm441, %v2518
        %2527 = vst.msk [vmem:[%s380 + $0x30] sm:$0xff] %vm441, %v2519
        %2528 = vst.msk [vmem:[%s380 + $0x38] sm:$0xff] %vm441, %v2520
        %s2529 = sand.u32 %s222, 1
        %s2530 = scalar_lea.sflag [#allocation4], %s2529
        %s2531 = sand.u32 %s222, 1
        %s2532 = smul.addr %s2531, 64
        %s2533 = scalar_lea.vmem [#allocation3], %s2532
        // Predicated region
        $region49: #{basic_block_forward.3} parent=47 // pred_check
          %p2534 = pneg %p232
        $region50: #{basic_block_forward.3} parent=47 // pred_check_branch
          %2536 = sbr.rel (%p2534) target = $region52
        $region51: #{basic_block_forward.3} parent=47 // pred_region
          %s2538 = ssub.s32 1024, 1024
          %2539 = vsyncadd %s2530, %s2538
          %s2540 = smul.addr %s26, 8
          %s2541 = smul.addr %s25, 32
          %s2542 = sadd.s32 %s2540, %s2541
          %s2543 = smul.addr %s2542, 128
          %s2544 = scalar_lea.hbm %s7, %s2543
          %s2545 = sshll.u32 %s2533, 4
          %s2546 = int_to_ptr.vmem [resolvable:$true] %s2545
          %2551 = dma.vmem_to_hbm [thread:$0]  %s2546, 1024, %s2544, %s2530, 128, 128, 8
        $region52: #{basic_block_forward.3} parent=47 // pred_fallthru
          _
      $region48: #{basic_block_forward.3} parent=5 // pred_fallthru
        _
      %p2552 = scmp.le.s32.totalorder 2, %s16
      // Predicated region
      $region53: #{basic_block_forward.3} parent=5 // pred_check
        %p2553 = pneg %p2552
      $region54: #{basic_block_forward.3} parent=5 // pred_check_branch
        %2555 = sbr.rel (%p2553) target = $region56
      $region55: #{basic_block_forward.3} parent=5 // pred_region
        %s2556 = ssub.s32 %s16, 2
        // Predicated region
        $region57: #{basic_block_forward.3} parent=55 // pred_check
          %p2557 = pneg %p238
        $region58: #{basic_block_forward.3} parent=55 // pred_check_branch
          %2559 = sbr.rel (%p2557) target = $region60
        $region59: #{basic_block_forward.3} parent=55 // pred_region
          %s2560 = sand.u32 %s223, 1
          %s2561 = scalar_lea.sflag [#allocation4], %s2560
          %s2562 = sand.u32 %s223, 1
          %s2563 = smul.addr %s2562, 64
          %s2564 = scalar_lea.vmem [#allocation3], %s2563
          %2565 = dma.done %s2561, 1024
        $region60: #{basic_block_forward.3} parent=55 // pred_fallthru
          _
      $region56: #{basic_block_forward.3} parent=5 // pred_fallthru
        _
    $region6: #{basic_block_forward.3} parent=1 // loop_footer
      %s20 = sadd.s32 1, %s16
    $region7: #{basic_block_forward.3} parent=1 // loop_footer_branch
      %15 = sbr.rel target = $region3
    $region8: #{basic_block_forward.3} parent=1 // loop_exit
      _
    %2566 = vsyncpa [#allocation4], 1
    %s2567 = scalar_lea.sflag [#allocation4], 1
    %2568 = vsyncpa %s2567, 1

</llo_original>
